<compile_context>
chip_gen: v7x
topology: tpu7x:2x2x1
jax: 0.10.0
libtpu: 0.0.40
codegen_flags: <defaults>
</compile_context>

<pallas_src>
import functools

import jax
import jax.numpy as jnp
from jax import lax
from jax.experimental import pallas as pl
from jax.experimental.pallas import tpu as pltpu

EPS = 1e-6      # resnet_eps default
LANE = 128      # TPU lane width; channels padded to a multiple of this


def _round_up(n, m):
    return (n + m - 1) // m * m


# ------------------------------ Pallas kernel ------------------------------ #
def resnet_block_kernel(x_ref, tproj_ref, gmat_ref,
                        gn1_g_ref, gn1_b_ref, w1_ref, b1_ref,
                        gn2_g_ref, gn2_b_ref, w2_ref, b2_ref,
                        out_ref, *, H, W, conv_dtype, approx_silu):
    """One full ResnetBlock2D for a single batch element (grid over batch).

    x_ref:     (1, H*W, Cp) f32  channel-padded, flattened NHWC activations
    tproj_ref: (1, 1, Cp)   f32  silu(temb) @ W_t + b_t (hoisted to wrapper)
    gmat_ref:  (Cp, Cp)     f32  group-average matrix (includes 1/(H*W*Cg))
    w*_ref:    (9*Cp, Cp)   conv_dtype  im2col-packed 3x3 conv weights
    """
    _, HW, Cp = x_ref.shape

    x = x_ref[0]                       # (HW, Cp) f32
    gmat = gmat_ref[...]               # (Cp, Cp)

    # Column-validity masks for the +-1 horizontal taps, evaluated on the
    # row-padded flattened map ((H+2)*W rows).  Computed once, reused by both
    # convs.  (Row out-of-bounds is handled by the zero halo rows.)
    jcol = lax.broadcasted_iota(jnp.int32, (H + 2, W, Cp), 1)
    jcol = jcol.reshape((H + 2) * W, Cp)
    mask_l = jcol >= 1          # destination column has a valid left  neighbour
    mask_r = jcol <= W - 2      # destination column has a valid right neighbour

    def silu(v):
        # x * sigmoid(x); the divide goes to the EUP (approx) on the fast path.
        return v * pl.reciprocal(1.0 + jnp.exp(-v), approx=approx_silu)

    def group_norm(h, gamma, beta):
        # Stats in f32: per-channel column sums, then one (1,Cp)@(Cp,Cp) matmul
        # averages within each group.  Affine folded into a single FMA pass.
        s1 = jnp.sum(h, axis=0, keepdims=True)                    # (1, Cp)
        s2 = jnp.sum(h * h, axis=0, keepdims=True)                # (1, Cp)
        mean = jnp.dot(s1, gmat, preferred_element_type=jnp.float32)
        ex2 = jnp.dot(s2, gmat, preferred_element_type=jnp.float32)
        var = ex2 - mean * mean                                   # biased var
        a = lax.rsqrt(var + EPS) * gamma                          # (1, Cp)
        b = beta - mean * a                                       # (1, Cp)
        return h * a + b

    def conv3x3(h, w_ref, bias):
        # im2col: one (HW, 9*Cp) slab built from 9 shifted windows of the
        # row-padded flattened map -> single MXU matmul with K = 9*Cp.
        hc = h.astype(conv_dtype)
        zrow = jnp.zeros((W, Cp), conv_dtype)
        hp = jnp.concatenate([zrow, hc, zrow], axis=0)            # (HW+2W, Cp)
        zero1 = jnp.zeros((1, Cp), conv_dtype)
        shifted = {
            -1: jnp.where(mask_l,
                          jnp.concatenate([zero1, hp[:-1]], axis=0), 0),
            0: hp,
            1: jnp.where(mask_r,
                         jnp.concatenate([hp[1:], zero1], axis=0), 0),
        }
        cols = []
        for k in range(9):                  # k = 3*ky + kx (matches weight pack)
            ky, kx = k // 3, k % 3
            cols.append(shifted[kx - 1][ky * W: ky * W + HW])     # aligned slice
        slab = jnp.concatenate(cols, axis=1)                      # (HW, 9*Cp)
        acc = jnp.dot(slab, w_ref[...], preferred_element_type=jnp.float32)
        return acc + bias                                         # bias added once

    # ResnetBlock2D (pre_norm=True, time_embedding_norm='default', swish,
    # dropout=0 / eval mode, output_scale_factor=1.0)
    h = silu(group_norm(x, gn1_g_ref[...], gn1_b_ref[...]))
    h = conv3x3(h, w1_ref, b1_ref[...])
    h = h + tproj_ref[0]                                          # (1, Cp) bcast
    h = silu(group_norm(h, gn2_g_ref[...], gn2_b_ref[...]))
    h = conv3x3(h, w2_ref, b2_ref[...])
    out_ref[0] = x + h


# -------------------------------- wrappers ---------------------------------- #
def resnet_block_pallas(x, tproj, p, gmat, H, W, conv_dtype):
    """x: (B, H*W, Cp) f32; tproj: (B, 1, Cp) f32; p: packed/padded params."""
    B, HW, Cp = x.shape
    approx_silu = jnp.dtype(conv_dtype) != jnp.dtype(jnp.float32)
    kernel = functools.partial(resnet_block_kernel, H=H, W=W,
                               conv_dtype=conv_dtype, approx_silu=approx_silu)

    xspec = pl.BlockSpec((1, HW, Cp), lambda b: (b, 0, 0))
    pspec = pl.BlockSpec((1, Cp), lambda b: (0, 0))
    wspec = pl.BlockSpec((9 * Cp, Cp), lambda b: (0, 0))

    itemsize = jnp.dtype(conv_dtype).itemsize
    cost = pl.CostEstimate(
        flops=int(B * (4 * HW * 9 * Cp * Cp + 12 * HW * Cp)),
        transcendentals=int(B * 2 * HW * Cp),
        bytes_accessed=int(2 * B * HW * Cp * 4
                           + 2 * 9 * Cp * Cp * itemsize
                           + (Cp * Cp + 9 * Cp) * 4 + B * Cp * 4),
    )

    return pl.pallas_call(
        kernel,
        out_shape=jax.ShapeDtypeStruct((B, HW, Cp), jnp.float32),
        grid_spec=pltpu.PrefetchScalarGridSpec(
            num_scalar_prefetch=0,
            grid=(B,),
            in_specs=[
                xspec,                                          # x
                pl.BlockSpec((1, 1, Cp), lambda b: (b, 0, 0)),  # temb projection
                pl.BlockSpec((Cp, Cp), lambda b: (0, 0)),       # group matrix
                pspec, pspec,                                   # gn1 gamma/beta
                wspec, pspec,                                   # conv1 w / b
                pspec, pspec,                                   # gn2 gamma/beta
                wspec, pspec,                                   # conv2 w / b
            ],
            out_specs=xspec,
        ),
        compiler_params=pltpu.CompilerParams(
            dimension_semantics=("parallel",),   # keep both v7x TCs busy
            vmem_limit_bytes=32 * 1024 * 1024),
        cost_estimate=cost,
    )(x, tproj, gmat,
      p["gn1_g"], p["gn1_b"], p["w1"], p["b1"],
      p["gn2_g"], p["gn2_b"], p["w2"], p["b2"])


def _pad_cols(a, cp):
    """Zero-pad the last (channel) dim to cp, cast to f32."""
    a = a.astype(jnp.float32)
    pad = cp - a.shape[-1]
    if pad == 0:
        return a
    cfg = [(0, 0)] * (a.ndim - 1) + [(0, pad)]
    return jnp.pad(a, cfg)


def _pack_conv_weight(w, C, Cp, conv_dtype):
    """(9, Cin, Cout) packed taps -> channel-pad -> (9*Cp, Cp) im2col layout."""
    wp = jnp.zeros((9, Cp, Cp), jnp.float32).at[:, :C, :C].set(w)
    return wp.reshape(9 * Cp, Cp).astype(conv_dtype)


def _pack_resnet_params(p, C, Cp, conv_dtype):
    return dict(
        gn1_g=_pad_cols(p["gn1_g"], Cp), gn1_b=_pad_cols(p["gn1_b"], Cp),
        w1=_pack_conv_weight(p["w1"], C, Cp, conv_dtype),
        b1=_pad_cols(p["b1"], Cp),
        gn2_g=_pad_cols(p["gn2_g"], Cp), gn2_b=_pad_cols(p["gn2_b"], Cp),
        w2=_pack_conv_weight(p["w2"], C, Cp, conv_dtype),
        b2=_pad_cols(p["b2"], Cp),
    )


def make_group_matrix(C, Cp, groups, hw):
    """(Cp, Cp) matrix averaging channel sums within each group (padded lanes
    contribute nothing and receive nothing)."""
    cg = C // groups
    ch = jnp.arange(Cp)
    gid = ch // cg
    valid = ch < C
    mask = (gid[:, None] == gid[None, :]) & valid[:, None] & valid[None, :]
    return mask.astype(jnp.float32) / float(hw * cg)


def mid_block_2d_pallas(hidden_nchw, temb, params_list, groups,
                        conv_dtype=jnp.bfloat16):
    """MidBlock2D.forward: sequentially apply the (num_layers+1) resnets."""
    B, C, H, W = hidden_nchw.shape
    Cp = _round_up(C, LANE)                       # lane-dense channel padding
    x = jnp.transpose(hidden_nchw, (0, 2, 3, 1)).astype(jnp.float32)  # NHWC
    x = _pad_cols(x, Cp).reshape(B, H * W, Cp)
    gmat = make_group_matrix(C, Cp, groups, H * W)
    for p in params_list:
        # Time-embedding projection hoisted out of the kernel.
        tproj = jax.nn.silu(temb) @ p["tw"] + p["tb"]             # (B, C)
        tproj = _pad_cols(tproj, Cp)[:, None, :]                  # (B, 1, Cp)
        pk = _pack_resnet_params(p, C, Cp, conv_dtype)
        x = resnet_block_pallas(x, tproj, pk, gmat, H, W, conv_dtype)
    x = x.reshape(B, H, W, Cp)[..., :C]
    return jnp.transpose(x, (0, 3, 1, 2))                          # back to NCHW


# ---------------------------- params / reference ---------------------------- #
def init_resnet_params(key, C, T):
    ks = jax.random.split(key, 10)
    nrm = lambda k, shape, s: s * jax.random.normal(k, shape, jnp.float32)
    return dict(
        gn1_g=1.0 + nrm(ks[0], (1, C), 0.05),
        gn1_b=nrm(ks[1], (1, C), 0.05),
        w1=nrm(ks[2], (9, C, C), 0.05),    # packed (ky*3+kx, Cin, Cout)
        b1=nrm(ks[3], (1, C), 0.05),
        tw=nrm(ks[4], (T, C), 0.05),       # time_emb_proj weight, transposed
        tb=nrm(ks[5], (1, C), 0.05),
        gn2_g=1.0 + nrm(ks[6], (1, C), 0.05),
        gn2_b=nrm(ks[7], (1, C), 0.05),
        w2=nrm(ks[8], (9, C, C), 0.05),
        b2=nrm(ks[9], (1, C), 0.05),
    )


def group_norm_ref(x, gamma, beta, groups, eps):
    B, H, W, C = x.shape
    cg = C // groups
    xg = x.reshape(B, H, W, groups, cg)
    mean = xg.mean(axis=(1, 2, 4), keepdims=True)
    var = ((xg - mean) ** 2).mean(axis=(1, 2, 4), keepdims=True)
    xn = ((xg - mean) / jnp.sqrt(var + eps)).reshape(B, H, W, C)
    return xn * gamma.reshape(1, 1, 1, C) + beta.reshape(1, 1, 1, C)


def resnet_block_ref(x, temb, p, groups, eps=EPS):
    B, H, W, C = x.shape
    silu = lambda v: v * jax.nn.sigmoid(v)

    def conv(h, w_packed, bias):
        w = w_packed.reshape(3, 3, C, C)   # HWIO
        y = lax.conv_general_dilated(h, w, (1, 1), "SAME",
                                     dimension_numbers=("NHWC", "HWIO", "NHWC"))
        return y + bias.reshape(1, 1, 1, C)

    h = silu(group_norm_ref(x, p["gn1_g"], p["gn1_b"], groups, eps))
    h = conv(h, p["w1"], p["b1"])
    t = silu(temb) @ p["tw"] + p["tb"]     # (B, C)
    h = h + t[:, None, None, :]
    h = silu(group_norm_ref(h, p["gn2_g"], p["gn2_b"], groups, eps))
    h = conv(h, p["w2"], p["b2"])
    return x + h


def mid_block_2d_ref(hidden_nchw, temb, params_list, groups):
    x = jnp.transpose(hidden_nchw, (0, 2, 3, 1))
    for p in params_list:
        x = resnet_block_ref(x, temb, p, groups)
    return jnp.transpose(x, (0, 3, 1, 2))


# ----------------------------------- main ----------------------------------- #
if __name__ == "__main__":
    # MidBlock2D(in_channels=32, temb_channels=128, num_layers=1, resnet_groups=8)
    B, C, H, W = 2, 32, 16, 16
    T = 128
    GROUPS = 8
    NUM_LAYERS = 1                        # -> 1 + NUM_LAYERS resnets

    key = jax.random.PRNGKey(0)
    k_x, k_t, k_p = jax.random.split(key, 3)
    hidden_nchw = jax.random.normal(k_x, (B, C, H, W), jnp.float32)
    temb = jax.random.normal(k_t, (B, T), jnp.float32)
    params_list = [init_resnet_params(k, C, T)
                   for k in jax.random.split(k_p, NUM_LAYERS + 1)]

    ref = jax.block_until_ready(
        mid_block_2d_ref(hidden_nchw, temb, params_list, GROUPS))

    # Exact-math path (f32 MXU operands): validates kernel logic tightly.
    run_f32 = jax.jit(functools.partial(
        mid_block_2d_pallas, groups=GROUPS, conv_dtype=jnp.float32))
    out_f32 = jax.block_until_ready(run_f32(hidden_nchw, temb, params_list))
    err_f32 = float(jnp.max(jnp.abs(out_f32 - ref)))
    assert out_f32.shape == (B, C, H, W)
    assert jnp.allclose(out_f32, ref, atol=2e-3, rtol=2e-3), \
        f"f32 path max abs err = {err_f32}"

    # Fast path (bf16 MXU operands, f32 accumulation / GN stats / residual).
    run_bf16 = jax.jit(functools.partial(
        mid_block_2d_pallas, groups=GROUPS, conv_dtype=jnp.bfloat16))
    out_bf16 = jax.block_until_ready(run_bf16(hidden_nchw, temb, params_list))
    rel = float(jnp.linalg.norm(out_bf16 - ref) / jnp.linalg.norm(ref))
    assert out_bf16.shape == (B, C, H, W)
    assert rel < 2e-2, f"bf16 path relative L2 err = {rel}"

    print("KERNEL_OK")
</pallas_src>

<mosaic_0001>
module attributes {stable_mosaic.version = 11 : i64} {
  func.func @resnet_block_kernel(%arg0: i32, %arg1: memref<1x256x128xf32, #tpu.memory_space<vmem>>, %arg2: memref<1x1x128xf32, #tpu.memory_space<vmem>>, %arg3: memref<128x128xf32, #tpu.memory_space<vmem>>, %arg4: memref<1x128xf32, #tpu.memory_space<vmem>>, %arg5: memref<1x128xf32, #tpu.memory_space<vmem>>, %arg6: memref<1152x128xf32, #tpu.memory_space<vmem>>, %arg7: memref<1x128xf32, #tpu.memory_space<vmem>>, %arg8: memref<1x128xf32, #tpu.memory_space<vmem>>, %arg9: memref<1x128xf32, #tpu.memory_space<vmem>>, %arg10: memref<1152x128xf32, #tpu.memory_space<vmem>>, %arg11: memref<1x128xf32, #tpu.memory_space<vmem>>, %arg12: memref<1x256x128xf32, #tpu.memory_space<vmem>>) attributes {dimension_semantics = [#tpu.dimension_semantics<parallel>], iteration_bounds = array<i64: 2>, scalar_prefetch = 0 : i64, scratch_operands = 0 : i64, tpu.core_type = #tpu.core_type<tc>, window_params = [{transform_indices = @transform_0, window_bounds = array<i64: 1, 256, 128>}, {transform_indices = @transform_1, window_bounds = array<i64: 1, 1, 128>}, {pipeline_mode = #tpu.pipeline_mode<synchronous>, transform_indices = @transform_2, window_bounds = array<i64: 128, 128>}, {pipeline_mode = #tpu.pipeline_mode<synchronous>, transform_indices = @transform_3, window_bounds = array<i64: 1, 128>}, {pipeline_mode = #tpu.pipeline_mode<synchronous>, transform_indices = @transform_4, window_bounds = array<i64: 1, 128>}, {pipeline_mode = #tpu.pipeline_mode<synchronous>, transform_indices = @transform_5, window_bounds = array<i64: 1152, 128>}, {pipeline_mode = #tpu.pipeline_mode<synchronous>, transform_indices = @transform_6, window_bounds = array<i64: 1, 128>}, {pipeline_mode = #tpu.pipeline_mode<synchronous>, transform_indices = @transform_7, window_bounds = array<i64: 1, 128>}, {pipeline_mode = #tpu.pipeline_mode<synchronous>, transform_indices = @transform_8, window_bounds = array<i64: 1, 128>}, {pipeline_mode = #tpu.pipeline_mode<synchronous>, transform_indices = @transform_9, window_bounds = array<i64: 1152, 128>}, {pipeline_mode = #tpu.pipeline_mode<synchronous>, transform_indices = @transform_10, window_bounds = array<i64: 1, 128>}, {transform_indices = @transform_11, window_bounds = array<i64: 1, 256, 128>}]} {
    %c0 = arith.constant 0 : index
    %c0_0 = arith.constant 0 : index
    %c0_1 = arith.constant 0 : index
    %0 = vector.load %arg1[%c0, %c0_0, %c0_1] : memref<1x256x128xf32, #tpu.memory_space<vmem>>, vector<1x256x128xf32>
    %1 = vector.shape_cast %0 : vector<1x256x128xf32> to vector<256x128xf32>
    %c0_2 = arith.constant 0 : index
    %c0_3 = arith.constant 0 : index
    %2 = vector.load %arg3[%c0_2, %c0_3] : memref<128x128xf32, #tpu.memory_space<vmem>>, vector<128x128xf32>
    %3 = tpu.iota {dimensions = array<i32: 1>} : vector<18x16x128xi32>
    %4 = vector.shape_cast %3 : vector<18x16x128xi32> to vector<288x128xi32>
    %c1_i32 = arith.constant 1 : i32
    %5 = vector.broadcast %c1_i32 : i32 to vector<288x128xi32>
    %6 = arith.cmpi sge, %4, %5 : vector<288x128xi32>
    %c14_i32 = arith.constant 14 : i32
    %7 = vector.broadcast %c14_i32 : i32 to vector<288x128xi32>
    %8 = arith.cmpi sle, %4, %7 : vector<288x128xi32>
    %c0_4 = arith.constant 0 : index
    %c0_5 = arith.constant 0 : index
    %9 = vector.load %arg4[%c0_4, %c0_5] : memref<1x128xf32, #tpu.memory_space<vmem>>, vector<1x128xf32>
    %c0_6 = arith.constant 0 : index
    %c0_7 = arith.constant 0 : index
    %10 = vector.load %arg5[%c0_6, %c0_7] : memref<1x128xf32, #tpu.memory_space<vmem>>, vector<1x128xf32>
    %cst = arith.constant dense<0.000000e+00> : vector<128xf32>
    %11 = vector.multi_reduction <add>, %1, %cst [0] : vector<256x128xf32> to vector<128xf32>
    %12 = vector.shape_cast %11 : vector<128xf32> to vector<1x128xf32>
    %13 = arith.mulf %1, %1 : vector<256x128xf32>
    %cst_8 = arith.constant dense<0.000000e+00> : vector<128xf32>
    %14 = vector.multi_reduction <add>, %13, %cst_8 [0] : vector<256x128xf32> to vector<128xf32>
    %15 = vector.shape_cast %14 : vector<128xf32> to vector<1x128xf32>
    %cst_9 = arith.constant dense<0.000000e+00> : vector<1x128xf32>
    %16 = tpu.matmul %12, %2, %cst_9 {dimension_numbers = #tpu.dot_dimension_numbers<[1], [0], [0], [1], [0, 0, 1, 1], [], []>} : vector<1x128xf32>, vector<128x128xf32>, vector<1x128xf32> -> vector<1x128xf32>
    %cst_10 = arith.constant dense<0.000000e+00> : vector<1x128xf32>
    %17 = tpu.matmul %15, %2, %cst_10 {dimension_numbers = #tpu.dot_dimension_numbers<[1], [0], [0], [1], [0, 0, 1, 1], [], []>} : vector<1x128xf32>, vector<128x128xf32>, vector<1x128xf32> -> vector<1x128xf32>
    %18 = arith.mulf %16, %16 : vector<1x128xf32>
    %19 = arith.subf %17, %18 : vector<1x128xf32>
    %cst_11 = arith.constant 9.99999997E-7 : f32
    %20 = vector.broadcast %cst_11 : f32 to vector<1x128xf32>
    %21 = arith.addf %19, %20 : vector<1x128xf32>
    %22 = math.rsqrt %21 : vector<1x128xf32>
    %23 = arith.mulf %22, %9 : vector<1x128xf32>
    %24 = arith.mulf %16, %23 : vector<1x128xf32>
    %25 = arith.subf %10, %24 : vector<1x128xf32>
    %26 = vector.broadcast %23 : vector<1x128xf32> to vector<256x128xf32>
    %27 = arith.mulf %1, %26 : vector<256x128xf32>
    %28 = vector.broadcast %25 : vector<1x128xf32> to vector<256x128xf32>
    %29 = arith.addf %27, %28 : vector<256x128xf32>
    %cst_12 = arith.constant 0.000000e+00 : f32
    %30 = vector.broadcast %cst_12 : f32 to vector<256x128xf32>
    %31 = arith.subf %30, %29 : vector<256x128xf32>
    %32 = math.exp %31 : vector<256x128xf32>
    %cst_13 = arith.constant 1.000000e+00 : f32
    %33 = vector.broadcast %cst_13 : f32 to vector<256x128xf32>
    %34 = arith.addf %33, %32 : vector<256x128xf32>
    %35 = tpu.reciprocal %34 : vector<256x128xf32> -> vector<256x128xf32>
    %36 = arith.mulf %29, %35 : vector<256x128xf32>
    %c0_14 = arith.constant 0 : index
    %c0_15 = arith.constant 0 : index
    %37 = vector.load %arg7[%c0_14, %c0_15] : memref<1x128xf32, #tpu.memory_space<vmem>>, vector<1x128xf32>
    %cst_16 = arith.constant 0.000000e+00 : f32
    %38 = vector.broadcast %cst_16 : f32 to vector<16x128xf32>
    %39 = tpu.concatenate %38, %36, %38 in 0 : vector<16x128xf32>, vector<256x128xf32>, vector<16x128xf32> -> vector<288x128xf32>
    %cst_17 = arith.constant 0.000000e+00 : f32
    %40 = vector.broadcast %cst_17 : f32 to vector<1x128xf32>
    %41 = vector.extract_strided_slice %39 {offsets = [0, 0], sizes = [287, 128], strides = [1, 1]} : vector<288x128xf32> to vector<287x128xf32>
    %42 = tpu.concatenate %40, %41 in 0 : vector<1x128xf32>, vector<287x128xf32> -> vector<288x128xf32>
    %c0_i32 = arith.constant 0 : i32
    %43 = arith.sitofp %c0_i32 : i32 to f32
    %44 = vector.broadcast %43 : f32 to vector<288x128xf32>
    %45 = arith.select %6, %42, %44 : vector<288x128xi1>, vector<288x128xf32>
    %46 = vector.extract_strided_slice %39 {offsets = [1, 0], sizes = [287, 128], strides = [1, 1]} : vector<288x128xf32> to vector<287x128xf32>
    %47 = tpu.concatenate %46, %40 in 0 : vector<287x128xf32>, vector<1x128xf32> -> vector<288x128xf32>
    %c0_i32_18 = arith.constant 0 : i32
    %48 = arith.sitofp %c0_i32_18 : i32 to f32
    %49 = vector.broadcast %48 : f32 to vector<288x128xf32>
    %50 = arith.select %8, %47, %49 : vector<288x128xi1>, vector<288x128xf32>
    %51 = vector.extract_strided_slice %45 {offsets = [0, 0], sizes = [256, 128], strides = [1, 1]} : vector<288x128xf32> to vector<256x128xf32>
    %52 = vector.extract_strided_slice %39 {offsets = [0, 0], sizes = [256, 128], strides = [1, 1]} : vector<288x128xf32> to vector<256x128xf32>
    %53 = vector.extract_strided_slice %50 {offsets = [0, 0], sizes = [256, 128], strides = [1, 1]} : vector<288x128xf32> to vector<256x128xf32>
    %54 = vector.extract_strided_slice %45 {offsets = [16, 0], sizes = [256, 128], strides = [1, 1]} : vector<288x128xf32> to vector<256x128xf32>
    %55 = vector.extract_strided_slice %39 {offsets = [16, 0], sizes = [256, 128], strides = [1, 1]} : vector<288x128xf32> to vector<256x128xf32>
    %56 = vector.extract_strided_slice %50 {offsets = [16, 0], sizes = [256, 128], strides = [1, 1]} : vector<288x128xf32> to vector<256x128xf32>
    %57 = vector.extract_strided_slice %45 {offsets = [32, 0], sizes = [256, 128], strides = [1, 1]} : vector<288x128xf32> to vector<256x128xf32>
    %58 = vector.extract_strided_slice %39 {offsets = [32, 0], sizes = [256, 128], strides = [1, 1]} : vector<288x128xf32> to vector<256x128xf32>
    %59 = vector.extract_strided_slice %50 {offsets = [32, 0], sizes = [256, 128], strides = [1, 1]} : vector<288x128xf32> to vector<256x128xf32>
    %60 = tpu.concatenate %51, %52, %53, %54, %55, %56, %57, %58, %59 in 1 : vector<256x128xf32>, vector<256x128xf32>, vector<256x128xf32>, vector<256x128xf32>, vector<256x128xf32>, vector<256x128xf32>, vector<256x128xf32>, vector<256x128xf32>, vector<256x128xf32> -> vector<256x1152xf32>
    %c0_19 = arith.constant 0 : index
    %c0_20 = arith.constant 0 : index
    %61 = vector.load %arg6[%c0_19, %c0_20] : memref<1152x128xf32, #tpu.memory_space<vmem>>, vector<1152x128xf32>
    %cst_21 = arith.constant dense<0.000000e+00> : vector<256x128xf32>
    %62 = tpu.matmul %60, %61, %cst_21 {dimension_numbers = #tpu.dot_dimension_numbers<[1], [0], [0], [1], [0, 0, 1, 1], [], []>} : vector<256x1152xf32>, vector<1152x128xf32>, vector<256x128xf32> -> vector<256x128xf32>
    %63 = vector.broadcast %37 : vector<1x128xf32> to vector<256x128xf32>
    %64 = arith.addf %62, %63 : vector<256x128xf32>
    %c0_22 = arith.constant 0 : index
    %c0_23 = arith.constant 0 : index
    %c0_24 = arith.constant 0 : index
    %65 = vector.load %arg2[%c0_22, %c0_23, %c0_24] : memref<1x1x128xf32, #tpu.memory_space<vmem>>, vector<1x1x128xf32>
    %66 = vector.shape_cast %65 : vector<1x1x128xf32> to vector<1x128xf32>
    %67 = vector.broadcast %66 : vector<1x128xf32> to vector<256x128xf32>
    %68 = arith.addf %64, %67 : vector<256x128xf32>
    %c0_25 = arith.constant 0 : index
    %c0_26 = arith.constant 0 : index
    %69 = vector.load %arg8[%c0_25, %c0_26] : memref<1x128xf32, #tpu.memory_space<vmem>>, vector<1x128xf32>
    %c0_27 = arith.constant 0 : index
    %c0_28 = arith.constant 0 : index
    %70 = vector.load %arg9[%c0_27, %c0_28] : memref<1x128xf32, #tpu.memory_space<vmem>>, vector<1x128xf32>
    %cst_29 = arith.constant dense<0.000000e+00> : vector<128xf32>
    %71 = vector.multi_reduction <add>, %68, %cst_29 [0] : vector<256x128xf32> to vector<128xf32>
    %72 = vector.shape_cast %71 : vector<128xf32> to vector<1x128xf32>
    %73 = arith.mulf %68, %68 : vector<256x128xf32>
    %cst_30 = arith.constant dense<0.000000e+00> : vector<128xf32>
    %74 = vector.multi_reduction <add>, %73, %cst_30 [0] : vector<256x128xf32> to vector<128xf32>
    %75 = vector.shape_cast %74 : vector<128xf32> to vector<1x128xf32>
    %cst_31 = arith.constant dense<0.000000e+00> : vector<1x128xf32>
    %76 = tpu.matmul %72, %2, %cst_31 {dimension_numbers = #tpu.dot_dimension_numbers<[1], [0], [0], [1], [0, 0, 1, 1], [], []>} : vector<1x128xf32>, vector<128x128xf32>, vector<1x128xf32> -> vector<1x128xf32>
    %cst_32 = arith.constant dense<0.000000e+00> : vector<1x128xf32>
    %77 = tpu.matmul %75, %2, %cst_32 {dimension_numbers = #tpu.dot_dimension_numbers<[1], [0], [0], [1], [0, 0, 1, 1], [], []>} : vector<1x128xf32>, vector<128x128xf32>, vector<1x128xf32> -> vector<1x128xf32>
    %78 = arith.mulf %76, %76 : vector<1x128xf32>
    %79 = arith.subf %77, %78 : vector<1x128xf32>
    %cst_33 = arith.constant 9.99999997E-7 : f32
    %80 = vector.broadcast %cst_33 : f32 to vector<1x128xf32>
    %81 = arith.addf %79, %80 : vector<1x128xf32>
    %82 = math.rsqrt %81 : vector<1x128xf32>
    %83 = arith.mulf %82, %69 : vector<1x128xf32>
    %84 = arith.mulf %76, %83 : vector<1x128xf32>
    %85 = arith.subf %70, %84 : vector<1x128xf32>
    %86 = vector.broadcast %83 : vector<1x128xf32> to vector<256x128xf32>
    %87 = arith.mulf %68, %86 : vector<256x128xf32>
    %88 = vector.broadcast %85 : vector<1x128xf32> to vector<256x128xf32>
    %89 = arith.addf %87, %88 : vector<256x128xf32>
    %cst_34 = arith.constant 0.000000e+00 : f32
    %90 = vector.broadcast %cst_34 : f32 to vector<256x128xf32>
    %91 = arith.subf %90, %89 : vector<256x128xf32>
    %92 = math.exp %91 : vector<256x128xf32>
    %cst_35 = arith.constant 1.000000e+00 : f32
    %93 = vector.broadcast %cst_35 : f32 to vector<256x128xf32>
    %94 = arith.addf %93, %92 : vector<256x128xf32>
    %95 = tpu.reciprocal %94 : vector<256x128xf32> -> vector<256x128xf32>
    %96 = arith.mulf %89, %95 : vector<256x128xf32>
    %c0_36 = arith.constant 0 : index
    %c0_37 = arith.constant 0 : index
    %97 = vector.load %arg11[%c0_36, %c0_37] : memref<1x128xf32, #tpu.memory_space<vmem>>, vector<1x128xf32>
    %cst_38 = arith.constant 0.000000e+00 : f32
    %98 = vector.broadcast %cst_38 : f32 to vector<16x128xf32>
    %99 = tpu.concatenate %98, %96, %98 in 0 : vector<16x128xf32>, vector<256x128xf32>, vector<16x128xf32> -> vector<288x128xf32>
    %cst_39 = arith.constant 0.000000e+00 : f32
    %100 = vector.broadcast %cst_39 : f32 to vector<1x128xf32>
    %101 = vector.extract_strided_slice %99 {offsets = [0, 0], sizes = [287, 128], strides = [1, 1]} : vector<288x128xf32> to vector<287x128xf32>
    %102 = tpu.concatenate %100, %101 in 0 : vector<1x128xf32>, vector<287x128xf32> -> vector<288x128xf32>
    %c0_i32_40 = arith.constant 0 : i32
    %103 = arith.sitofp %c0_i32_40 : i32 to f32
    %104 = vector.broadcast %103 : f32 to vector<288x128xf32>
    %105 = arith.select %6, %102, %104 : vector<288x128xi1>, vector<288x128xf32>
    %106 = vector.extract_strided_slice %99 {offsets = [1, 0], sizes = [287, 128], strides = [1, 1]} : vector<288x128xf32> to vector<287x128xf32>
    %107 = tpu.concatenate %106, %100 in 0 : vector<287x128xf32>, vector<1x128xf32> -> vector<288x128xf32>
    %c0_i32_41 = arith.constant 0 : i32
    %108 = arith.sitofp %c0_i32_41 : i32 to f32
    %109 = vector.broadcast %108 : f32 to vector<288x128xf32>
    %110 = arith.select %8, %107, %109 : vector<288x128xi1>, vector<288x128xf32>
    %111 = vector.extract_strided_slice %105 {offsets = [0, 0], sizes = [256, 128], strides = [1, 1]} : vector<288x128xf32> to vector<256x128xf32>
    %112 = vector.extract_strided_slice %99 {offsets = [0, 0], sizes = [256, 128], strides = [1, 1]} : vector<288x128xf32> to vector<256x128xf32>
    %113 = vector.extract_strided_slice %110 {offsets = [0, 0], sizes = [256, 128], strides = [1, 1]} : vector<288x128xf32> to vector<256x128xf32>
    %114 = vector.extract_strided_slice %105 {offsets = [16, 0], sizes = [256, 128], strides = [1, 1]} : vector<288x128xf32> to vector<256x128xf32>
    %115 = vector.extract_strided_slice %99 {offsets = [16, 0], sizes = [256, 128], strides = [1, 1]} : vector<288x128xf32> to vector<256x128xf32>
    %116 = vector.extract_strided_slice %110 {offsets = [16, 0], sizes = [256, 128], strides = [1, 1]} : vector<288x128xf32> to vector<256x128xf32>
    %117 = vector.extract_strided_slice %105 {offsets = [32, 0], sizes = [256, 128], strides = [1, 1]} : vector<288x128xf32> to vector<256x128xf32>
    %118 = vector.extract_strided_slice %99 {offsets = [32, 0], sizes = [256, 128], strides = [1, 1]} : vector<288x128xf32> to vector<256x128xf32>
    %119 = vector.extract_strided_slice %110 {offsets = [32, 0], sizes = [256, 128], strides = [1, 1]} : vector<288x128xf32> to vector<256x128xf32>
    %120 = tpu.concatenate %111, %112, %113, %114, %115, %116, %117, %118, %119 in 1 : vector<256x128xf32>, vector<256x128xf32>, vector<256x128xf32>, vector<256x128xf32>, vector<256x128xf32>, vector<256x128xf32>, vector<256x128xf32>, vector<256x128xf32>, vector<256x128xf32> -> vector<256x1152xf32>
    %c0_42 = arith.constant 0 : index
    %c0_43 = arith.constant 0 : index
    %121 = vector.load %arg10[%c0_42, %c0_43] : memref<1152x128xf32, #tpu.memory_space<vmem>>, vector<1152x128xf32>
    %cst_44 = arith.constant dense<0.000000e+00> : vector<256x128xf32>
    %122 = tpu.matmul %120, %121, %cst_44 {dimension_numbers = #tpu.dot_dimension_numbers<[1], [0], [0], [1], [0, 0, 1, 1], [], []>} : vector<256x1152xf32>, vector<1152x128xf32>, vector<256x128xf32> -> vector<256x128xf32>
    %123 = vector.broadcast %97 : vector<1x128xf32> to vector<256x128xf32>
    %124 = arith.addf %122, %123 : vector<256x128xf32>
    %125 = arith.addf %1, %124 : vector<256x128xf32>
    %c0_45 = arith.constant 0 : index
    %c0_46 = arith.constant 0 : index
    %c0_47 = arith.constant 0 : index
    %126 = vector.load %arg12[%c0_45, %c0_46, %c0_47] : memref<1x256x128xf32, #tpu.memory_space<vmem>>, vector<1x256x128xf32>
    %127 = vector.shape_cast %126 : vector<1x256x128xf32> to vector<256x128xf32>
    %128 = vector.shape_cast %125 : vector<256x128xf32> to vector<1x256x128xf32>
    tpu.vector_store %arg12[%c0_45, %c0_46, %c0_47], %128 {strides = array<i32>} : memref<1x256x128xf32, #tpu.memory_space<vmem>>, vector<1x256x128xf32>,
    return
  }
  func.func @transform_0(%arg0: i32) -> (i32, i32, i32) {
    %c0_i32 = arith.constant 0 : i32
    %c0_i32_0 = arith.constant 0 : i32
    %c0_i32_1 = arith.constant 0 : i32
    return %arg0, %c0_i32, %c0_i32_0 : i32, i32, i32
  }
  func.func @transform_1(%arg0: i32) -> (i32, i32, i32) {
    %c0_i32 = arith.constant 0 : i32
    %c0_i32_0 = arith.constant 0 : i32
    %c0_i32_1 = arith.constant 0 : i32
    return %arg0, %c0_i32, %c0_i32_0 : i32, i32, i32
  }
  func.func @transform_2(%arg0: i32) -> (i32, i32) {
    %c0_i32 = arith.constant 0 : i32
    %c0_i32_0 = arith.constant 0 : i32
    %c0_i32_1 = arith.constant 0 : i32
    return %c0_i32, %c0_i32_0 : i32, i32
  }
  func.func @transform_3(%arg0: i32) -> (i32, i32) {
    %c0_i32 = arith.constant 0 : i32
    %c0_i32_0 = arith.constant 0 : i32
    %c0_i32_1 = arith.constant 0 : i32
    return %c0_i32, %c0_i32_0 : i32, i32
  }
  func.func @transform_4(%arg0: i32) -> (i32, i32) {
    %c0_i32 = arith.constant 0 : i32
    %c0_i32_0 = arith.constant 0 : i32
    %c0_i32_1 = arith.constant 0 : i32
    return %c0_i32, %c0_i32_0 : i32, i32
  }
  func.func @transform_5(%arg0: i32) -> (i32, i32) {
    %c0_i32 = arith.constant 0 : i32
    %c0_i32_0 = arith.constant 0 : i32
    %c0_i32_1 = arith.constant 0 : i32
    return %c0_i32, %c0_i32_0 : i32, i32
  }
  func.func @transform_6(%arg0: i32) -> (i32, i32) {
    %c0_i32 = arith.constant 0 : i32
    %c0_i32_0 = arith.constant 0 : i32
    %c0_i32_1 = arith.constant 0 : i32
    return %c0_i32, %c0_i32_0 : i32, i32
  }
  func.func @transform_7(%arg0: i32) -> (i32, i32) {
    %c0_i32 = arith.constant 0 : i32
    %c0_i32_0 = arith.constant 0 : i32
    %c0_i32_1 = arith.constant 0 : i32
    return %c0_i32, %c0_i32_0 : i32, i32
  }
  func.func @transform_8(%arg0: i32) -> (i32, i32) {
    %c0_i32 = arith.constant 0 : i32
    %c0_i32_0 = arith.constant 0 : i32
    %c0_i32_1 = arith.constant 0 : i32
    return %c0_i32, %c0_i32_0 : i32, i32
  }
  func.func @transform_9(%arg0: i32) -> (i32, i32) {
    %c0_i32 = arith.constant 0 : i32
    %c0_i32_0 = arith.constant 0 : i32
    %c0_i32_1 = arith.constant 0 : i32
    return %c0_i32, %c0_i32_0 : i32, i32
  }
  func.func @transform_10(%arg0: i32) -> (i32, i32) {
    %c0_i32 = arith.constant 0 : i32
    %c0_i32_0 = arith.constant 0 : i32
    %c0_i32_1 = arith.constant 0 : i32
    return %c0_i32, %c0_i32_0 : i32, i32
  }
  func.func @transform_11(%arg0: i32) -> (i32, i32, i32) {
    %c0_i32 = arith.constant 0 : i32
    %c0_i32_0 = arith.constant 0 : i32
    %c0_i32_1 = arith.constant 0 : i32
    return %arg0, %c0_i32, %c0_i32_0 : i32, i32, i32
  }
}

</mosaic_0001>

<llo_original>
// kernel: mid_block_2d_pallas.2
$region0: #{mid_block_2d_pallas.2}
  #allocation0 [shape = 'u32[]', space=smem, size = 0x4, offset = 0x4, fixed_abs, tag = 'smem constant byte address 0x4 - core index']
  #allocation1 [shape = 'u32[144,128]{1,0:T(1,128)}', space=vmem, size = 0x12000, scoped, tag = 'internal scratch']
  %s0 = inlined_call_operand.vmem [shape: f32[2,256,128], index: 0, kind: input, shape index: {}]
  %s1 = inlined_call_operand.vmem [shape: f32[2,1,128], index: 1, kind: input, shape index: {}]
  %s2 = inlined_call_operand.vmem [shape: f32[128,128], index: 2, kind: input, shape index: {}]
  %s3 = inlined_call_operand.vmem [shape: f32[1,128], index: 3, kind: input, shape index: {}]
  %s4 = inlined_call_operand.vmem [shape: f32[1,128], index: 4, kind: input, shape index: {}]
  %s5 = inlined_call_operand.vmem [shape: f32[1152,128], index: 5, kind: input, shape index: {}]
  %s6 = inlined_call_operand.vmem [shape: f32[1,128], index: 6, kind: input, shape index: {}]
  %s7 = inlined_call_operand.vmem [shape: f32[1,128], index: 7, kind: input, shape index: {}]
  %s8 = inlined_call_operand.vmem [shape: f32[1,128], index: 8, kind: input, shape index: {}]
  %s9 = inlined_call_operand.vmem [shape: f32[1152,128], index: 9, kind: input, shape index: {}]
  %s10 = inlined_call_operand.vmem [shape: f32[1,128], index: 10, kind: input, shape index: {}]
  %s11 = inlined_call_operand.vmem [shape: f32[2,256,128], index: 11, kind: output, shape index: {}]
  %s12 = sld [smem:[#allocation0]]
  $region77: #{mid_block_2d_pallas.2} parent=0
    _
  %s14 = ssub.s32 1, %s12
  %s15 = scalar_select 0, %s14, %s12
  loop: start=0, step=1, limit=4
  $region2: #{mid_block_2d_pallas.2} parent=0 // loop_pre_header
    _
  $region3: #{mid_block_2d_pallas.2} parent=0 // loop_header
    %s17 = sphi 0, %s21
    %p18 = scmp.ge.s32.totalorder %s17, 4
    %s27 = sphi 0, %s29
    %s30 = sphi 0, %s27
    %s31 = sphi 0, %s30
    %s47 = sphi 0, %s31
    %s53 = sphi 0, %s55
    %s56 = sphi 0, %s53
    %s57 = sphi 0, %s56
    %s73 = sphi 0, %s57
    %s77 = sphi 0, %s77
    %s79 = sphi 0, %s77
    %s80 = sphi 0, %s79
    %s94 = sphi 0, %s80
    %s98 = sphi 0, %s98
    %s100 = sphi 0, %s98
    %s101 = sphi 0, %s100
    %s115 = sphi 0, %s101
    %s119 = sphi 0, %s119
    %s121 = sphi 0, %s119
    %s122 = sphi 0, %s121
    %s136 = sphi 0, %s122
    %s140 = sphi 0, %s140
    %s142 = sphi 0, %s140
    %s143 = sphi 0, %s142
    %s157 = sphi 0, %s143
    %s161 = sphi 0, %s161
    %s163 = sphi 0, %s161
    %s164 = sphi 0, %s163
    %s178 = sphi 0, %s164
    %s182 = sphi 0, %s182
    %s184 = sphi 0, %s182
    %s185 = sphi 0, %s184
    %s199 = sphi 0, %s185
    %s203 = sphi 0, %s203
    %s205 = sphi 0, %s203
    %s206 = sphi 0, %s205
    %s220 = sphi 0, %s206
    %s224 = sphi 0, %s224
    %s226 = sphi 0, %s224
    %s227 = sphi 0, %s226
    %s241 = sphi 0, %s227
    %s245 = sphi 0, %s245
    %s247 = sphi 0, %s245
    %s248 = sphi 0, %s247
    %s262 = sphi 0, %s248
    %s268 = sphi 0, %s270
    %s271 = sphi 0, %s268
    %s272 = sphi 0, %s271
    %s288 = sphi 0, %s272
  $region4: #{mid_block_2d_pallas.2} parent=0 // loop_header_branch
    %20 = sbr.rel (%p18) target = $region8
  $region5: #{mid_block_2d_pallas.2} parent=0 // loop_body
    %s22 = ssub.s32 %s17, 1
    %s23 = ssub.s32 %s17, 2
    %s24 = sadd.s32 %s17, 1
    %s25 = ssub.s32 %s17, %s24
    %p26 = scmp.eq.s32.totalorder %s25, 0
    %s28 = sadd.s32 %s27, 1
    %s29 = scalar_select %p26, %s27, %s28
    %p32 = pneg %p26
    %p33 = scmp.eq.s32.totalorder %s17, 1
    %p34 = por %p32, %p33
    %p35 = scmp.ne.s32.totalorder %s27, %s30
    %p36 = scmp.eq.s32.totalorder %s17, 0
    %p37 = por %p35, %p36
    %p38 = scmp.ne.s32.totalorder %s27, %s30
    %p39 = scmp.eq.s32.totalorder %s22, 1
    %p40 = por %p38, %p39
    %p41 = scmp.ne.s32.totalorder %s30, %s31
    %p42 = scmp.eq.s32.totalorder %s22, 0
    %p43 = por %p41, %p42
    %p44 = scmp.ne.s32.totalorder %s30, %s31
    %p45 = scmp.eq.s32.totalorder %s23, 1
    %p46 = por %p44, %p45
    %p48 = scmp.ne.s32.totalorder %s31, %s47
    %p49 = scmp.eq.s32.totalorder %s23, 0
    %p50 = por %p48, %p49
    %s51 = ssub.s32 %s17, %s24
    %p52 = scmp.eq.s32.totalorder %s51, 0
    %s54 = sadd.s32 %s53, 1
    %s55 = scalar_select %p52, %s53, %s54
    %p58 = pneg %p52
    %p59 = scmp.eq.s32.totalorder %s17, 1
    %p60 = por %p58, %p59
    %p61 = scmp.ne.s32.totalorder %s53, %s56
    %p62 = scmp.eq.s32.totalorder %s17, 0
    %p63 = por %p61, %p62
    %p64 = scmp.ne.s32.totalorder %s53, %s56
    %p65 = scmp.eq.s32.totalorder %s22, 1
    %p66 = por %p64, %p65
    %p67 = scmp.ne.s32.totalorder %s56, %s57
    %p68 = scmp.eq.s32.totalorder %s22, 0
    %p69 = por %p67, %p68
    %p70 = scmp.ne.s32.totalorder %s56, %s57
    %p71 = scmp.eq.s32.totalorder %s23, 1
    %p72 = por %p70, %p71
    %p74 = scmp.ne.s32.totalorder %s57, %s73
    %p75 = scmp.eq.s32.totalorder %s23, 0
    %p76 = por %p74, %p75
    %s78 = sadd.s32 %s77, 1
    %p81 = scmp.eq.s32.totalorder %s17, 1
    %p82 = scmp.ne.s32.totalorder %s77, %s79
    %p83 = scmp.eq.s32.totalorder %s17, 0
    %p84 = por %p82, %p83
    %p85 = scmp.ne.s32.totalorder %s77, %s79
    %p86 = scmp.eq.s32.totalorder %s22, 1
    %p87 = por %p85, %p86
    %p88 = scmp.ne.s32.totalorder %s79, %s80
    %p89 = scmp.eq.s32.totalorder %s22, 0
    %p90 = por %p88, %p89
    %p91 = scmp.ne.s32.totalorder %s79, %s80
    %p92 = scmp.eq.s32.totalorder %s23, 1
    %p93 = por %p91, %p92
    %p95 = scmp.ne.s32.totalorder %s80, %s94
    %p96 = scmp.eq.s32.totalorder %s23, 0
    %p97 = por %p95, %p96
    %s99 = sadd.s32 %s98, 1
    %p102 = scmp.eq.s32.totalorder %s17, 1
    %p103 = scmp.ne.s32.totalorder %s98, %s100
    %p104 = scmp.eq.s32.totalorder %s17, 0
    %p105 = por %p103, %p104
    %p106 = scmp.ne.s32.totalorder %s98, %s100
    %p107 = scmp.eq.s32.totalorder %s22, 1
    %p108 = por %p106, %p107
    %p109 = scmp.ne.s32.totalorder %s100, %s101
    %p110 = scmp.eq.s32.totalorder %s22, 0
    %p111 = por %p109, %p110
    %p112 = scmp.ne.s32.totalorder %s100, %s101
    %p113 = scmp.eq.s32.totalorder %s23, 1
    %p114 = por %p112, %p113
    %p116 = scmp.ne.s32.totalorder %s101, %s115
    %p117 = scmp.eq.s32.totalorder %s23, 0
    %p118 = por %p116, %p117
    %s120 = sadd.s32 %s119, 1
    %p123 = scmp.eq.s32.totalorder %s17, 1
    %p124 = scmp.ne.s32.totalorder %s119, %s121
    %p125 = scmp.eq.s32.totalorder %s17, 0
    %p126 = por %p124, %p125
    %p127 = scmp.ne.s32.totalorder %s119, %s121
    %p128 = scmp.eq.s32.totalorder %s22, 1
    %p129 = por %p127, %p128
    %p130 = scmp.ne.s32.totalorder %s121, %s122
    %p131 = scmp.eq.s32.totalorder %s22, 0
    %p132 = por %p130, %p131
    %p133 = scmp.ne.s32.totalorder %s121, %s122
    %p134 = scmp.eq.s32.totalorder %s23, 1
    %p135 = por %p133, %p134
    %p137 = scmp.ne.s32.totalorder %s122, %s136
    %p138 = scmp.eq.s32.totalorder %s23, 0
    %p139 = por %p137, %p138
    %s141 = sadd.s32 %s140, 1
    %p144 = scmp.eq.s32.totalorder %s17, 1
    %p145 = scmp.ne.s32.totalorder %s140, %s142
    %p146 = scmp.eq.s32.totalorder %s17, 0
    %p147 = por %p145, %p146
    %p148 = scmp.ne.s32.totalorder %s140, %s142
    %p149 = scmp.eq.s32.totalorder %s22, 1
    %p150 = por %p148, %p149
    %p151 = scmp.ne.s32.totalorder %s142, %s143
    %p152 = scmp.eq.s32.totalorder %s22, 0
    %p153 = por %p151, %p152
    %p154 = scmp.ne.s32.totalorder %s142, %s143
    %p155 = scmp.eq.s32.totalorder %s23, 1
    %p156 = por %p154, %p155
    %p158 = scmp.ne.s32.totalorder %s143, %s157
    %p159 = scmp.eq.s32.totalorder %s23, 0
    %p160 = por %p158, %p159
    %s162 = sadd.s32 %s161, 1
    %p165 = scmp.eq.s32.totalorder %s17, 1
    %p166 = scmp.ne.s32.totalorder %s161, %s163
    %p167 = scmp.eq.s32.totalorder %s17, 0
    %p168 = por %p166, %p167
    %p169 = scmp.ne.s32.totalorder %s161, %s163
    %p170 = scmp.eq.s32.totalorder %s22, 1
    %p171 = por %p169, %p170
    %p172 = scmp.ne.s32.totalorder %s163, %s164
    %p173 = scmp.eq.s32.totalorder %s22, 0
    %p174 = por %p172, %p173
    %p175 = scmp.ne.s32.totalorder %s163, %s164
    %p176 = scmp.eq.s32.totalorder %s23, 1
    %p177 = por %p175, %p176
    %p179 = scmp.ne.s32.totalorder %s164, %s178
    %p180 = scmp.eq.s32.totalorder %s23, 0
    %p181 = por %p179, %p180
    %s183 = sadd.s32 %s182, 1
    %p186 = scmp.eq.s32.totalorder %s17, 1
    %p187 = scmp.ne.s32.totalorder %s182, %s184
    %p188 = scmp.eq.s32.totalorder %s17, 0
    %p189 = por %p187, %p188
    %p190 = scmp.ne.s32.totalorder %s182, %s184
    %p191 = scmp.eq.s32.totalorder %s22, 1
    %p192 = por %p190, %p191
    %p193 = scmp.ne.s32.totalorder %s184, %s185
    %p194 = scmp.eq.s32.totalorder %s22, 0
    %p195 = por %p193, %p194
    %p196 = scmp.ne.s32.totalorder %s184, %s185
    %p197 = scmp.eq.s32.totalorder %s23, 1
    %p198 = por %p196, %p197
    %p200 = scmp.ne.s32.totalorder %s185, %s199
    %p201 = scmp.eq.s32.totalorder %s23, 0
    %p202 = por %p200, %p201
    %s204 = sadd.s32 %s203, 1
    %p207 = scmp.eq.s32.totalorder %s17, 1
    %p208 = scmp.ne.s32.totalorder %s203, %s205
    %p209 = scmp.eq.s32.totalorder %s17, 0
    %p210 = por %p208, %p209
    %p211 = scmp.ne.s32.totalorder %s203, %s205
    %p212 = scmp.eq.s32.totalorder %s22, 1
    %p213 = por %p211, %p212
    %p214 = scmp.ne.s32.totalorder %s205, %s206
    %p215 = scmp.eq.s32.totalorder %s22, 0
    %p216 = por %p214, %p215
    %p217 = scmp.ne.s32.totalorder %s205, %s206
    %p218 = scmp.eq.s32.totalorder %s23, 1
    %p219 = por %p217, %p218
    %p221 = scmp.ne.s32.totalorder %s206, %s220
    %p222 = scmp.eq.s32.totalorder %s23, 0
    %p223 = por %p221, %p222
    %s225 = sadd.s32 %s224, 1
    %p228 = scmp.eq.s32.totalorder %s17, 1
    %p229 = scmp.ne.s32.totalorder %s224, %s226
    %p230 = scmp.eq.s32.totalorder %s17, 0
    %p231 = por %p229, %p230
    %p232 = scmp.ne.s32.totalorder %s224, %s226
    %p233 = scmp.eq.s32.totalorder %s22, 1
    %p234 = por %p232, %p233
    %p235 = scmp.ne.s32.totalorder %s226, %s227
    %p236 = scmp.eq.s32.totalorder %s22, 0
    %p237 = por %p235, %p236
    %p238 = scmp.ne.s32.totalorder %s226, %s227
    %p239 = scmp.eq.s32.totalorder %s23, 1
    %p240 = por %p238, %p239
    %p242 = scmp.ne.s32.totalorder %s227, %s241
    %p243 = scmp.eq.s32.totalorder %s23, 0
    %p244 = por %p242, %p243
    %s246 = sadd.s32 %s245, 1
    %p249 = scmp.eq.s32.totalorder %s17, 1
    %p250 = scmp.ne.s32.totalorder %s245, %s247
    %p251 = scmp.eq.s32.totalorder %s17, 0
    %p252 = por %p250, %p251
    %p253 = scmp.ne.s32.totalorder %s245, %s247
    %p254 = scmp.eq.s32.totalorder %s22, 1
    %p255 = por %p253, %p254
    %p256 = scmp.ne.s32.totalorder %s247, %s248
    %p257 = scmp.eq.s32.totalorder %s22, 0
    %p258 = por %p256, %p257
    %p259 = scmp.ne.s32.totalorder %s247, %s248
    %p260 = scmp.eq.s32.totalorder %s23, 1
    %p261 = por %p259, %p260
    %p263 = scmp.ne.s32.totalorder %s248, %s262
    %p264 = scmp.eq.s32.totalorder %s23, 0
    %p265 = por %p263, %p264
    %s266 = ssub.s32 %s17, %s24
    %p267 = scmp.eq.s32.totalorder %s266, 0
    %s269 = sadd.s32 %s268, 1
    %s270 = scalar_select %p267, %s268, %s269
    %p273 = pneg %p267
    %p274 = scmp.eq.s32.totalorder %s17, 1
    %p275 = por %p273, %p274
    %p276 = scmp.ne.s32.totalorder %s268, %s271
    %p277 = scmp.eq.s32.totalorder %s17, 0
    %p278 = por %p276, %p277
    %p279 = scmp.ne.s32.totalorder %s268, %s271
    %p280 = scmp.eq.s32.totalorder %s22, 1
    %p281 = por %p279, %p280
    %p282 = scmp.ne.s32.totalorder %s271, %s272
    %p283 = scmp.eq.s32.totalorder %s22, 0
    %p284 = por %p282, %p283
    %p285 = scmp.ne.s32.totalorder %s271, %s272
    %p286 = scmp.eq.s32.totalorder %s23, 1
    %p287 = por %p285, %p286
    %p289 = scmp.ne.s32.totalorder %s272, %s288
    %p290 = scmp.eq.s32.totalorder %s23, 0
    %p291 = por %p289, %p290
    %p292 = scmp.le.s32.totalorder 1, %s17
    %p293 = scmp.lt.s32.totalorder %s17, 3
    %p294 = pnand %p292, %p293
    %p295 = pneg %p294
    // Predicated region
    $region9: #{mid_block_2d_pallas.2} parent=5 // pred_check
      _
    $region10: #{mid_block_2d_pallas.2} parent=5 // pred_check_branch
      %297 = sbr.rel (%p294) target = $region12
    $region11: #{mid_block_2d_pallas.2} parent=5 // pred_region
      %s298 = ssub.s32 %s17, 1
      // Predicated region
      $region13: #{mid_block_2d_pallas.2} parent=11 // pred_check
        %p299 = pneg %p90
      $region14: #{mid_block_2d_pallas.2} parent=11 // pred_check_branch
        %301 = sbr.rel (%p299) target = $region16
      $region15: #{mid_block_2d_pallas.2} parent=11 // pred_region
        _
      $region16: #{mid_block_2d_pallas.2} parent=11 // pred_fallthru
        _
      // Predicated region
      $region17: #{mid_block_2d_pallas.2} parent=11 // pred_check
        %p302 = pneg %p111
      $region18: #{mid_block_2d_pallas.2} parent=11 // pred_check_branch
        %304 = sbr.rel (%p302) target = $region20
      $region19: #{mid_block_2d_pallas.2} parent=11 // pred_region
        _
      $region20: #{mid_block_2d_pallas.2} parent=11 // pred_fallthru
        _
      // Predicated region
      $region21: #{mid_block_2d_pallas.2} parent=11 // pred_check
        %p305 = pneg %p132
      $region22: #{mid_block_2d_pallas.2} parent=11 // pred_check_branch
        %307 = sbr.rel (%p305) target = $region24
      $region23: #{mid_block_2d_pallas.2} parent=11 // pred_region
        _
      $region24: #{mid_block_2d_pallas.2} parent=11 // pred_fallthru
        _
      // Predicated region
      $region25: #{mid_block_2d_pallas.2} parent=11 // pred_check
        %p308 = pneg %p153
      $region26: #{mid_block_2d_pallas.2} parent=11 // pred_check_branch
        %310 = sbr.rel (%p308) target = $region28
      $region27: #{mid_block_2d_pallas.2} parent=11 // pred_region
        _
      $region28: #{mid_block_2d_pallas.2} parent=11 // pred_fallthru
        _
      // Predicated region
      $region29: #{mid_block_2d_pallas.2} parent=11 // pred_check
        %p311 = pneg %p174
      $region30: #{mid_block_2d_pallas.2} parent=11 // pred_check_branch
        %313 = sbr.rel (%p311) target = $region32
      $region31: #{mid_block_2d_pallas.2} parent=11 // pred_region
        _
      $region32: #{mid_block_2d_pallas.2} parent=11 // pred_fallthru
        _
      // Predicated region
      $region33: #{mid_block_2d_pallas.2} parent=11 // pred_check
        %p314 = pneg %p195
      $region34: #{mid_block_2d_pallas.2} parent=11 // pred_check_branch
        %316 = sbr.rel (%p314) target = $region36
      $region35: #{mid_block_2d_pallas.2} parent=11 // pred_region
        _
      $region36: #{mid_block_2d_pallas.2} parent=11 // pred_fallthru
        _
      // Predicated region
      $region37: #{mid_block_2d_pallas.2} parent=11 // pred_check
        %p317 = pneg %p216
      $region38: #{mid_block_2d_pallas.2} parent=11 // pred_check_branch
        %319 = sbr.rel (%p317) target = $region40
      $region39: #{mid_block_2d_pallas.2} parent=11 // pred_region
        _
      $region40: #{mid_block_2d_pallas.2} parent=11 // pred_fallthru
        _
      // Predicated region
      $region41: #{mid_block_2d_pallas.2} parent=11 // pred_check
        %p320 = pneg %p237
      $region42: #{mid_block_2d_pallas.2} parent=11 // pred_check_branch
        %322 = sbr.rel (%p320) target = $region44
      $region43: #{mid_block_2d_pallas.2} parent=11 // pred_region
        _
      $region44: #{mid_block_2d_pallas.2} parent=11 // pred_fallthru
        _
      // Predicated region
      $region45: #{mid_block_2d_pallas.2} parent=11 // pred_check
        %p323 = pneg %p258
      $region46: #{mid_block_2d_pallas.2} parent=11 // pred_check_branch
        %325 = sbr.rel (%p323) target = $region48
      $region47: #{mid_block_2d_pallas.2} parent=11 // pred_region
        _
      $region48: #{mid_block_2d_pallas.2} parent=11 // pred_fallthru
        _
    $region12: #{mid_block_2d_pallas.2} parent=5 // pred_fallthru
      _
    %p326 = scmp.lt.s32.totalorder %s17, 2
    // Predicated region
    $region49: #{mid_block_2d_pallas.2} parent=5 // pred_check
      %p327 = pneg %p326
    $region50: #{mid_block_2d_pallas.2} parent=5 // pred_check_branch
      %329 = sbr.rel (%p327) target = $region52
    $region51: #{mid_block_2d_pallas.2} parent=5 // pred_region
      // Predicated region
      $region53: #{mid_block_2d_pallas.2} parent=51 // pred_check
        %p330 = pneg %p37
      $region54: #{mid_block_2d_pallas.2} parent=51 // pred_check_branch
        %332 = sbr.rel (%p330) target = $region56
      $region55: #{mid_block_2d_pallas.2} parent=51 // pred_region
        %p333 = scmp.lt.s32.totalorder %s17, 1
        %s334 = scalar_select %p333, %s17, 1
        %s335 = smul.addr %s334, 32
        %s336 = smul.addr %s335, 8
        %s337 = scalar_lea.vmem %s0, %s336
      $region56: #{mid_block_2d_pallas.2} parent=51 // pred_fallthru
        _
      // Predicated region
      $region57: #{mid_block_2d_pallas.2} parent=51 // pred_check
        %p338 = pneg %p63
      $region58: #{mid_block_2d_pallas.2} parent=51 // pred_check_branch
        %340 = sbr.rel (%p338) target = $region60
      $region59: #{mid_block_2d_pallas.2} parent=51 // pred_region
        %p341 = scmp.lt.s32.totalorder %s17, 1
        %s342 = scalar_select %p341, %s17, 1
        %s343 = scalar_lea.vmem %s1, %s342
      $region60: #{mid_block_2d_pallas.2} parent=51 // pred_fallthru
        _
    $region52: #{mid_block_2d_pallas.2} parent=5 // pred_fallthru
      _
    %p344 = scmp.le.s32.totalorder 1, %s17
    %p345 = scmp.lt.s32.totalorder %s17, 3
    %p346 = pnand %p344, %p345
    %p347 = pneg %p346
    // Predicated region
    $region61: #{mid_block_2d_pallas.2} parent=5 // pred_check
      _
    $region62: #{mid_block_2d_pallas.2} parent=5 // pred_check_branch
      %349 = sbr.rel (%p346) target = $region64
    $region63: #{mid_block_2d_pallas.2} parent=5 // pred_region
      %s350 = ssub.s32 %s17, 1
      %p351 = scmp.lt.s32.totalorder %s22, 1
      %s352 = scalar_select %p351, %s22, 1
      %s353 = smul.addr %s352, 32
      %s354 = smul.addr %s353, 8
      %s355 = scalar_lea.vmem %s0, %s354
      %p356 = pneg %p43
      %p357 = pneg %p40
      %p358 = scmp.lt.s32.totalorder %s22, 1
      %s359 = scalar_select %p358, %s22, 1
      %s360 = scalar_lea.vmem %s1, %s359
      %p361 = pneg %p69
      %p362 = pneg %p66
      %p363 = pneg %p90
      %p364 = pneg %p87
      %p365 = pneg %p111
      %p366 = pneg %p108
      %p367 = pneg %p132
      %p368 = pneg %p129
      %p369 = pneg %p153
      %p370 = pneg %p150
      %p371 = pneg %p174
      %p372 = pneg %p171
      %p373 = pneg %p195
      %p374 = pneg %p192
      %p375 = pneg %p216
      %p376 = pneg %p213
      %p377 = pneg %p237
      %p378 = pneg %p234
      %p379 = pneg %p258
      %p380 = pneg %p255
      %p381 = pneg %p284
      %p382 = pneg %p281
      %p383 = scmp.lt.s32.totalorder %s22, 1
      %s384 = scalar_select %p383, %s22, 1
      %s385 = smul.addr %s384, 32
      %s386 = smul.addr %s385, 8
      %s387 = scalar_lea.vmem %s11, %s386
      %p388 = scmp.lt.s32.totalorder %s22, 1
      %s389 = scalar_select %p388, %s22, 1
      %s390 = smul.addr %s389, 32
      %s391 = smul.addr %s390, 8
      %s392 = scalar_lea.vmem %s0, %s391
      %p393 = scmp.lt.s32.totalorder %s22, 1
      %s394 = scalar_select %p393, %s22, 1
      %s395 = scalar_lea.vmem %s1, %s394
      %p396 = scmp.lt.s32.totalorder %s22, 1
      %s397 = scalar_select %p396, %s22, 1
      %s398 = smul.addr %s397, 32
      %s399 = smul.addr %s398, 8
      %s400 = scalar_lea.vmem %s11, %s399
      %v401 = vld [vmem:[%s392] sm:$0xff]
      %v402 = vld [vmem:[%s392 + $0x8] sm:$0xff]
      %v403 = vld [vmem:[%s392 + $0x10] sm:$0xff]
      %v404 = vld [vmem:[%s392 + $0x18] sm:$0xff]
      %v405 = vld [vmem:[%s392 + $0x20] sm:$0xff]
      %v406 = vld [vmem:[%s392 + $0x28] sm:$0xff]
      %v407 = vld [vmem:[%s392 + $0x30] sm:$0xff]
      %v408 = vld [vmem:[%s392 + $0x38] sm:$0xff]
      %v409 = vld [vmem:[%s392 + $0x40] sm:$0xff]
      %v410 = vld [vmem:[%s392 + $0x48] sm:$0xff]
      %v411 = vld [vmem:[%s392 + $0x50] sm:$0xff]
      %v412 = vld [vmem:[%s392 + $0x58] sm:$0xff]
      %v413 = vld [vmem:[%s392 + $0x60] sm:$0xff]
      %v414 = vld [vmem:[%s392 + $0x68] sm:$0xff]
      %v415 = vld [vmem:[%s392 + $0x70] sm:$0xff]
      %v416 = vld [vmem:[%s392 + $0x78] sm:$0xff]
      %v417 = vld [vmem:[%s392 + $0x80] sm:$0xff]
      %v418 = vld [vmem:[%s392 + $0x88] sm:$0xff]
      %v419 = vld [vmem:[%s392 + $0x90] sm:$0xff]
      %v420 = vld [vmem:[%s392 + $0x98] sm:$0xff]
      %v421 = vld [vmem:[%s392 + $0xa0] sm:$0xff]
      %v422 = vld [vmem:[%s392 + $0xa8] sm:$0xff]
      %v423 = vld [vmem:[%s392 + $0xb0] sm:$0xff]
      %v424 = vld [vmem:[%s392 + $0xb8] sm:$0xff]
      %v425 = vld [vmem:[%s392 + $0xc0] sm:$0xff]
      %v426 = vld [vmem:[%s392 + $0xc8] sm:$0xff]
      %v427 = vld [vmem:[%s392 + $0xd0] sm:$0xff]
      %v428 = vld [vmem:[%s392 + $0xd8] sm:$0xff]
      %v429 = vld [vmem:[%s392 + $0xe0] sm:$0xff]
      %v430 = vld [vmem:[%s392 + $0xe8] sm:$0xff]
      %v431 = vld [vmem:[%s392 + $0xf0] sm:$0xff]
      %v432 = vld [vmem:[%s392 + $0xf8] sm:$0xff]
      %v433 = vld [vmem:[%s2] sm:$0xff]
      %v434 = vld [vmem:[%s2 + $0x8] sm:$0xff]
      %v435 = vld [vmem:[%s2 + $0x10] sm:$0xff]
      %v436 = vld [vmem:[%s2 + $0x18] sm:$0xff]
      %v437 = vld [vmem:[%s2 + $0x20] sm:$0xff]
      %v438 = vld [vmem:[%s2 + $0x28] sm:$0xff]
      %v439 = vld [vmem:[%s2 + $0x30] sm:$0xff]
      %v440 = vld [vmem:[%s2 + $0x38] sm:$0xff]
      %v441 = vld [vmem:[%s2 + $0x40] sm:$0xff]
      %v442 = vld [vmem:[%s2 + $0x48] sm:$0xff]
      %v443 = vld [vmem:[%s2 + $0x50] sm:$0xff]
      %v444 = vld [vmem:[%s2 + $0x58] sm:$0xff]
      %v445 = vld [vmem:[%s2 + $0x60] sm:$0xff]
      %v446 = vld [vmem:[%s2 + $0x68] sm:$0xff]
      %v447 = vld [vmem:[%s2 + $0x70] sm:$0xff]
      %v448 = vld [vmem:[%s2 + $0x78] sm:$0xff]
      %v449 = vlaneseq
      %v450 = vshrl.u32 %v449, 7
      %v451 = vadd.s32 %v450, 8
      %vm452 = vcmp.ge.s32.totalorder %v450, 1
      %vm453 = vcmp.ge.s32.totalorder %v451, 1
      %vm454 = vcmp.le.s32.totalorder %v450, 14
      %vm455 = vcmp.le.s32.totalorder %v451, 14
      %v456 = vld [vmem:[%s3] sm:$0x1]
      %v457 = vld [vmem:[%s4] sm:$0x1]
      %v458 = vadd.f32 %v401, %v402
      %v459 = vadd.f32 %v458, %v403
      %v460 = vadd.f32 %v459, %v404
      %v461 = vadd.f32 %v460, %v405
      %v462 = vadd.f32 %v461, %v406
      %v463 = vadd.f32 %v462, %v407
      %v464 = vadd.f32 %v463, %v408
      %v465 = vadd.f32 %v464, %v409
      %v466 = vadd.f32 %v465, %v410
      %v467 = vadd.f32 %v466, %v411
      %v468 = vadd.f32 %v467, %v412
      %v469 = vadd.f32 %v468, %v413
      %v470 = vadd.f32 %v469, %v414
      %v471 = vadd.f32 %v470, %v415
      %v472 = vadd.f32 %v471, %v416
      %v473 = vadd.f32 %v472, %v417
      %v474 = vadd.f32 %v473, %v418
      %v475 = vadd.f32 %v474, %v419
      %v476 = vadd.f32 %v475, %v420
      %v477 = vadd.f32 %v476, %v421
      %v478 = vadd.f32 %v477, %v422
      %v479 = vadd.f32 %v478, %v423
      %v480 = vadd.f32 %v479, %v424
      %v481 = vadd.f32 %v480, %v425
      %v482 = vadd.f32 %v481, %v426
      %v483 = vadd.f32 %v482, %v427
      %v484 = vadd.f32 %v483, %v428
      %v485 = vadd.f32 %v484, %v429
      %v486 = vadd.f32 %v485, %v430
      %v487 = vadd.f32 %v486, %v431
      %v488 = vadd.f32 %v487, %v432
      %v489 = vrot.slane %v488, 4
      %v490 = vadd.f32 %v488, %v489
      %v491 = vrot.slane %v490, 2
      %v492 = vadd.f32 %v490, %v491
      %v493 = vrot.slane %v492, 1
      %v494 = vadd.f32 %v492, %v493
      %v495 = vmul.f32 %v401, %v401
      %v496 = vmul.f32 %v402, %v402
      %v497 = vmul.f32 %v403, %v403
      %v498 = vmul.f32 %v404, %v404
      %v499 = vmul.f32 %v405, %v405
      %v500 = vmul.f32 %v406, %v406
      %v501 = vmul.f32 %v407, %v407
      %v502 = vmul.f32 %v408, %v408
      %v503 = vmul.f32 %v409, %v409
      %v504 = vmul.f32 %v410, %v410
      %v505 = vmul.f32 %v411, %v411
      %v506 = vmul.f32 %v412, %v412
      %v507 = vmul.f32 %v413, %v413
      %v508 = vmul.f32 %v414, %v414
      %v509 = vmul.f32 %v415, %v415
      %v510 = vmul.f32 %v416, %v416
      %v511 = vmul.f32 %v417, %v417
      %v512 = vmul.f32 %v418, %v418
      %v513 = vmul.f32 %v419, %v419
      %v514 = vmul.f32 %v420, %v420
      %v515 = vmul.f32 %v421, %v421
      %v516 = vmul.f32 %v422, %v422
      %v517 = vmul.f32 %v423, %v423
      %v518 = vmul.f32 %v424, %v424
      %v519 = vmul.f32 %v425, %v425
      %v520 = vmul.f32 %v426, %v426
      %v521 = vmul.f32 %v427, %v427
      %v522 = vmul.f32 %v428, %v428
      %v523 = vmul.f32 %v429, %v429
      %v524 = vmul.f32 %v430, %v430
      %v525 = vmul.f32 %v431, %v431
      %v526 = vmul.f32 %v432, %v432
      %v527 = vadd.f32 %v495, %v496
      %v528 = vadd.f32 %v527, %v497
      %v529 = vadd.f32 %v528, %v498
      %v530 = vadd.f32 %v529, %v499
      %v531 = vadd.f32 %v530, %v500
      %v532 = vadd.f32 %v531, %v501
      %v533 = vadd.f32 %v532, %v502
      %v534 = vadd.f32 %v533, %v503
      %v535 = vadd.f32 %v534, %v504
      %v536 = vadd.f32 %v535, %v505
      %v537 = vadd.f32 %v536, %v506
      %v538 = vadd.f32 %v537, %v507
      %v539 = vadd.f32 %v538, %v508
      %v540 = vadd.f32 %v539, %v509
      %v541 = vadd.f32 %v540, %v510
      %v542 = vadd.f32 %v541, %v511
      %v543 = vadd.f32 %v542, %v512
      %v544 = vadd.f32 %v543, %v513
      %v545 = vadd.f32 %v544, %v514
      %v546 = vadd.f32 %v545, %v515
      %v547 = vadd.f32 %v546, %v516
      %v548 = vadd.f32 %v547, %v517
      %v549 = vadd.f32 %v548, %v518
      %v550 = vadd.f32 %v549, %v519
      %v551 = vadd.f32 %v550, %v520
      %v552 = vadd.f32 %v551, %v521
      %v553 = vadd.f32 %v552, %v522
      %v554 = vadd.f32 %v553, %v523
      %v555 = vadd.f32 %v554, %v524
      %v556 = vadd.f32 %v555, %v525
      %v557 = vadd.f32 %v556, %v526
      %v558 = vrot.slane %v557, 4
      %v559 = vadd.f32 %v557, %v558
      %v560 = vrot.slane %v559, 2
      %v561 = vadd.f32 %v559, %v560
      %v562 = vrot.slane %v561, 1
      %v563 = vadd.f32 %v561, %v562
      %564 = vmatprep.subr.mxu0 0.0
      %565 = vmatpush1.msra.mxu0 %v433
      %566 = vmatprep.subr.mxu0 0.0
      %567 = vmatpush1.msra.mxu0 %v434
      %568 = vmatprep.subr.mxu0 0.0
      %569 = vmatpush1.msra.mxu0 %v435
      %570 = vmatprep.subr.mxu0 0.0
      %571 = vmatpush1.msra.mxu0 %v436
      %572 = vmatprep.subr.mxu0 0.0
      %573 = vmatpush1.msra.mxu0 %v437
      %574 = vmatprep.subr.mxu0 0.0
      %575 = vmatpush1.msra.mxu0 %v438
      %576 = vmatprep.subr.mxu0 0.0
      %577 = vmatpush1.msra.mxu0 %v439
      %578 = vmatprep.subr.mxu0 0.0
      %579 = vmatpush1.msra.mxu0 %v440
      %580 = vmatprep.subr.mxu0 0.0
      %581 = vmatpush1.msra.mxu0 %v441
      %582 = vmatprep.subr.mxu0 0.0
      %583 = vmatpush1.msra.mxu0 %v442
      %584 = vmatprep.subr.mxu0 0.0
      %585 = vmatpush1.msra.mxu0 %v443
      %586 = vmatprep.subr.mxu0 0.0
      %587 = vmatpush1.msra.mxu0 %v444
      %588 = vmatprep.subr.mxu0 0.0
      %589 = vmatpush1.msra.mxu0 %v445
      %590 = vmatprep.subr.mxu0 0.0
      %591 = vmatpush1.msra.mxu0 %v446
      %592 = vmatprep.subr.mxu0 0.0
      %593 = vmatpush1.msra.mxu0 %v447
      %594 = vmatprep.subr.mxu0 0.0
      %595 = vmatpush1.msra.mxu0 %v448
      %596 = vmatprep.subr.mxu0 0.0
      %597 = vmatpush1.msra.mxu0 0.0
      %598 = vmatprep.subr.mxu0 0.0
      %599 = vmatpush1.msra.mxu0 0.0
      %600 = vmatprep.subr.mxu0 0.0
      %601 = vmatpush1.msra.mxu0 0.0
      %602 = vmatprep.subr.mxu0 0.0
      %603 = vmatpush1.msra.mxu0 0.0
      %604 = vmatprep.subr.mxu0 0.0
      %605 = vmatpush1.msra.mxu0 0.0
      %606 = vmatprep.subr.mxu0 0.0
      %607 = vmatpush1.msra.mxu0 0.0
      %608 = vmatprep.subr.mxu0 0.0
      %609 = vmatpush1.msra.mxu0 0.0
      %610 = vmatprep.subr.mxu0 0.0
      %611 = vmatpush1.msra.mxu0 0.0
      %612 = vmatprep.subr.mxu0 0.0
      %613 = vmatpush1.msra.mxu0 0.0
      %614 = vmatprep.subr.mxu0 0.0
      %615 = vmatpush1.msra.mxu0 0.0
      %616 = vmatprep.subr.mxu0 0.0
      %617 = vmatpush1.msra.mxu0 0.0
      %618 = vmatprep.subr.mxu0 0.0
      %619 = vmatpush1.msra.mxu0 0.0
      %620 = vmatprep.subr.mxu0 0.0
      %621 = vmatpush1.msra.mxu0 0.0
      %622 = vmatprep.subr.mxu0 0.0
      %623 = vmatpush1.msra.mxu0 0.0
      %624 = vmatprep.subr.mxu0 0.0
      %625 = vmatpush1.msra.mxu0 0.0
      %626 = vmatprep.subr.mxu0 0.0
      %627 = vmatpush1.msra.mxu0 0.0
      %628 = vmatprep.mubr.f32.mxu0 0.0
      %629 = vmatmul.mubr.f32.gmra.mrb[0].mxu0 %v494
      %v630 = vpop.f32.mrb[0].mxu0
      %v631 = vadd.f32 0.0, %v630
      %v632 = vpop.f32.mrb[0].mxu0
      %633 = vdwg.mxu0
      %634 = vmatprep.subr.mxu0 0.0
      %635 = vmatpush1.msra.mxu0 %v433
      %636 = vmatprep.subr.mxu0 0.0
      %637 = vmatpush1.msra.mxu0 %v434
      %638 = vmatprep.subr.mxu0 0.0
      %639 = vmatpush1.msra.mxu0 %v435
      %640 = vmatprep.subr.mxu0 0.0
      %641 = vmatpush1.msra.mxu0 %v436
      %642 = vmatprep.subr.mxu0 0.0
      %643 = vmatpush1.msra.mxu0 %v437
      %644 = vmatprep.subr.mxu0 0.0
      %645 = vmatpush1.msra.mxu0 %v438
      %646 = vmatprep.subr.mxu0 0.0
      %647 = vmatpush1.msra.mxu0 %v439
      %648 = vmatprep.subr.mxu0 0.0
      %649 = vmatpush1.msra.mxu0 %v440
      %650 = vmatprep.subr.mxu0 0.0
      %651 = vmatpush1.msra.mxu0 %v441
      %652 = vmatprep.subr.mxu0 0.0
      %653 = vmatpush1.msra.mxu0 %v442
      %654 = vmatprep.subr.mxu0 0.0
      %655 = vmatpush1.msra.mxu0 %v443
      %656 = vmatprep.subr.mxu0 0.0
      %657 = vmatpush1.msra.mxu0 %v444
      %658 = vmatprep.subr.mxu0 0.0
      %659 = vmatpush1.msra.mxu0 %v445
      %660 = vmatprep.subr.mxu0 0.0
      %661 = vmatpush1.msra.mxu0 %v446
      %662 = vmatprep.subr.mxu0 0.0
      %663 = vmatpush1.msra.mxu0 %v447
      %664 = vmatprep.subr.mxu0 0.0
      %665 = vmatpush1.msra.mxu0 %v448
      %666 = vmatprep.subr.mxu0 0.0
      %667 = vmatpush1.msra.mxu0 0.0
      %668 = vmatprep.subr.mxu0 0.0
      %669 = vmatpush1.msra.mxu0 0.0
      %670 = vmatprep.subr.mxu0 0.0
      %671 = vmatpush1.msra.mxu0 0.0
      %672 = vmatprep.subr.mxu0 0.0
      %673 = vmatpush1.msra.mxu0 0.0
      %674 = vmatprep.subr.mxu0 0.0
      %675 = vmatpush1.msra.mxu0 0.0
      %676 = vmatprep.subr.mxu0 0.0
      %677 = vmatpush1.msra.mxu0 0.0
      %678 = vmatprep.subr.mxu0 0.0
      %679 = vmatpush1.msra.mxu0 0.0
      %680 = vmatprep.subr.mxu0 0.0
      %681 = vmatpush1.msra.mxu0 0.0
      %682 = vmatprep.subr.mxu0 0.0
      %683 = vmatpush1.msra.mxu0 0.0
      %684 = vmatprep.subr.mxu0 0.0
      %685 = vmatpush1.msra.mxu0 0.0
      %686 = vmatprep.subr.mxu0 0.0
      %687 = vmatpush1.msra.mxu0 0.0
      %688 = vmatprep.subr.mxu0 0.0
      %689 = vmatpush1.msra.mxu0 0.0
      %690 = vmatprep.subr.mxu0 0.0
      %691 = vmatpush1.msra.mxu0 0.0
      %692 = vmatprep.subr.mxu0 0.0
      %693 = vmatpush1.msra.mxu0 0.0
      %694 = vmatprep.subr.mxu0 0.0
      %695 = vmatpush1.msra.mxu0 0.0
      %696 = vmatprep.subr.mxu0 0.0
      %697 = vmatpush1.msra.mxu0 0.0
      %698 = vmatprep.mubr.f32.mxu0 0.0
      %699 = vmatmul.mubr.f32.gmra.mrb[0].mxu0 %v563
      %v700 = vpop.f32.mrb[0].mxu0
      %v701 = vadd.f32 0.0, %v700
      %v702 = vpop.f32.mrb[0].mxu0
      %703 = vdwg.mxu0
      %v704 = vmul.f32 %v631, %v631
      %v705 = vsub.f32 %v701, %v704
      %v706 = vadd.f32 %v705, 1e-06
      %v707 = vrsqrt.pop %v706
      %v708 = vmul.f32 %v707, %v456
      %v709 = vmul.f32 %v631, %v708
      %v710 = vsub.f32 %v457, %v709
      %v711 = vlaneseq
      %v712 = vshrl.u32 %v711, 7
      %v713 = vsub.s32 0, %v712
      %v714 = vrot.slane %v708, %v713
      %v715 = vmul.f32 %v401, %v714
      %v716 = vmul.f32 %v402, %v714
      %v717 = vmul.f32 %v403, %v714
      %v718 = vmul.f32 %v404, %v714
      %v719 = vmul.f32 %v405, %v714
      %v720 = vmul.f32 %v406, %v714
      %v721 = vmul.f32 %v407, %v714
      %v722 = vmul.f32 %v408, %v714
      %v723 = vmul.f32 %v409, %v714
      %v724 = vmul.f32 %v410, %v714
      %v725 = vmul.f32 %v411, %v714
      %v726 = vmul.f32 %v412, %v714
      %v727 = vmul.f32 %v413, %v714
      %v728 = vmul.f32 %v414, %v714
      %v729 = vmul.f32 %v415, %v714
      %v730 = vmul.f32 %v416, %v714
      %v731 = vmul.f32 %v417, %v714
      %v732 = vmul.f32 %v418, %v714
      %v733 = vmul.f32 %v419, %v714
      %v734 = vmul.f32 %v420, %v714
      %v735 = vmul.f32 %v421, %v714
      %v736 = vmul.f32 %v422, %v714
      %v737 = vmul.f32 %v423, %v714
      %v738 = vmul.f32 %v424, %v714
      %v739 = vmul.f32 %v425, %v714
      %v740 = vmul.f32 %v426, %v714
      %v741 = vmul.f32 %v427, %v714
      %v742 = vmul.f32 %v428, %v714
      %v743 = vmul.f32 %v429, %v714
      %v744 = vmul.f32 %v430, %v714
      %v745 = vmul.f32 %v431, %v714
      %v746 = vmul.f32 %v432, %v714
      %v748 = vlaneseq
      %v749 = vshrl.u32 %v748, 7
      %v750 = vsub.s32 0, %v749
      %v751 = vrot.slane %v710, %v750
      %v753 = vadd.f32 %v715, %v751
      %v754 = vadd.f32 %v716, %v751
      %v755 = vadd.f32 %v717, %v751
      %v756 = vadd.f32 %v718, %v751
      %v757 = vadd.f32 %v719, %v751
      %v758 = vadd.f32 %v720, %v751
      %v759 = vadd.f32 %v721, %v751
      %v760 = vadd.f32 %v722, %v751
      %v761 = vadd.f32 %v723, %v751
      %v762 = vadd.f32 %v724, %v751
      %v763 = vadd.f32 %v725, %v751
      %v764 = vadd.f32 %v726, %v751
      %v765 = vadd.f32 %v727, %v751
      %v766 = vadd.f32 %v728, %v751
      %v767 = vadd.f32 %v729, %v751
      %v768 = vadd.f32 %v730, %v751
      %v769 = vadd.f32 %v731, %v751
      %v770 = vadd.f32 %v732, %v751
      %v771 = vadd.f32 %v733, %v751
      %v772 = vadd.f32 %v734, %v751
      %v773 = vadd.f32 %v735, %v751
      %v774 = vadd.f32 %v736, %v751
      %v775 = vadd.f32 %v737, %v751
      %v776 = vadd.f32 %v738, %v751
      %v777 = vadd.f32 %v739, %v751
      %v778 = vadd.f32 %v740, %v751
      %v779 = vadd.f32 %v741, %v751
      %v780 = vadd.f32 %v742, %v751
      %v781 = vadd.f32 %v743, %v751
      %v782 = vadd.f32 %v744, %v751
      %v783 = vadd.f32 %v745, %v751
      %v784 = vadd.f32 %v746, %v751
      %v785 = vsub.f32 0.0, %v753
      %v786 = vsub.f32 0.0, %v754
      %v787 = vsub.f32 0.0, %v755
      %v788 = vsub.f32 0.0, %v756
      %v789 = vsub.f32 0.0, %v757
      %v790 = vsub.f32 0.0, %v758
      %v791 = vsub.f32 0.0, %v759
      %v792 = vsub.f32 0.0, %v760
      %v793 = vsub.f32 0.0, %v761
      %v794 = vsub.f32 0.0, %v762
      %v795 = vsub.f32 0.0, %v763
      %v796 = vsub.f32 0.0, %v764
      %v797 = vsub.f32 0.0, %v765
      %v798 = vsub.f32 0.0, %v766
      %v799 = vsub.f32 0.0, %v767
      %v800 = vsub.f32 0.0, %v768
      %v801 = vsub.f32 0.0, %v769
      %v802 = vsub.f32 0.0, %v770
      %v803 = vsub.f32 0.0, %v771
      %v804 = vsub.f32 0.0, %v772
      %v805 = vsub.f32 0.0, %v773
      %v806 = vsub.f32 0.0, %v774
      %v807 = vsub.f32 0.0, %v775
      %v808 = vsub.f32 0.0, %v776
      %v809 = vsub.f32 0.0, %v777
      %v810 = vsub.f32 0.0, %v778
      %v811 = vsub.f32 0.0, %v779
      %v812 = vsub.f32 0.0, %v780
      %v813 = vsub.f32 0.0, %v781
      %v814 = vsub.f32 0.0, %v782
      %v815 = vsub.f32 0.0, %v783
      %v816 = vsub.f32 0.0, %v784
      %v817 = vmul.f32 %v785, 1.442695
      %v818 = vpow.pop %v817
      %v819 = vmul.f32 %v786, 1.442695
      %v820 = vpow.pop %v819
      %v821 = vmul.f32 %v787, 1.442695
      %v822 = vpow.pop %v821
      %v823 = vmul.f32 %v788, 1.442695
      %v824 = vpow.pop %v823
      %v825 = vmul.f32 %v789, 1.442695
      %v826 = vpow.pop %v825
      %v827 = vmul.f32 %v790, 1.442695
      %v828 = vpow.pop %v827
      %v829 = vmul.f32 %v791, 1.442695
      %v830 = vpow.pop %v829
      %v831 = vmul.f32 %v792, 1.442695
      %v832 = vpow.pop %v831
      %v833 = vmul.f32 %v793, 1.442695
      %v834 = vpow.pop %v833
      %v835 = vmul.f32 %v794, 1.442695
      %v836 = vpow.pop %v835
      %v837 = vmul.f32 %v795, 1.442695
      %v838 = vpow.pop %v837
      %v839 = vmul.f32 %v796, 1.442695
      %v840 = vpow.pop %v839
      %v841 = vmul.f32 %v797, 1.442695
      %v842 = vpow.pop %v841
      %v843 = vmul.f32 %v798, 1.442695
      %v844 = vpow.pop %v843
      %v845 = vmul.f32 %v799, 1.442695
      %v846 = vpow.pop %v845
      %v847 = vmul.f32 %v800, 1.442695
      %v848 = vpow.pop %v847
      %v849 = vmul.f32 %v801, 1.442695
      %v850 = vpow.pop %v849
      %v851 = vmul.f32 %v802, 1.442695
      %v852 = vpow.pop %v851
      %v853 = vmul.f32 %v803, 1.442695
      %v854 = vpow.pop %v853
      %v855 = vmul.f32 %v804, 1.442695
      %v856 = vpow.pop %v855
      %v857 = vmul.f32 %v805, 1.442695
      %v858 = vpow.pop %v857
      %v859 = vmul.f32 %v806, 1.442695
      %v860 = vpow.pop %v859
      %v861 = vmul.f32 %v807, 1.442695
      %v862 = vpow.pop %v861
      %v863 = vmul.f32 %v808, 1.442695
      %v864 = vpow.pop %v863
      %v865 = vmul.f32 %v809, 1.442695
      %v866 = vpow.pop %v865
      %v867 = vmul.f32 %v810, 1.442695
      %v868 = vpow.pop %v867
      %v869 = vmul.f32 %v811, 1.442695
      %v870 = vpow.pop %v869
      %v871 = vmul.f32 %v812, 1.442695
      %v872 = vpow.pop %v871
      %v873 = vmul.f32 %v813, 1.442695
      %v874 = vpow.pop %v873
      %v875 = vmul.f32 %v814, 1.442695
      %v876 = vpow.pop %v875
      %v877 = vmul.f32 %v815, 1.442695
      %v878 = vpow.pop %v877
      %v879 = vmul.f32 %v816, 1.442695
      %v880 = vpow.pop %v879
      %v881 = vadd.f32 %v818, 1.0
      %v882 = vadd.f32 %v820, 1.0
      %v883 = vadd.f32 %v822, 1.0
      %v884 = vadd.f32 %v824, 1.0
      %v885 = vadd.f32 %v826, 1.0
      %v886 = vadd.f32 %v828, 1.0
      %v887 = vadd.f32 %v830, 1.0
      %v888 = vadd.f32 %v832, 1.0
      %v889 = vadd.f32 %v834, 1.0
      %v890 = vadd.f32 %v836, 1.0
      %v891 = vadd.f32 %v838, 1.0
      %v892 = vadd.f32 %v840, 1.0
      %v893 = vadd.f32 %v842, 1.0
      %v894 = vadd.f32 %v844, 1.0
      %v895 = vadd.f32 %v846, 1.0
      %v896 = vadd.f32 %v848, 1.0
      %v897 = vadd.f32 %v850, 1.0
      %v898 = vadd.f32 %v852, 1.0
      %v899 = vadd.f32 %v854, 1.0
      %v900 = vadd.f32 %v856, 1.0
      %v901 = vadd.f32 %v858, 1.0
      %v902 = vadd.f32 %v860, 1.0
      %v903 = vadd.f32 %v862, 1.0
      %v904 = vadd.f32 %v864, 1.0
      %v905 = vadd.f32 %v866, 1.0
      %v906 = vadd.f32 %v868, 1.0
      %v907 = vadd.f32 %v870, 1.0
      %v908 = vadd.f32 %v872, 1.0
      %v909 = vadd.f32 %v874, 1.0
      %v910 = vadd.f32 %v876, 1.0
      %v911 = vadd.f32 %v878, 1.0
      %v912 = vadd.f32 %v880, 1.0
      %v913 = vrcp.pop %v881
      %v914 = vrcp.pop %v882
      %v915 = vrcp.pop %v883
      %v916 = vrcp.pop %v884
      %v917 = vrcp.pop %v885
      %v918 = vrcp.pop %v886
      %v919 = vrcp.pop %v887
      %v920 = vrcp.pop %v888
      %v921 = vrcp.pop %v889
      %v922 = vrcp.pop %v890
      %v923 = vrcp.pop %v891
      %v924 = vrcp.pop %v892
      %v925 = vrcp.pop %v893
      %v926 = vrcp.pop %v894
      %v927 = vrcp.pop %v895
      %v928 = vrcp.pop %v896
      %v929 = vrcp.pop %v897
      %v930 = vrcp.pop %v898
      %v931 = vrcp.pop %v899
      %v932 = vrcp.pop %v900
      %v933 = vrcp.pop %v901
      %v934 = vrcp.pop %v902
      %v935 = vrcp.pop %v903
      %v936 = vrcp.pop %v904
      %v937 = vrcp.pop %v905
      %v938 = vrcp.pop %v906
      %v939 = vrcp.pop %v907
      %v940 = vrcp.pop %v908
      %v941 = vrcp.pop %v909
      %v942 = vrcp.pop %v910
      %v943 = vrcp.pop %v911
      %v944 = vrcp.pop %v912
      %v945 = vmul.f32 %v753, %v913
      %v946 = vmul.f32 %v754, %v914
      %v947 = vmul.f32 %v755, %v915
      %v948 = vmul.f32 %v756, %v916
      %v949 = vmul.f32 %v757, %v917
      %v950 = vmul.f32 %v758, %v918
      %v951 = vmul.f32 %v759, %v919
      %v952 = vmul.f32 %v760, %v920
      %v953 = vmul.f32 %v761, %v921
      %v954 = vmul.f32 %v762, %v922
      %v955 = vmul.f32 %v763, %v923
      %v956 = vmul.f32 %v764, %v924
      %v957 = vmul.f32 %v765, %v925
      %v958 = vmul.f32 %v766, %v926
      %v959 = vmul.f32 %v767, %v927
      %v960 = vmul.f32 %v768, %v928
      %v961 = vmul.f32 %v769, %v929
      %v962 = vmul.f32 %v770, %v930
      %v963 = vmul.f32 %v771, %v931
      %v964 = vmul.f32 %v772, %v932
      %v965 = vmul.f32 %v773, %v933
      %v966 = vmul.f32 %v774, %v934
      %v967 = vmul.f32 %v775, %v935
      %v968 = vmul.f32 %v776, %v936
      %v969 = vmul.f32 %v777, %v937
      %v970 = vmul.f32 %v778, %v938
      %v971 = vmul.f32 %v779, %v939
      %v972 = vmul.f32 %v780, %v940
      %v973 = vmul.f32 %v781, %v941
      %v974 = vmul.f32 %v782, %v942
      %v975 = vmul.f32 %v783, %v943
      %v976 = vmul.f32 %v784, %v944
      %v977 = vld [vmem:[%s6] sm:$0x1]
      %vm1011 = vcmask 1040384
      %v1012 = vrot.slane 0.0, 7
      %v1013 = vsel %vm1011, %v1012, %v1012
      %v1014 = vrot.slane %v945, 7
      %v1015 = vsel %vm1011, %v1012, %v1014
      %v1016 = vrot.slane %v946, 7
      %v1017 = vsel %vm1011, %v1014, %v1016
      %v1018 = vrot.slane %v947, 7
      %v1019 = vsel %vm1011, %v1016, %v1018
      %v1020 = vrot.slane %v948, 7
      %v1021 = vsel %vm1011, %v1018, %v1020
      %v1022 = vrot.slane %v949, 7
      %v1023 = vsel %vm1011, %v1020, %v1022
      %v1024 = vrot.slane %v950, 7
      %v1025 = vsel %vm1011, %v1022, %v1024
      %v1026 = vrot.slane %v951, 7
      %v1027 = vsel %vm1011, %v1024, %v1026
      %v1028 = vrot.slane %v952, 7
      %v1029 = vsel %vm1011, %v1026, %v1028
      %v1030 = vrot.slane %v953, 7
      %v1031 = vsel %vm1011, %v1028, %v1030
      %v1032 = vrot.slane %v954, 7
      %v1033 = vsel %vm1011, %v1030, %v1032
      %v1034 = vrot.slane %v955, 7
      %v1035 = vsel %vm1011, %v1032, %v1034
      %v1036 = vrot.slane %v956, 7
      %v1037 = vsel %vm1011, %v1034, %v1036
      %v1038 = vrot.slane %v957, 7
      %v1039 = vsel %vm1011, %v1036, %v1038
      %v1040 = vrot.slane %v958, 7
      %v1041 = vsel %vm1011, %v1038, %v1040
      %v1042 = vrot.slane %v959, 7
      %v1043 = vsel %vm1011, %v1040, %v1042
      %v1044 = vrot.slane %v960, 7
      %v1045 = vsel %vm1011, %v1042, %v1044
      %v1046 = vrot.slane %v961, 7
      %v1047 = vsel %vm1011, %v1044, %v1046
      %v1048 = vrot.slane %v962, 7
      %v1049 = vsel %vm1011, %v1046, %v1048
      %v1050 = vrot.slane %v963, 7
      %v1051 = vsel %vm1011, %v1048, %v1050
      %v1052 = vrot.slane %v964, 7
      %v1053 = vsel %vm1011, %v1050, %v1052
      %v1054 = vrot.slane %v965, 7
      %v1055 = vsel %vm1011, %v1052, %v1054
      %v1056 = vrot.slane %v966, 7
      %v1057 = vsel %vm1011, %v1054, %v1056
      %v1058 = vrot.slane %v967, 7
      %v1059 = vsel %vm1011, %v1056, %v1058
      %v1060 = vrot.slane %v968, 7
      %v1061 = vsel %vm1011, %v1058, %v1060
      %v1062 = vrot.slane %v969, 7
      %v1063 = vsel %vm1011, %v1060, %v1062
      %v1064 = vrot.slane %v970, 7
      %v1065 = vsel %vm1011, %v1062, %v1064
      %v1066 = vrot.slane %v971, 7
      %v1067 = vsel %vm1011, %v1064, %v1066
      %v1068 = vrot.slane %v972, 7
      %v1069 = vsel %vm1011, %v1066, %v1068
      %v1070 = vrot.slane %v973, 7
      %v1071 = vsel %vm1011, %v1068, %v1070
      %v1072 = vrot.slane %v974, 7
      %v1073 = vsel %vm1011, %v1070, %v1072
      %v1074 = vrot.slane %v975, 7
      %v1075 = vsel %vm1011, %v1072, %v1074
      %v1076 = vrot.slane %v976, 7
      %v1077 = vsel %vm1011, %v1074, %v1076
      %v1078 = vsel %vm1011, %v1076, %v1012
      %v1114 = vsel %vm1011, 0.0, %v1012
      %v1115 = vsel %vm452, %v1114, 0.0
      %v1116 = vsel %vm453, %v1013, 0.0
      %v1117 = vsel %vm452, %v1015, 0.0
      %v1118 = vsel %vm453, %v1017, 0.0
      %v1119 = vsel %vm452, %v1019, 0.0
      %v1120 = vsel %vm453, %v1021, 0.0
      %v1121 = vsel %vm452, %v1023, 0.0
      %v1122 = vsel %vm453, %v1025, 0.0
      %v1123 = vsel %vm452, %v1027, 0.0
      %v1124 = vsel %vm453, %v1029, 0.0
      %v1125 = vsel %vm452, %v1031, 0.0
      %v1126 = vsel %vm453, %v1033, 0.0
      %v1127 = vsel %vm452, %v1035, 0.0
      %v1128 = vsel %vm453, %v1037, 0.0
      %v1129 = vsel %vm452, %v1039, 0.0
      %v1130 = vsel %vm453, %v1041, 0.0
      %v1131 = vsel %vm452, %v1043, 0.0
      %v1132 = vsel %vm453, %v1045, 0.0
      %v1133 = vsel %vm452, %v1047, 0.0
      %v1134 = vsel %vm453, %v1049, 0.0
      %v1135 = vsel %vm452, %v1051, 0.0
      %v1136 = vsel %vm453, %v1053, 0.0
      %v1137 = vsel %vm452, %v1055, 0.0
      %v1138 = vsel %vm453, %v1057, 0.0
      %v1139 = vsel %vm452, %v1059, 0.0
      %v1140 = vsel %vm453, %v1061, 0.0
      %v1141 = vsel %vm452, %v1063, 0.0
      %v1142 = vsel %vm453, %v1065, 0.0
      %v1143 = vsel %vm452, %v1067, 0.0
      %v1144 = vsel %vm453, %v1069, 0.0
      %v1145 = vsel %vm452, %v1071, 0.0
      %v1146 = vsel %vm453, %v1073, 0.0
      %v1147 = vsel %vm452, %v1075, 0.0
      %v1148 = vsel %vm453, %v1077, 0.0
      %v1149 = vsel %vm452, %v1078, 0.0
      %vm1150 = vcmask 1046528
      %v1151 = vrot.slane 0.0, 1
      %v1152 = vsel %vm1150, %v1151, %v1151
      %v1153 = vrot.slane %v945, 1
      %v1154 = vsel %vm1150, %v1151, %v1153
      %v1155 = vrot.slane %v946, 1
      %v1156 = vsel %vm1150, %v1153, %v1155
      %v1157 = vrot.slane %v947, 1
      %v1158 = vsel %vm1150, %v1155, %v1157
      %v1159 = vrot.slane %v948, 1
      %v1160 = vsel %vm1150, %v1157, %v1159
      %v1161 = vrot.slane %v949, 1
      %v1162 = vsel %vm1150, %v1159, %v1161
      %v1163 = vrot.slane %v950, 1
      %v1164 = vsel %vm1150, %v1161, %v1163
      %v1165 = vrot.slane %v951, 1
      %v1166 = vsel %vm1150, %v1163, %v1165
      %v1167 = vrot.slane %v952, 1
      %v1168 = vsel %vm1150, %v1165, %v1167
      %v1169 = vrot.slane %v953, 1
      %v1170 = vsel %vm1150, %v1167, %v1169
      %v1171 = vrot.slane %v954, 1
      %v1172 = vsel %vm1150, %v1169, %v1171
      %v1173 = vrot.slane %v955, 1
      %v1174 = vsel %vm1150, %v1171, %v1173
      %v1175 = vrot.slane %v956, 1
      %v1176 = vsel %vm1150, %v1173, %v1175
      %v1177 = vrot.slane %v957, 1
      %v1178 = vsel %vm1150, %v1175, %v1177
      %v1179 = vrot.slane %v958, 1
      %v1180 = vsel %vm1150, %v1177, %v1179
      %v1181 = vrot.slane %v959, 1
      %v1182 = vsel %vm1150, %v1179, %v1181
      %v1183 = vrot.slane %v960, 1
      %v1184 = vsel %vm1150, %v1181, %v1183
      %v1185 = vrot.slane %v961, 1
      %v1186 = vsel %vm1150, %v1183, %v1185
      %v1187 = vrot.slane %v962, 1
      %v1188 = vsel %vm1150, %v1185, %v1187
      %v1189 = vrot.slane %v963, 1
      %v1190 = vsel %vm1150, %v1187, %v1189
      %v1191 = vrot.slane %v964, 1
      %v1192 = vsel %vm1150, %v1189, %v1191
      %v1193 = vrot.slane %v965, 1
      %v1194 = vsel %vm1150, %v1191, %v1193
      %v1195 = vrot.slane %v966, 1
      %v1196 = vsel %vm1150, %v1193, %v1195
      %v1197 = vrot.slane %v967, 1
      %v1198 = vsel %vm1150, %v1195, %v1197
      %v1199 = vrot.slane %v968, 1
      %v1200 = vsel %vm1150, %v1197, %v1199
      %v1201 = vrot.slane %v969, 1
      %v1202 = vsel %vm1150, %v1199, %v1201
      %v1203 = vrot.slane %v970, 1
      %v1204 = vsel %vm1150, %v1201, %v1203
      %v1205 = vrot.slane %v971, 1
      %v1206 = vsel %vm1150, %v1203, %v1205
      %v1207 = vrot.slane %v972, 1
      %v1208 = vsel %vm1150, %v1205, %v1207
      %v1209 = vrot.slane %v973, 1
      %v1210 = vsel %vm1150, %v1207, %v1209
      %v1211 = vrot.slane %v974, 1
      %v1212 = vsel %vm1150, %v1209, %v1211
      %v1213 = vrot.slane %v975, 1
      %v1214 = vsel %vm1150, %v1211, %v1213
      %v1215 = vrot.slane %v976, 1
      %v1216 = vsel %vm1150, %v1213, %v1215
      %v1217 = vsel %vm1150, %v1215, %v1151
      %v1253 = vsel %vm1150, %v1151, 0.0
      %v1254 = vsel %vm454, %v1152, 0.0
      %v1255 = vsel %vm455, %v1154, 0.0
      %v1256 = vsel %vm454, %v1156, 0.0
      %v1257 = vsel %vm455, %v1158, 0.0
      %v1258 = vsel %vm454, %v1160, 0.0
      %v1259 = vsel %vm455, %v1162, 0.0
      %v1260 = vsel %vm454, %v1164, 0.0
      %v1261 = vsel %vm455, %v1166, 0.0
      %v1262 = vsel %vm454, %v1168, 0.0
      %v1263 = vsel %vm455, %v1170, 0.0
      %v1264 = vsel %vm454, %v1172, 0.0
      %v1265 = vsel %vm455, %v1174, 0.0
      %v1266 = vsel %vm454, %v1176, 0.0
      %v1267 = vsel %vm455, %v1178, 0.0
      %v1268 = vsel %vm454, %v1180, 0.0
      %v1269 = vsel %vm455, %v1182, 0.0
      %v1270 = vsel %vm454, %v1184, 0.0
      %v1271 = vsel %vm455, %v1186, 0.0
      %v1272 = vsel %vm454, %v1188, 0.0
      %v1273 = vsel %vm455, %v1190, 0.0
      %v1274 = vsel %vm454, %v1192, 0.0
      %v1275 = vsel %vm455, %v1194, 0.0
      %v1276 = vsel %vm454, %v1196, 0.0
      %v1277 = vsel %vm455, %v1198, 0.0
      %v1278 = vsel %vm454, %v1200, 0.0
      %v1279 = vsel %vm455, %v1202, 0.0
      %v1280 = vsel %vm454, %v1204, 0.0
      %v1281 = vsel %vm455, %v1206, 0.0
      %v1282 = vsel %vm454, %v1208, 0.0
      %v1283 = vsel %vm455, %v1210, 0.0
      %v1284 = vsel %vm454, %v1212, 0.0
      %v1285 = vsel %vm455, %v1214, 0.0
      %v1286 = vsel %vm454, %v1216, 0.0
      %v1287 = vsel %vm455, %v1217, 0.0
      %v1288 = vsel %vm455, %v1253, 0.0
      %v1289 = vld [vmem:[%s5] sm:$0xff]
      %v1290 = vld [vmem:[%s5 + $0x8] sm:$0xff]
      %v1291 = vld [vmem:[%s5 + $0x10] sm:$0xff]
      %v1292 = vld [vmem:[%s5 + $0x18] sm:$0xff]
      %v1293 = vld [vmem:[%s5 + $0x20] sm:$0xff]
      %v1294 = vld [vmem:[%s5 + $0x28] sm:$0xff]
      %v1295 = vld [vmem:[%s5 + $0x30] sm:$0xff]
      %v1296 = vld [vmem:[%s5 + $0x38] sm:$0xff]
      %v1297 = vld [vmem:[%s5 + $0x40] sm:$0xff]
      %v1298 = vld [vmem:[%s5 + $0x48] sm:$0xff]
      %v1299 = vld [vmem:[%s5 + $0x50] sm:$0xff]
      %v1300 = vld [vmem:[%s5 + $0x58] sm:$0xff]
      %v1301 = vld [vmem:[%s5 + $0x60] sm:$0xff]
      %v1302 = vld [vmem:[%s5 + $0x68] sm:$0xff]
      %v1303 = vld [vmem:[%s5 + $0x70] sm:$0xff]
      %v1304 = vld [vmem:[%s5 + $0x78] sm:$0xff]
      %v1305 = vld [vmem:[%s5 + $0x80] sm:$0xff]
      %v1306 = vld [vmem:[%s5 + $0x88] sm:$0xff]
      %v1307 = vld [vmem:[%s5 + $0x90] sm:$0xff]
      %v1308 = vld [vmem:[%s5 + $0x98] sm:$0xff]
      %v1309 = vld [vmem:[%s5 + $0xa0] sm:$0xff]
      %v1310 = vld [vmem:[%s5 + $0xa8] sm:$0xff]
      %v1311 = vld [vmem:[%s5 + $0xb0] sm:$0xff]
      %v1312 = vld [vmem:[%s5 + $0xb8] sm:$0xff]
      %v1313 = vld [vmem:[%s5 + $0xc0] sm:$0xff]
      %v1314 = vld [vmem:[%s5 + $0xc8] sm:$0xff]
      %v1315 = vld [vmem:[%s5 + $0xd0] sm:$0xff]
      %v1316 = vld [vmem:[%s5 + $0xd8] sm:$0xff]
      %v1317 = vld [vmem:[%s5 + $0xe0] sm:$0xff]
      %v1318 = vld [vmem:[%s5 + $0xe8] sm:$0xff]
      %v1319 = vld [vmem:[%s5 + $0xf0] sm:$0xff]
      %v1320 = vld [vmem:[%s5 + $0xf8] sm:$0xff]
      %v1321 = vld [vmem:[%s5 + $0x100] sm:$0xff]
      %v1322 = vld [vmem:[%s5 + $0x108] sm:$0xff]
      %v1323 = vld [vmem:[%s5 + $0x110] sm:$0xff]
      %v1324 = vld [vmem:[%s5 + $0x118] sm:$0xff]
      %v1325 = vld [vmem:[%s5 + $0x120] sm:$0xff]
      %v1326 = vld [vmem:[%s5 + $0x128] sm:$0xff]
      %v1327 = vld [vmem:[%s5 + $0x130] sm:$0xff]
      %v1328 = vld [vmem:[%s5 + $0x138] sm:$0xff]
      %v1329 = vld [vmem:[%s5 + $0x140] sm:$0xff]
      %v1330 = vld [vmem:[%s5 + $0x148] sm:$0xff]
      %v1331 = vld [vmem:[%s5 + $0x150] sm:$0xff]
      %v1332 = vld [vmem:[%s5 + $0x158] sm:$0xff]
      %v1333 = vld [vmem:[%s5 + $0x160] sm:$0xff]
      %v1334 = vld [vmem:[%s5 + $0x168] sm:$0xff]
      %v1335 = vld [vmem:[%s5 + $0x170] sm:$0xff]
      %v1336 = vld [vmem:[%s5 + $0x178] sm:$0xff]
      %v1337 = vld [vmem:[%s5 + $0x180] sm:$0xff]
      %v1338 = vld [vmem:[%s5 + $0x188] sm:$0xff]
      %v1339 = vld [vmem:[%s5 + $0x190] sm:$0xff]
      %v1340 = vld [vmem:[%s5 + $0x198] sm:$0xff]
      %v1341 = vld [vmem:[%s5 + $0x1a0] sm:$0xff]
      %v1342 = vld [vmem:[%s5 + $0x1a8] sm:$0xff]
      %v1343 = vld [vmem:[%s5 + $0x1b0] sm:$0xff]
      %v1344 = vld [vmem:[%s5 + $0x1b8] sm:$0xff]
      %v1345 = vld [vmem:[%s5 + $0x1c0] sm:$0xff]
      %v1346 = vld [vmem:[%s5 + $0x1c8] sm:$0xff]
      %v1347 = vld [vmem:[%s5 + $0x1d0] sm:$0xff]
      %v1348 = vld [vmem:[%s5 + $0x1d8] sm:$0xff]
      %v1349 = vld [vmem:[%s5 + $0x1e0] sm:$0xff]
      %v1350 = vld [vmem:[%s5 + $0x1e8] sm:$0xff]
      %v1351 = vld [vmem:[%s5 + $0x1f0] sm:$0xff]
      %v1352 = vld [vmem:[%s5 + $0x1f8] sm:$0xff]
      %v1353 = vld [vmem:[%s5 + $0x200] sm:$0xff]
      %v1354 = vld [vmem:[%s5 + $0x208] sm:$0xff]
      %v1355 = vld [vmem:[%s5 + $0x210] sm:$0xff]
      %v1356 = vld [vmem:[%s5 + $0x218] sm:$0xff]
      %v1357 = vld [vmem:[%s5 + $0x220] sm:$0xff]
      %v1358 = vld [vmem:[%s5 + $0x228] sm:$0xff]
      %v1359 = vld [vmem:[%s5 + $0x230] sm:$0xff]
      %v1360 = vld [vmem:[%s5 + $0x238] sm:$0xff]
      %v1361 = vld [vmem:[%s5 + $0x240] sm:$0xff]
      %v1362 = vld [vmem:[%s5 + $0x248] sm:$0xff]
      %v1363 = vld [vmem:[%s5 + $0x250] sm:$0xff]
      %v1364 = vld [vmem:[%s5 + $0x258] sm:$0xff]
      %v1365 = vld [vmem:[%s5 + $0x260] sm:$0xff]
      %v1366 = vld [vmem:[%s5 + $0x268] sm:$0xff]
      %v1367 = vld [vmem:[%s5 + $0x270] sm:$0xff]
      %v1368 = vld [vmem:[%s5 + $0x278] sm:$0xff]
      %v1369 = vld [vmem:[%s5 + $0x280] sm:$0xff]
      %v1370 = vld [vmem:[%s5 + $0x288] sm:$0xff]
      %v1371 = vld [vmem:[%s5 + $0x290] sm:$0xff]
      %v1372 = vld [vmem:[%s5 + $0x298] sm:$0xff]
      %v1373 = vld [vmem:[%s5 + $0x2a0] sm:$0xff]
      %v1374 = vld [vmem:[%s5 + $0x2a8] sm:$0xff]
      %v1375 = vld [vmem:[%s5 + $0x2b0] sm:$0xff]
      %v1376 = vld [vmem:[%s5 + $0x2b8] sm:$0xff]
      %v1377 = vld [vmem:[%s5 + $0x2c0] sm:$0xff]
      %v1378 = vld [vmem:[%s5 + $0x2c8] sm:$0xff]
      %v1379 = vld [vmem:[%s5 + $0x2d0] sm:$0xff]
      %v1380 = vld [vmem:[%s5 + $0x2d8] sm:$0xff]
      %v1381 = vld [vmem:[%s5 + $0x2e0] sm:$0xff]
      %v1382 = vld [vmem:[%s5 + $0x2e8] sm:$0xff]
      %v1383 = vld [vmem:[%s5 + $0x2f0] sm:$0xff]
      %v1384 = vld [vmem:[%s5 + $0x2f8] sm:$0xff]
      %v1385 = vld [vmem:[%s5 + $0x300] sm:$0xff]
      %v1386 = vld [vmem:[%s5 + $0x308] sm:$0xff]
      %v1387 = vld [vmem:[%s5 + $0x310] sm:$0xff]
      %v1388 = vld [vmem:[%s5 + $0x318] sm:$0xff]
      %v1389 = vld [vmem:[%s5 + $0x320] sm:$0xff]
      %v1390 = vld [vmem:[%s5 + $0x328] sm:$0xff]
      %v1391 = vld [vmem:[%s5 + $0x330] sm:$0xff]
      %v1392 = vld [vmem:[%s5 + $0x338] sm:$0xff]
      %v1393 = vld [vmem:[%s5 + $0x340] sm:$0xff]
      %v1394 = vld [vmem:[%s5 + $0x348] sm:$0xff]
      %v1395 = vld [vmem:[%s5 + $0x350] sm:$0xff]
      %v1396 = vld [vmem:[%s5 + $0x358] sm:$0xff]
      %v1397 = vld [vmem:[%s5 + $0x360] sm:$0xff]
      %v1398 = vld [vmem:[%s5 + $0x368] sm:$0xff]
      %v1399 = vld [vmem:[%s5 + $0x370] sm:$0xff]
      %v1400 = vld [vmem:[%s5 + $0x378] sm:$0xff]
      %v1401 = vld [vmem:[%s5 + $0x380] sm:$0xff]
      %v1402 = vld [vmem:[%s5 + $0x388] sm:$0xff]
      %v1403 = vld [vmem:[%s5 + $0x390] sm:$0xff]
      %v1404 = vld [vmem:[%s5 + $0x398] sm:$0xff]
      %v1405 = vld [vmem:[%s5 + $0x3a0] sm:$0xff]
      %v1406 = vld [vmem:[%s5 + $0x3a8] sm:$0xff]
      %v1407 = vld [vmem:[%s5 + $0x3b0] sm:$0xff]
      %v1408 = vld [vmem:[%s5 + $0x3b8] sm:$0xff]
      %v1409 = vld [vmem:[%s5 + $0x3c0] sm:$0xff]
      %v1410 = vld [vmem:[%s5 + $0x3c8] sm:$0xff]
      %v1411 = vld [vmem:[%s5 + $0x3d0] sm:$0xff]
      %v1412 = vld [vmem:[%s5 + $0x3d8] sm:$0xff]
      %v1413 = vld [vmem:[%s5 + $0x3e0] sm:$0xff]
      %v1414 = vld [vmem:[%s5 + $0x3e8] sm:$0xff]
      %v1415 = vld [vmem:[%s5 + $0x3f0] sm:$0xff]
      %v1416 = vld [vmem:[%s5 + $0x3f8] sm:$0xff]
      %v1417 = vld [vmem:[%s5 + $0x400] sm:$0xff]
      %v1418 = vld [vmem:[%s5 + $0x408] sm:$0xff]
      %v1419 = vld [vmem:[%s5 + $0x410] sm:$0xff]
      %v1420 = vld [vmem:[%s5 + $0x418] sm:$0xff]
      %v1421 = vld [vmem:[%s5 + $0x420] sm:$0xff]
      %v1422 = vld [vmem:[%s5 + $0x428] sm:$0xff]
      %v1423 = vld [vmem:[%s5 + $0x430] sm:$0xff]
      %v1424 = vld [vmem:[%s5 + $0x438] sm:$0xff]
      %v1425 = vld [vmem:[%s5 + $0x440] sm:$0xff]
      %v1426 = vld [vmem:[%s5 + $0x448] sm:$0xff]
      %v1427 = vld [vmem:[%s5 + $0x450] sm:$0xff]
      %v1428 = vld [vmem:[%s5 + $0x458] sm:$0xff]
      %v1429 = vld [vmem:[%s5 + $0x460] sm:$0xff]
      %v1430 = vld [vmem:[%s5 + $0x468] sm:$0xff]
      %v1431 = vld [vmem:[%s5 + $0x470] sm:$0xff]
      %v1432 = vld [vmem:[%s5 + $0x478] sm:$0xff]
      %v1434 = vlaneseq
      %v1435 = vshrl.u32 %v1434, 7
      %v1436 = vsub.s32 0, %v1435
      %v1437 = vrot.slane %v977, %v1436
      %1439 = vmatprep.subr.mxu0 0.0
      %1440 = vmatpush1.msra.mxu0 %v1289
      %1441 = vmatprep.subr.mxu0 0.0
      %1442 = vmatpush1.msra.mxu0 %v1290
      %1443 = vmatprep.subr.mxu0 0.0
      %1444 = vmatpush1.msra.mxu0 %v1291
      %1445 = vmatprep.subr.mxu0 0.0
      %1446 = vmatpush1.msra.mxu0 %v1292
      %1447 = vmatprep.subr.mxu0 0.0
      %1448 = vmatpush1.msra.mxu0 %v1293
      %1449 = vmatprep.subr.mxu0 0.0
      %1450 = vmatpush1.msra.mxu0 %v1294
      %1451 = vmatprep.subr.mxu0 0.0
      %1452 = vmatpush1.msra.mxu0 %v1295
      %1453 = vmatprep.subr.mxu0 0.0
      %1454 = vmatpush1.msra.mxu0 %v1296
      %1455 = vmatprep.subr.mxu0 0.0
      %1456 = vmatpush1.msra.mxu0 %v1297
      %1457 = vmatprep.subr.mxu0 0.0
      %1458 = vmatpush1.msra.mxu0 %v1298
      %1459 = vmatprep.subr.mxu0 0.0
      %1460 = vmatpush1.msra.mxu0 %v1299
      %1461 = vmatprep.subr.mxu0 0.0
      %1462 = vmatpush1.msra.mxu0 %v1300
      %1463 = vmatprep.subr.mxu0 0.0
      %1464 = vmatpush1.msra.mxu0 %v1301
      %1465 = vmatprep.subr.mxu0 0.0
      %1466 = vmatpush1.msra.mxu0 %v1302
      %1467 = vmatprep.subr.mxu0 0.0
      %1468 = vmatpush1.msra.mxu0 %v1303
      %1469 = vmatprep.subr.mxu0 0.0
      %1470 = vmatpush1.msra.mxu0 %v1304
      %1471 = vmatprep.subr.mxu0 0.0
      %1472 = vmatpush1.msra.mxu0 %v1305
      %1473 = vmatprep.subr.mxu0 0.0
      %1474 = vmatpush1.msra.mxu0 %v1306
      %1475 = vmatprep.subr.mxu0 0.0
      %1476 = vmatpush1.msra.mxu0 %v1307
      %1477 = vmatprep.subr.mxu0 0.0
      %1478 = vmatpush1.msra.mxu0 %v1308
      %1479 = vmatprep.subr.mxu0 0.0
      %1480 = vmatpush1.msra.mxu0 %v1309
      %1481 = vmatprep.subr.mxu0 0.0
      %1482 = vmatpush1.msra.mxu0 %v1310
      %1483 = vmatprep.subr.mxu0 0.0
      %1484 = vmatpush1.msra.mxu0 %v1311
      %1485 = vmatprep.subr.mxu0 0.0
      %1486 = vmatpush1.msra.mxu0 %v1312
      %1487 = vmatprep.subr.mxu0 0.0
      %1488 = vmatpush1.msra.mxu0 %v1313
      %1489 = vmatprep.subr.mxu0 0.0
      %1490 = vmatpush1.msra.mxu0 %v1314
      %1491 = vmatprep.subr.mxu0 0.0
      %1492 = vmatpush1.msra.mxu0 %v1315
      %1493 = vmatprep.subr.mxu0 0.0
      %1494 = vmatpush1.msra.mxu0 %v1316
      %1495 = vmatprep.subr.mxu0 0.0
      %1496 = vmatpush1.msra.mxu0 %v1317
      %1497 = vmatprep.subr.mxu0 0.0
      %1498 = vmatpush1.msra.mxu0 %v1318
      %1499 = vmatprep.subr.mxu0 0.0
      %1500 = vmatpush1.msra.mxu0 %v1319
      %1501 = vmatprep.subr.mxu0 0.0
      %1502 = vmatpush1.msra.mxu0 %v1320
      %1503 = vmatprep.mubr.f32.mxu0 0.0
      %1504 = vmatmul.mubr.f32.gmra.mrb[0].mxu0 %v1115
      %v1505 = vpop.f32.mrb[0].mxu0
      %v1506 = vadd.f32 %v1437, %v1505
      %v1507 = vpop.f32.mrb[0].mxu0
      %1508 = vmatprep.mubr.f32.mxu0 0.0
      %1509 = vmatmul.mubr.f32.gmra.mrb[0].mxu0 %v1116
      %v1510 = vpop.f32.mrb[0].mxu0
      %v1511 = vadd.f32 %v1437, %v1510
      %v1512 = vpop.f32.mrb[0].mxu0
      %1513 = vmatprep.mubr.f32.mxu0 %v945
      %1514 = vmatmul.mubr.f32.gmra.mrb[0].mxu0 %v1117
      %v1515 = vpop.f32.mrb[0].mxu0
      %v1516 = vadd.f32 %v1437, %v1515
      %v1517 = vpop.f32.mrb[0].mxu0
      %1518 = vmatprep.mubr.f32.mxu0 %v946
      %1519 = vmatmul.mubr.f32.gmra.mrb[0].mxu0 %v1118
      %v1520 = vpop.f32.mrb[0].mxu0
      %v1521 = vadd.f32 %v1437, %v1520
      %v1522 = vpop.f32.mrb[0].mxu0
      %1523 = vmatprep.mubr.f32.mxu0 %v947
      %1524 = vmatmul.mubr.f32.gmra.mrb[0].mxu0 %v1119
      %v1525 = vpop.f32.mrb[0].mxu0
      %v1526 = vadd.f32 %v1437, %v1525
      %v1527 = vpop.f32.mrb[0].mxu0
      %1528 = vmatprep.mubr.f32.mxu0 %v948
      %1529 = vmatmul.mubr.f32.gmra.mrb[0].mxu0 %v1120
      %v1530 = vpop.f32.mrb[0].mxu0
      %v1531 = vadd.f32 %v1437, %v1530
      %v1532 = vpop.f32.mrb[0].mxu0
      %1533 = vmatprep.mubr.f32.mxu0 %v949
      %1534 = vmatmul.mubr.f32.gmra.mrb[0].mxu0 %v1121
      %v1535 = vpop.f32.mrb[0].mxu0
      %v1536 = vadd.f32 %v1437, %v1535
      %v1537 = vpop.f32.mrb[0].mxu0
      %1538 = vmatprep.mubr.f32.mxu0 %v950
      %1539 = vmatmul.mubr.f32.gmra.mrb[0].mxu0 %v1122
      %v1540 = vpop.f32.mrb[0].mxu0
      %v1541 = vadd.f32 %v1437, %v1540
      %v1542 = vpop.f32.mrb[0].mxu0
      %1543 = vmatprep.mubr.f32.mxu0 %v951
      %1544 = vmatmul.mubr.f32.gmra.mrb[0].mxu0 %v1123
      %v1545 = vpop.f32.mrb[0].mxu0
      %v1546 = vadd.f32 %v1437, %v1545
      %v1547 = vpop.f32.mrb[0].mxu0
      %1548 = vmatprep.mubr.f32.mxu0 %v952
      %1549 = vmatmul.mubr.f32.gmra.mrb[0].mxu0 %v1124
      %v1550 = vpop.f32.mrb[0].mxu0
      %v1551 = vadd.f32 %v1437, %v1550
      %v1552 = vpop.f32.mrb[0].mxu0
      %1553 = vmatprep.mubr.f32.mxu0 %v953
      %1554 = vmatmul.mubr.f32.gmra.mrb[0].mxu0 %v1125
      %v1555 = vpop.f32.mrb[0].mxu0
      %v1556 = vadd.f32 %v1437, %v1555
      %v1557 = vpop.f32.mrb[0].mxu0
      %1558 = vmatprep.mubr.f32.mxu0 %v954
      %1559 = vmatmul.mubr.f32.gmra.mrb[0].mxu0 %v1126
      %v1560 = vpop.f32.mrb[0].mxu0
      %v1561 = vadd.f32 %v1437, %v1560
      %v1562 = vpop.f32.mrb[0].mxu0
      %1563 = vmatprep.mubr.f32.mxu0 %v955
      %1564 = vmatmul.mubr.f32.gmra.mrb[0].mxu0 %v1127
      %v1565 = vpop.f32.mrb[0].mxu0
      %v1566 = vadd.f32 %v1437, %v1565
      %v1567 = vpop.f32.mrb[0].mxu0
      %1568 = vmatprep.mubr.f32.mxu0 %v956
      %1569 = vmatmul.mubr.f32.gmra.mrb[0].mxu0 %v1128
      %v1570 = vpop.f32.mrb[0].mxu0
      %v1571 = vadd.f32 %v1437, %v1570
      %v1572 = vpop.f32.mrb[0].mxu0
      %1573 = vmatprep.mubr.f32.mxu0 %v957
      %1574 = vmatmul.mubr.f32.gmra.mrb[0].mxu0 %v1129
      %v1575 = vpop.f32.mrb[0].mxu0
      %v1576 = vadd.f32 %v1437, %v1575
      %v1577 = vpop.f32.mrb[0].mxu0
      %1578 = vmatprep.mubr.f32.mxu0 %v958
      %1579 = vmatmul.mubr.f32.gmra.mrb[0].mxu0 %v1130
      %v1580 = vpop.f32.mrb[0].mxu0
      %v1581 = vadd.f32 %v1437, %v1580
      %v1582 = vpop.f32.mrb[0].mxu0
      %1583 = vmatprep.mubr.f32.mxu0 %v959
      %1584 = vmatmul.mubr.f32.gmra.mrb[0].mxu0 %v1131
      %v1585 = vpop.f32.mrb[0].mxu0
      %v1586 = vadd.f32 %v1437, %v1585
      %v1587 = vpop.f32.mrb[0].mxu0
      %1588 = vmatprep.mubr.f32.mxu0 %v960
      %1589 = vmatmul.mubr.f32.gmra.mrb[0].mxu0 %v1132
      %v1590 = vpop.f32.mrb[0].mxu0
      %v1591 = vadd.f32 %v1437, %v1590
      %v1592 = vpop.f32.mrb[0].mxu0
      %1593 = vmatprep.mubr.f32.mxu0 %v961
      %1594 = vmatmul.mubr.f32.gmra.mrb[0].mxu0 %v1133
      %v1595 = vpop.f32.mrb[0].mxu0
      %v1596 = vadd.f32 %v1437, %v1595
      %v1597 = vpop.f32.mrb[0].mxu0
      %1598 = vmatprep.mubr.f32.mxu0 %v962
      %1599 = vmatmul.mubr.f32.gmra.mrb[0].mxu0 %v1134
      %v1600 = vpop.f32.mrb[0].mxu0
      %v1601 = vadd.f32 %v1437, %v1600
      %v1602 = vpop.f32.mrb[0].mxu0
      %1603 = vmatprep.mubr.f32.mxu0 %v963
      %1604 = vmatmul.mubr.f32.gmra.mrb[0].mxu0 %v1135
      %v1605 = vpop.f32.mrb[0].mxu0
      %v1606 = vadd.f32 %v1437, %v1605
      %v1607 = vpop.f32.mrb[0].mxu0
      %1608 = vmatprep.mubr.f32.mxu0 %v964
      %1609 = vmatmul.mubr.f32.gmra.mrb[0].mxu0 %v1136
      %v1610 = vpop.f32.mrb[0].mxu0
      %v1611 = vadd.f32 %v1437, %v1610
      %v1612 = vpop.f32.mrb[0].mxu0
      %1613 = vmatprep.mubr.f32.mxu0 %v965
      %1614 = vmatmul.mubr.f32.gmra.mrb[0].mxu0 %v1137
      %v1615 = vpop.f32.mrb[0].mxu0
      %v1616 = vadd.f32 %v1437, %v1615
      %v1617 = vpop.f32.mrb[0].mxu0
      %1618 = vmatprep.mubr.f32.mxu0 %v966
      %1619 = vmatmul.mubr.f32.gmra.mrb[0].mxu0 %v1138
      %v1620 = vpop.f32.mrb[0].mxu0
      %v1621 = vadd.f32 %v1437, %v1620
      %v1622 = vpop.f32.mrb[0].mxu0
      %1623 = vmatprep.mubr.f32.mxu0 %v967
      %1624 = vmatmul.mubr.f32.gmra.mrb[0].mxu0 %v1139
      %v1625 = vpop.f32.mrb[0].mxu0
      %v1626 = vadd.f32 %v1437, %v1625
      %v1627 = vpop.f32.mrb[0].mxu0
      %1628 = vmatprep.mubr.f32.mxu0 %v968
      %1629 = vmatmul.mubr.f32.gmra.mrb[0].mxu0 %v1140
      %v1630 = vpop.f32.mrb[0].mxu0
      %v1631 = vadd.f32 %v1437, %v1630
      %v1632 = vpop.f32.mrb[0].mxu0
      %1633 = vmatprep.mubr.f32.mxu0 %v969
      %1634 = vmatmul.mubr.f32.gmra.mrb[0].mxu0 %v1141
      %v1635 = vpop.f32.mrb[0].mxu0
      %v1636 = vadd.f32 %v1437, %v1635
      %v1637 = vpop.f32.mrb[0].mxu0
      %1638 = vmatprep.mubr.f32.mxu0 %v970
      %1639 = vmatmul.mubr.f32.gmra.mrb[0].mxu0 %v1142
      %v1640 = vpop.f32.mrb[0].mxu0
      %v1641 = vadd.f32 %v1437, %v1640
      %v1642 = vpop.f32.mrb[0].mxu0
      %1643 = vmatprep.mubr.f32.mxu0 %v971
      %1644 = vmatmul.mubr.f32.gmra.mrb[0].mxu0 %v1143
      %v1645 = vpop.f32.mrb[0].mxu0
      %v1646 = vadd.f32 %v1437, %v1645
      %v1647 = vpop.f32.mrb[0].mxu0
      %1648 = vmatprep.mubr.f32.mxu0 %v972
      %1649 = vmatmul.mubr.f32.gmra.mrb[0].mxu0 %v1144
      %v1650 = vpop.f32.mrb[0].mxu0
      %v1651 = vadd.f32 %v1437, %v1650
      %v1652 = vpop.f32.mrb[0].mxu0
      %1653 = vmatprep.mubr.f32.mxu0 %v973
      %1654 = vmatmul.mubr.f32.gmra.mrb[0].mxu0 %v1145
      %v1655 = vpop.f32.mrb[0].mxu0
      %v1656 = vadd.f32 %v1437, %v1655
      %v1657 = vpop.f32.mrb[0].mxu0
      %1658 = vmatprep.mubr.f32.mxu0 %v974
      %1659 = vmatmul.mubr.f32.gmra.mrb[0].mxu0 %v1146
      %v1660 = vpop.f32.mrb[0].mxu0
      %v1661 = vadd.f32 %v1437, %v1660
      %v1662 = vpop.f32.mrb[0].mxu0
      %1663 = vdwg.mxu0
      %1664 = vmatprep.subr.mxu0 0.0
      %1665 = vmatpush1.msra.mxu0 %v1321
      %1666 = vmatprep.subr.mxu0 0.0
      %1667 = vmatpush1.msra.mxu0 %v1322
      %1668 = vmatprep.subr.mxu0 0.0
      %1669 = vmatpush1.msra.mxu0 %v1323
      %1670 = vmatprep.subr.mxu0 0.0
      %1671 = vmatpush1.msra.mxu0 %v1324
      %1672 = vmatprep.subr.mxu0 0.0
      %1673 = vmatpush1.msra.mxu0 %v1325
      %1674 = vmatprep.subr.mxu0 0.0
      %1675 = vmatpush1.msra.mxu0 %v1326
      %1676 = vmatprep.subr.mxu0 0.0
      %1677 = vmatpush1.msra.mxu0 %v1327
      %1678 = vmatprep.subr.mxu0 0.0
      %1679 = vmatpush1.msra.mxu0 %v1328
      %1680 = vmatprep.subr.mxu0 0.0
      %1681 = vmatpush1.msra.mxu0 %v1329
      %1682 = vmatprep.subr.mxu0 0.0
      %1683 = vmatpush1.msra.mxu0 %v1330
      %1684 = vmatprep.subr.mxu0 0.0
      %1685 = vmatpush1.msra.mxu0 %v1331
      %1686 = vmatprep.subr.mxu0 0.0
      %1687 = vmatpush1.msra.mxu0 %v1332
      %1688 = vmatprep.subr.mxu0 0.0
      %1689 = vmatpush1.msra.mxu0 %v1333
      %1690 = vmatprep.subr.mxu0 0.0
      %1691 = vmatpush1.msra.mxu0 %v1334
      %1692 = vmatprep.subr.mxu0 0.0
      %1693 = vmatpush1.msra.mxu0 %v1335
      %1694 = vmatprep.subr.mxu0 0.0
      %1695 = vmatpush1.msra.mxu0 %v1336
      %1696 = vmatprep.subr.mxu0 0.0
      %1697 = vmatpush1.msra.mxu0 %v1337
      %1698 = vmatprep.subr.mxu0 0.0
      %1699 = vmatpush1.msra.mxu0 %v1338
      %1700 = vmatprep.subr.mxu0 0.0
      %1701 = vmatpush1.msra.mxu0 %v1339
      %1702 = vmatprep.subr.mxu0 0.0
      %1703 = vmatpush1.msra.mxu0 %v1340
      %1704 = vmatprep.subr.mxu0 0.0
      %1705 = vmatpush1.msra.mxu0 %v1341
      %1706 = vmatprep.subr.mxu0 0.0
      %1707 = vmatpush1.msra.mxu0 %v1342
      %1708 = vmatprep.subr.mxu0 0.0
      %1709 = vmatpush1.msra.mxu0 %v1343
      %1710 = vmatprep.subr.mxu0 0.0
      %1711 = vmatpush1.msra.mxu0 %v1344
      %1712 = vmatprep.subr.mxu0 0.0
      %1713 = vmatpush1.msra.mxu0 %v1345
      %1714 = vmatprep.subr.mxu0 0.0
      %1715 = vmatpush1.msra.mxu0 %v1346
      %1716 = vmatprep.subr.mxu0 0.0
      %1717 = vmatpush1.msra.mxu0 %v1347
      %1718 = vmatprep.subr.mxu0 0.0
      %1719 = vmatpush1.msra.mxu0 %v1348
      %1720 = vmatprep.subr.mxu0 0.0
      %1721 = vmatpush1.msra.mxu0 %v1349
      %1722 = vmatprep.subr.mxu0 0.0
      %1723 = vmatpush1.msra.mxu0 %v1350
      %1724 = vmatprep.subr.mxu0 0.0
      %1725 = vmatpush1.msra.mxu0 %v1351
      %1726 = vmatprep.subr.mxu0 0.0
      %1727 = vmatpush1.msra.mxu0 %v1352
      %1728 = vmatprep.mubr.f32.mxu0 %v1117
      %1729 = vmatmul.mubr.f32.gmra.mrb[0].mxu0 %v1254
      %v1730 = vpop.f32.mrb[0].mxu0
      %v1731 = vadd.f32 %v1506, %v1730
      %v1732 = vpop.f32.mrb[0].mxu0
      %1733 = vmatprep.mubr.f32.mxu0 %v1118
      %1734 = vmatmul.mubr.f32.gmra.mrb[0].mxu0 %v1255
      %v1735 = vpop.f32.mrb[0].mxu0
      %v1736 = vadd.f32 %v1511, %v1735
      %v1737 = vpop.f32.mrb[0].mxu0
      %1738 = vmatprep.mubr.f32.mxu0 %v1119
      %1739 = vmatmul.mubr.f32.gmra.mrb[0].mxu0 %v1256
      %v1740 = vpop.f32.mrb[0].mxu0
      %v1741 = vadd.f32 %v1516, %v1740
      %v1742 = vpop.f32.mrb[0].mxu0
      %1743 = vmatprep.mubr.f32.mxu0 %v1120
      %1744 = vmatmul.mubr.f32.gmra.mrb[0].mxu0 %v1257
      %v1745 = vpop.f32.mrb[0].mxu0
      %v1746 = vadd.f32 %v1521, %v1745
      %v1747 = vpop.f32.mrb[0].mxu0
      %1748 = vmatprep.mubr.f32.mxu0 %v1121
      %1749 = vmatmul.mubr.f32.gmra.mrb[0].mxu0 %v1258
      %v1750 = vpop.f32.mrb[0].mxu0
      %v1751 = vadd.f32 %v1526, %v1750
      %v1752 = vpop.f32.mrb[0].mxu0
      %1753 = vmatprep.mubr.f32.mxu0 %v1122
      %1754 = vmatmul.mubr.f32.gmra.mrb[0].mxu0 %v1259
      %v1755 = vpop.f32.mrb[0].mxu0
      %v1756 = vadd.f32 %v1531, %v1755
      %v1757 = vpop.f32.mrb[0].mxu0
      %1758 = vmatprep.mubr.f32.mxu0 %v1123
      %1759 = vmatmul.mubr.f32.gmra.mrb[0].mxu0 %v1260
      %v1760 = vpop.f32.mrb[0].mxu0
      %v1761 = vadd.f32 %v1536, %v1760
      %v1762 = vpop.f32.mrb[0].mxu0
      %1763 = vmatprep.mubr.f32.mxu0 %v1124
      %1764 = vmatmul.mubr.f32.gmra.mrb[0].mxu0 %v1261
      %v1765 = vpop.f32.mrb[0].mxu0
      %v1766 = vadd.f32 %v1541, %v1765
      %v1767 = vpop.f32.mrb[0].mxu0
      %1768 = vmatprep.mubr.f32.mxu0 %v1125
      %1769 = vmatmul.mubr.f32.gmra.mrb[0].mxu0 %v1262
      %v1770 = vpop.f32.mrb[0].mxu0
      %v1771 = vadd.f32 %v1546, %v1770
      %v1772 = vpop.f32.mrb[0].mxu0
      %1773 = vmatprep.mubr.f32.mxu0 %v1126
      %1774 = vmatmul.mubr.f32.gmra.mrb[0].mxu0 %v1263
      %v1775 = vpop.f32.mrb[0].mxu0
      %v1776 = vadd.f32 %v1551, %v1775
      %v1777 = vpop.f32.mrb[0].mxu0
      %1778 = vmatprep.mubr.f32.mxu0 %v1127
      %1779 = vmatmul.mubr.f32.gmra.mrb[0].mxu0 %v1264
      %v1780 = vpop.f32.mrb[0].mxu0
      %v1781 = vadd.f32 %v1556, %v1780
      %v1782 = vpop.f32.mrb[0].mxu0
      %1783 = vmatprep.mubr.f32.mxu0 %v1128
      %1784 = vmatmul.mubr.f32.gmra.mrb[0].mxu0 %v1265
      %v1785 = vpop.f32.mrb[0].mxu0
      %v1786 = vadd.f32 %v1561, %v1785
      %v1787 = vpop.f32.mrb[0].mxu0
      %1788 = vmatprep.mubr.f32.mxu0 %v1129
      %1789 = vmatmul.mubr.f32.gmra.mrb[0].mxu0 %v1266
      %v1790 = vpop.f32.mrb[0].mxu0
      %v1791 = vadd.f32 %v1566, %v1790
      %v1792 = vpop.f32.mrb[0].mxu0
      %1793 = vmatprep.mubr.f32.mxu0 %v1130
      %1794 = vmatmul.mubr.f32.gmra.mrb[0].mxu0 %v1267
      %v1795 = vpop.f32.mrb[0].mxu0
      %v1796 = vadd.f32 %v1571, %v1795
      %v1797 = vpop.f32.mrb[0].mxu0
      %1798 = vmatprep.mubr.f32.mxu0 %v1131
      %1799 = vmatmul.mubr.f32.gmra.mrb[0].mxu0 %v1268
      %v1800 = vpop.f32.mrb[0].mxu0
      %v1801 = vadd.f32 %v1576, %v1800
      %v1802 = vpop.f32.mrb[0].mxu0
      %1803 = vmatprep.mubr.f32.mxu0 %v1132
      %1804 = vmatmul.mubr.f32.gmra.mrb[0].mxu0 %v1269
      %v1805 = vpop.f32.mrb[0].mxu0
      %v1806 = vadd.f32 %v1581, %v1805
      %v1807 = vpop.f32.mrb[0].mxu0
      %1808 = vmatprep.mubr.f32.mxu0 %v1133
      %1809 = vmatmul.mubr.f32.gmra.mrb[0].mxu0 %v1270
      %v1810 = vpop.f32.mrb[0].mxu0
      %v1811 = vadd.f32 %v1586, %v1810
      %v1812 = vpop.f32.mrb[0].mxu0
      %1813 = vmatprep.mubr.f32.mxu0 %v1134
      %1814 = vmatmul.mubr.f32.gmra.mrb[0].mxu0 %v1271
      %v1815 = vpop.f32.mrb[0].mxu0
      %v1816 = vadd.f32 %v1591, %v1815
      %v1817 = vpop.f32.mrb[0].mxu0
      %1818 = vmatprep.mubr.f32.mxu0 %v1135
      %1819 = vmatmul.mubr.f32.gmra.mrb[0].mxu0 %v1272
      %v1820 = vpop.f32.mrb[0].mxu0
      %v1821 = vadd.f32 %v1596, %v1820
      %v1822 = vpop.f32.mrb[0].mxu0
      %1823 = vmatprep.mubr.f32.mxu0 %v1136
      %1824 = vmatmul.mubr.f32.gmra.mrb[0].mxu0 %v1273
      %v1825 = vpop.f32.mrb[0].mxu0
      %v1826 = vadd.f32 %v1601, %v1825
      %v1827 = vpop.f32.mrb[0].mxu0
      %1828 = vmatprep.mubr.f32.mxu0 %v1137
      %1829 = vmatmul.mubr.f32.gmra.mrb[0].mxu0 %v1274
      %v1830 = vpop.f32.mrb[0].mxu0
      %v1831 = vadd.f32 %v1606, %v1830
      %v1832 = vpop.f32.mrb[0].mxu0
      %1833 = vmatprep.mubr.f32.mxu0 %v1138
      %1834 = vmatmul.mubr.f32.gmra.mrb[0].mxu0 %v1275
      %v1835 = vpop.f32.mrb[0].mxu0
      %v1836 = vadd.f32 %v1611, %v1835
      %v1837 = vpop.f32.mrb[0].mxu0
      %1838 = vmatprep.mubr.f32.mxu0 %v1139
      %1839 = vmatmul.mubr.f32.gmra.mrb[0].mxu0 %v1276
      %v1840 = vpop.f32.mrb[0].mxu0
      %v1841 = vadd.f32 %v1616, %v1840
      %v1842 = vpop.f32.mrb[0].mxu0
      %1843 = vmatprep.mubr.f32.mxu0 %v1140
      %1844 = vmatmul.mubr.f32.gmra.mrb[0].mxu0 %v1277
      %v1845 = vpop.f32.mrb[0].mxu0
      %v1846 = vadd.f32 %v1621, %v1845
      %v1847 = vpop.f32.mrb[0].mxu0
      %1848 = vmatprep.mubr.f32.mxu0 %v1141
      %1849 = vmatmul.mubr.f32.gmra.mrb[0].mxu0 %v1278
      %v1850 = vpop.f32.mrb[0].mxu0
      %v1851 = vadd.f32 %v1626, %v1850
      %v1852 = vpop.f32.mrb[0].mxu0
      %1853 = vmatprep.mubr.f32.mxu0 %v1142
      %1854 = vmatmul.mubr.f32.gmra.mrb[0].mxu0 %v1279
      %v1855 = vpop.f32.mrb[0].mxu0
      %v1856 = vadd.f32 %v1631, %v1855
      %v1857 = vpop.f32.mrb[0].mxu0
      %1858 = vmatprep.mubr.f32.mxu0 %v1143
      %1859 = vmatmul.mubr.f32.gmra.mrb[0].mxu0 %v1280
      %v1860 = vpop.f32.mrb[0].mxu0
      %v1861 = vadd.f32 %v1636, %v1860
      %v1862 = vpop.f32.mrb[0].mxu0
      %1863 = vmatprep.mubr.f32.mxu0 %v1144
      %1864 = vmatmul.mubr.f32.gmra.mrb[0].mxu0 %v1281
      %v1865 = vpop.f32.mrb[0].mxu0
      %v1866 = vadd.f32 %v1641, %v1865
      %v1867 = vpop.f32.mrb[0].mxu0
      %1868 = vmatprep.mubr.f32.mxu0 %v1145
      %1869 = vmatmul.mubr.f32.gmra.mrb[0].mxu0 %v1282
      %v1870 = vpop.f32.mrb[0].mxu0
      %v1871 = vadd.f32 %v1646, %v1870
      %v1872 = vpop.f32.mrb[0].mxu0
      %1873 = vmatprep.mubr.f32.mxu0 %v1146
      %1874 = vmatmul.mubr.f32.gmra.mrb[0].mxu0 %v1283
      %v1875 = vpop.f32.mrb[0].mxu0
      %v1876 = vadd.f32 %v1651, %v1875
      %v1877 = vpop.f32.mrb[0].mxu0
      %1878 = vmatprep.mubr.f32.mxu0 %v1147
      %1879 = vmatmul.mubr.f32.gmra.mrb[0].mxu0 %v1284
      %v1880 = vpop.f32.mrb[0].mxu0
      %v1881 = vadd.f32 %v1656, %v1880
      %v1882 = vpop.f32.mrb[0].mxu0
      %1883 = vmatprep.mubr.f32.mxu0 %v1148
      %1884 = vmatmul.mubr.f32.gmra.mrb[0].mxu0 %v1285
      %v1885 = vpop.f32.mrb[0].mxu0
      %v1886 = vadd.f32 %v1661, %v1885
      %v1887 = vpop.f32.mrb[0].mxu0
      %1888 = vdwg.mxu0
      %1889 = vmatprep.subr.mxu0 0.0
      %1890 = vmatpush1.msra.mxu0 %v1353
      %1891 = vmatprep.subr.mxu0 0.0
      %1892 = vmatpush1.msra.mxu0 %v1354
      %1893 = vmatprep.subr.mxu0 0.0
      %1894 = vmatpush1.msra.mxu0 %v1355
      %1895 = vmatprep.subr.mxu0 0.0
      %1896 = vmatpush1.msra.mxu0 %v1356
      %1897 = vmatprep.subr.mxu0 0.0
      %1898 = vmatpush1.msra.mxu0 %v1357
      %1899 = vmatprep.subr.mxu0 0.0
      %1900 = vmatpush1.msra.mxu0 %v1358
      %1901 = vmatprep.subr.mxu0 0.0
      %1902 = vmatpush1.msra.mxu0 %v1359
      %1903 = vmatprep.subr.mxu0 0.0
      %1904 = vmatpush1.msra.mxu0 %v1360
      %1905 = vmatprep.subr.mxu0 0.0
      %1906 = vmatpush1.msra.mxu0 %v1361
      %1907 = vmatprep.subr.mxu0 0.0
      %1908 = vmatpush1.msra.mxu0 %v1362
      %1909 = vmatprep.subr.mxu0 0.0
      %1910 = vmatpush1.msra.mxu0 %v1363
      %1911 = vmatprep.subr.mxu0 0.0
      %1912 = vmatpush1.msra.mxu0 %v1364
      %1913 = vmatprep.subr.mxu0 0.0
      %1914 = vmatpush1.msra.mxu0 %v1365
      %1915 = vmatprep.subr.mxu0 0.0
      %1916 = vmatpush1.msra.mxu0 %v1366
      %1917 = vmatprep.subr.mxu0 0.0
      %1918 = vmatpush1.msra.mxu0 %v1367
      %1919 = vmatprep.subr.mxu0 0.0
      %1920 = vmatpush1.msra.mxu0 %v1368
      %1921 = vmatprep.subr.mxu0 0.0
      %1922 = vmatpush1.msra.mxu0 %v1369
      %1923 = vmatprep.subr.mxu0 0.0
      %1924 = vmatpush1.msra.mxu0 %v1370
      %1925 = vmatprep.subr.mxu0 0.0
      %1926 = vmatpush1.msra.mxu0 %v1371
      %1927 = vmatprep.subr.mxu0 0.0
      %1928 = vmatpush1.msra.mxu0 %v1372
      %1929 = vmatprep.subr.mxu0 0.0
      %1930 = vmatpush1.msra.mxu0 %v1373
      %1931 = vmatprep.subr.mxu0 0.0
      %1932 = vmatpush1.msra.mxu0 %v1374
      %1933 = vmatprep.subr.mxu0 0.0
      %1934 = vmatpush1.msra.mxu0 %v1375
      %1935 = vmatprep.subr.mxu0 0.0
      %1936 = vmatpush1.msra.mxu0 %v1376
      %1937 = vmatprep.subr.mxu0 0.0
      %1938 = vmatpush1.msra.mxu0 %v1377
      %1939 = vmatprep.subr.mxu0 0.0
      %1940 = vmatpush1.msra.mxu0 %v1378
      %1941 = vmatprep.subr.mxu0 0.0
      %1942 = vmatpush1.msra.mxu0 %v1379
      %1943 = vmatprep.subr.mxu0 0.0
      %1944 = vmatpush1.msra.mxu0 %v1380
      %1945 = vmatprep.subr.mxu0 0.0
      %1946 = vmatpush1.msra.mxu0 %v1381
      %1947 = vmatprep.subr.mxu0 0.0
      %1948 = vmatpush1.msra.mxu0 %v1382
      %1949 = vmatprep.subr.mxu0 0.0
      %1950 = vmatpush1.msra.mxu0 %v1383
      %1951 = vmatprep.subr.mxu0 0.0
      %1952 = vmatpush1.msra.mxu0 %v1384
      %1953 = vmatprep.mubr.f32.mxu0 %v1256
      %1954 = vmatmul.mubr.f32.gmra.mrb[0].mxu0 %v945
      %v1955 = vpop.f32.mrb[0].mxu0
      %v1956 = vadd.f32 %v1731, %v1955
      %v1957 = vpop.f32.mrb[0].mxu0
      %1958 = vmatprep.mubr.f32.mxu0 %v1257
      %1959 = vmatmul.mubr.f32.gmra.mrb[0].mxu0 %v946
      %v1960 = vpop.f32.mrb[0].mxu0
      %v1961 = vadd.f32 %v1736, %v1960
      %v1962 = vpop.f32.mrb[0].mxu0
      %1963 = vmatprep.mubr.f32.mxu0 %v1258
      %1964 = vmatmul.mubr.f32.gmra.mrb[0].mxu0 %v947
      %v1965 = vpop.f32.mrb[0].mxu0
      %v1966 = vadd.f32 %v1741, %v1965
      %v1967 = vpop.f32.mrb[0].mxu0
      %1968 = vmatprep.mubr.f32.mxu0 %v1259
      %1969 = vmatmul.mubr.f32.gmra.mrb[0].mxu0 %v948
      %v1970 = vpop.f32.mrb[0].mxu0
      %v1971 = vadd.f32 %v1746, %v1970
      %v1972 = vpop.f32.mrb[0].mxu0
      %1973 = vmatprep.mubr.f32.mxu0 %v1260
      %1974 = vmatmul.mubr.f32.gmra.mrb[0].mxu0 %v949
      %v1975 = vpop.f32.mrb[0].mxu0
      %v1976 = vadd.f32 %v1751, %v1975
      %v1977 = vpop.f32.mrb[0].mxu0
      %1978 = vmatprep.mubr.f32.mxu0 %v1261
      %1979 = vmatmul.mubr.f32.gmra.mrb[0].mxu0 %v950
      %v1980 = vpop.f32.mrb[0].mxu0
      %v1981 = vadd.f32 %v1756, %v1980
      %v1982 = vpop.f32.mrb[0].mxu0
      %1983 = vmatprep.mubr.f32.mxu0 %v1262
      %1984 = vmatmul.mubr.f32.gmra.mrb[0].mxu0 %v951
      %v1985 = vpop.f32.mrb[0].mxu0
      %v1986 = vadd.f32 %v1761, %v1985
      %v1987 = vpop.f32.mrb[0].mxu0
      %1988 = vmatprep.mubr.f32.mxu0 %v1263
      %1989 = vmatmul.mubr.f32.gmra.mrb[0].mxu0 %v952
      %v1990 = vpop.f32.mrb[0].mxu0
      %v1991 = vadd.f32 %v1766, %v1990
      %v1992 = vpop.f32.mrb[0].mxu0
      %1993 = vmatprep.mubr.f32.mxu0 %v1264
      %1994 = vmatmul.mubr.f32.gmra.mrb[0].mxu0 %v953
      %v1995 = vpop.f32.mrb[0].mxu0
      %v1996 = vadd.f32 %v1771, %v1995
      %v1997 = vpop.f32.mrb[0].mxu0
      %1998 = vmatprep.mubr.f32.mxu0 %v1265
      %1999 = vmatmul.mubr.f32.gmra.mrb[0].mxu0 %v954
      %v2000 = vpop.f32.mrb[0].mxu0
      %v2001 = vadd.f32 %v1776, %v2000
      %v2002 = vpop.f32.mrb[0].mxu0
      %2003 = vmatprep.mubr.f32.mxu0 %v1266
      %2004 = vmatmul.mubr.f32.gmra.mrb[0].mxu0 %v955
      %v2005 = vpop.f32.mrb[0].mxu0
      %v2006 = vadd.f32 %v1781, %v2005
      %v2007 = vpop.f32.mrb[0].mxu0
      %2008 = vmatprep.mubr.f32.mxu0 %v1267
      %2009 = vmatmul.mubr.f32.gmra.mrb[0].mxu0 %v956
      %v2010 = vpop.f32.mrb[0].mxu0
      %v2011 = vadd.f32 %v1786, %v2010
      %v2012 = vpop.f32.mrb[0].mxu0
      %2013 = vmatprep.mubr.f32.mxu0 %v1268
      %2014 = vmatmul.mubr.f32.gmra.mrb[0].mxu0 %v957
      %v2015 = vpop.f32.mrb[0].mxu0
      %v2016 = vadd.f32 %v1791, %v2015
      %v2017 = vpop.f32.mrb[0].mxu0
      %2018 = vmatprep.mubr.f32.mxu0 %v1269
      %2019 = vmatmul.mubr.f32.gmra.mrb[0].mxu0 %v958
      %v2020 = vpop.f32.mrb[0].mxu0
      %v2021 = vadd.f32 %v1796, %v2020
      %v2022 = vpop.f32.mrb[0].mxu0
      %2023 = vmatprep.mubr.f32.mxu0 %v1270
      %2024 = vmatmul.mubr.f32.gmra.mrb[0].mxu0 %v959
      %v2025 = vpop.f32.mrb[0].mxu0
      %v2026 = vadd.f32 %v1801, %v2025
      %v2027 = vpop.f32.mrb[0].mxu0
      %2028 = vmatprep.mubr.f32.mxu0 %v1271
      %2029 = vmatmul.mubr.f32.gmra.mrb[0].mxu0 %v960
      %v2030 = vpop.f32.mrb[0].mxu0
      %v2031 = vadd.f32 %v1806, %v2030
      %v2032 = vpop.f32.mrb[0].mxu0
      %2033 = vmatprep.mubr.f32.mxu0 %v1272
      %2034 = vmatmul.mubr.f32.gmra.mrb[0].mxu0 %v961
      %v2035 = vpop.f32.mrb[0].mxu0
      %v2036 = vadd.f32 %v1811, %v2035
      %v2037 = vpop.f32.mrb[0].mxu0
      %2038 = vmatprep.mubr.f32.mxu0 %v1273
      %2039 = vmatmul.mubr.f32.gmra.mrb[0].mxu0 %v962
      %v2040 = vpop.f32.mrb[0].mxu0
      %v2041 = vadd.f32 %v1816, %v2040
      %v2042 = vpop.f32.mrb[0].mxu0
      %2043 = vmatprep.mubr.f32.mxu0 %v1274
      %2044 = vmatmul.mubr.f32.gmra.mrb[0].mxu0 %v963
      %v2045 = vpop.f32.mrb[0].mxu0
      %v2046 = vadd.f32 %v1821, %v2045
      %v2047 = vpop.f32.mrb[0].mxu0
      %2048 = vmatprep.mubr.f32.mxu0 %v1275
      %2049 = vmatmul.mubr.f32.gmra.mrb[0].mxu0 %v964
      %v2050 = vpop.f32.mrb[0].mxu0
      %v2051 = vadd.f32 %v1826, %v2050
      %v2052 = vpop.f32.mrb[0].mxu0
      %2053 = vmatprep.mubr.f32.mxu0 %v1276
      %2054 = vmatmul.mubr.f32.gmra.mrb[0].mxu0 %v965
      %v2055 = vpop.f32.mrb[0].mxu0
      %v2056 = vadd.f32 %v1831, %v2055
      %v2057 = vpop.f32.mrb[0].mxu0
      %2058 = vmatprep.mubr.f32.mxu0 %v1277
      %2059 = vmatmul.mubr.f32.gmra.mrb[0].mxu0 %v966
      %v2060 = vpop.f32.mrb[0].mxu0
      %v2061 = vadd.f32 %v1836, %v2060
      %v2062 = vpop.f32.mrb[0].mxu0
      %2063 = vmatprep.mubr.f32.mxu0 %v1278
      %2064 = vmatmul.mubr.f32.gmra.mrb[0].mxu0 %v967
      %v2065 = vpop.f32.mrb[0].mxu0
      %v2066 = vadd.f32 %v1841, %v2065
      %v2067 = vpop.f32.mrb[0].mxu0
      %2068 = vmatprep.mubr.f32.mxu0 %v1279
      %2069 = vmatmul.mubr.f32.gmra.mrb[0].mxu0 %v968
      %v2070 = vpop.f32.mrb[0].mxu0
      %v2071 = vadd.f32 %v1846, %v2070
      %v2072 = vpop.f32.mrb[0].mxu0
      %2073 = vmatprep.mubr.f32.mxu0 %v1280
      %2074 = vmatmul.mubr.f32.gmra.mrb[0].mxu0 %v969
      %v2075 = vpop.f32.mrb[0].mxu0
      %v2076 = vadd.f32 %v1851, %v2075
      %v2077 = vpop.f32.mrb[0].mxu0
      %2078 = vmatprep.mubr.f32.mxu0 %v1281
      %2079 = vmatmul.mubr.f32.gmra.mrb[0].mxu0 %v970
      %v2080 = vpop.f32.mrb[0].mxu0
      %v2081 = vadd.f32 %v1856, %v2080
      %v2082 = vpop.f32.mrb[0].mxu0
      %2083 = vmatprep.mubr.f32.mxu0 %v1282
      %2084 = vmatmul.mubr.f32.gmra.mrb[0].mxu0 %v971
      %v2085 = vpop.f32.mrb[0].mxu0
      %v2086 = vadd.f32 %v1861, %v2085
      %v2087 = vpop.f32.mrb[0].mxu0
      %2088 = vmatprep.mubr.f32.mxu0 %v1283
      %2089 = vmatmul.mubr.f32.gmra.mrb[0].mxu0 %v972
      %v2090 = vpop.f32.mrb[0].mxu0
      %v2091 = vadd.f32 %v1866, %v2090
      %v2092 = vpop.f32.mrb[0].mxu0
      %2093 = vmatprep.mubr.f32.mxu0 %v1284
      %2094 = vmatmul.mubr.f32.gmra.mrb[0].mxu0 %v973
      %v2095 = vpop.f32.mrb[0].mxu0
      %v2096 = vadd.f32 %v1871, %v2095
      %v2097 = vpop.f32.mrb[0].mxu0
      %2098 = vmatprep.mubr.f32.mxu0 %v1285
      %2099 = vmatmul.mubr.f32.gmra.mrb[0].mxu0 %v974
      %v2100 = vpop.f32.mrb[0].mxu0
      %v2101 = vadd.f32 %v1876, %v2100
      %v2102 = vpop.f32.mrb[0].mxu0
      %2103 = vmatprep.mubr.f32.mxu0 %v1286
      %2104 = vmatmul.mubr.f32.gmra.mrb[0].mxu0 %v975
      %v2105 = vpop.f32.mrb[0].mxu0
      %v2106 = vadd.f32 %v1881, %v2105
      %v2107 = vpop.f32.mrb[0].mxu0
      %2108 = vmatprep.mubr.f32.mxu0 %v1287
      %2109 = vmatmul.mubr.f32.gmra.mrb[0].mxu0 %v976
      %v2110 = vpop.f32.mrb[0].mxu0
      %v2111 = vadd.f32 %v1886, %v2110
      %v2112 = vpop.f32.mrb[0].mxu0
      %2113 = vdwg.mxu0
      %2114 = vmatprep.subr.mxu0 0.0
      %2115 = vmatpush1.msra.mxu0 %v1385
      %2116 = vmatprep.subr.mxu0 0.0
      %2117 = vmatpush1.msra.mxu0 %v1386
      %2118 = vmatprep.subr.mxu0 0.0
      %2119 = vmatpush1.msra.mxu0 %v1387
      %2120 = vmatprep.subr.mxu0 0.0
      %2121 = vmatpush1.msra.mxu0 %v1388
      %2122 = vmatprep.subr.mxu0 0.0
      %2123 = vmatpush1.msra.mxu0 %v1389
      %2124 = vmatprep.subr.mxu0 0.0
      %2125 = vmatpush1.msra.mxu0 %v1390
      %2126 = vmatprep.subr.mxu0 0.0
      %2127 = vmatpush1.msra.mxu0 %v1391
      %2128 = vmatprep.subr.mxu0 0.0
      %2129 = vmatpush1.msra.mxu0 %v1392
      %2130 = vmatprep.subr.mxu0 0.0
      %2131 = vmatpush1.msra.mxu0 %v1393
      %2132 = vmatprep.subr.mxu0 0.0
      %2133 = vmatpush1.msra.mxu0 %v1394
      %2134 = vmatprep.subr.mxu0 0.0
      %2135 = vmatpush1.msra.mxu0 %v1395
      %2136 = vmatprep.subr.mxu0 0.0
      %2137 = vmatpush1.msra.mxu0 %v1396
      %2138 = vmatprep.subr.mxu0 0.0
      %2139 = vmatpush1.msra.mxu0 %v1397
      %2140 = vmatprep.subr.mxu0 0.0
      %2141 = vmatpush1.msra.mxu0 %v1398
      %2142 = vmatprep.subr.mxu0 0.0
      %2143 = vmatpush1.msra.mxu0 %v1399
      %2144 = vmatprep.subr.mxu0 0.0
      %2145 = vmatpush1.msra.mxu0 %v1400
      %2146 = vmatprep.subr.mxu0 0.0
      %2147 = vmatpush1.msra.mxu0 %v1401
      %2148 = vmatprep.subr.mxu0 0.0
      %2149 = vmatpush1.msra.mxu0 %v1402
      %2150 = vmatprep.subr.mxu0 0.0
      %2151 = vmatpush1.msra.mxu0 %v1403
      %2152 = vmatprep.subr.mxu0 0.0
      %2153 = vmatpush1.msra.mxu0 %v1404
      %2154 = vmatprep.subr.mxu0 0.0
      %2155 = vmatpush1.msra.mxu0 %v1405
      %2156 = vmatprep.subr.mxu0 0.0
      %2157 = vmatpush1.msra.mxu0 %v1406
      %2158 = vmatprep.subr.mxu0 0.0
      %2159 = vmatpush1.msra.mxu0 %v1407
      %2160 = vmatprep.subr.mxu0 0.0
      %2161 = vmatpush1.msra.mxu0 %v1408
      %2162 = vmatprep.subr.mxu0 0.0
      %2163 = vmatpush1.msra.mxu0 %v1409
      %2164 = vmatprep.subr.mxu0 0.0
      %2165 = vmatpush1.msra.mxu0 %v1410
      %2166 = vmatprep.subr.mxu0 0.0
      %2167 = vmatpush1.msra.mxu0 %v1411
      %2168 = vmatprep.subr.mxu0 0.0
      %2169 = vmatpush1.msra.mxu0 %v1412
      %2170 = vmatprep.subr.mxu0 0.0
      %2171 = vmatpush1.msra.mxu0 %v1413
      %2172 = vmatprep.subr.mxu0 0.0
      %2173 = vmatpush1.msra.mxu0 %v1414
      %2174 = vmatprep.subr.mxu0 0.0
      %2175 = vmatpush1.msra.mxu0 %v1415
      %2176 = vmatprep.subr.mxu0 0.0
      %2177 = vmatpush1.msra.mxu0 %v1416
      %2178 = vmatprep.mubr.f32.mxu0 %v947
      %2179 = vmatmul.mubr.f32.gmra.mrb[0].mxu0 %v1119
      %v2180 = vpop.f32.mrb[0].mxu0
      %v2181 = vadd.f32 %v1956, %v2180
      %v2182 = vpop.f32.mrb[0].mxu0
      %2183 = vmatprep.mubr.f32.mxu0 %v948
      %2184 = vmatmul.mubr.f32.gmra.mrb[0].mxu0 %v1120
      %v2185 = vpop.f32.mrb[0].mxu0
      %v2186 = vadd.f32 %v1961, %v2185
      %v2187 = vpop.f32.mrb[0].mxu0
      %2188 = vmatprep.mubr.f32.mxu0 %v949
      %2189 = vmatmul.mubr.f32.gmra.mrb[0].mxu0 %v1121
      %v2190 = vpop.f32.mrb[0].mxu0
      %v2191 = vadd.f32 %v1966, %v2190
      %v2192 = vpop.f32.mrb[0].mxu0
      %2193 = vmatprep.mubr.f32.mxu0 %v950
      %2194 = vmatmul.mubr.f32.gmra.mrb[0].mxu0 %v1122
      %v2195 = vpop.f32.mrb[0].mxu0
      %v2196 = vadd.f32 %v1971, %v2195
      %v2197 = vpop.f32.mrb[0].mxu0
      %2198 = vmatprep.mubr.f32.mxu0 %v951
      %2199 = vmatmul.mubr.f32.gmra.mrb[0].mxu0 %v1123
      %v2200 = vpop.f32.mrb[0].mxu0
      %v2201 = vadd.f32 %v1976, %v2200
      %v2202 = vpop.f32.mrb[0].mxu0
      %2203 = vmatprep.mubr.f32.mxu0 %v952
      %2204 = vmatmul.mubr.f32.gmra.mrb[0].mxu0 %v1124
      %v2205 = vpop.f32.mrb[0].mxu0
      %v2206 = vadd.f32 %v1981, %v2205
      %v2207 = vpop.f32.mrb[0].mxu0
      %2208 = vmatprep.mubr.f32.mxu0 %v953
      %2209 = vmatmul.mubr.f32.gmra.mrb[0].mxu0 %v1125
      %v2210 = vpop.f32.mrb[0].mxu0
      %v2211 = vadd.f32 %v1986, %v2210
      %v2212 = vpop.f32.mrb[0].mxu0
      %2213 = vmatprep.mubr.f32.mxu0 %v954
      %2214 = vmatmul.mubr.f32.gmra.mrb[0].mxu0 %v1126
      %v2215 = vpop.f32.mrb[0].mxu0
      %v2216 = vadd.f32 %v1991, %v2215
      %v2217 = vpop.f32.mrb[0].mxu0
      %2218 = vmatprep.mubr.f32.mxu0 %v955
      %2219 = vmatmul.mubr.f32.gmra.mrb[0].mxu0 %v1127
      %v2220 = vpop.f32.mrb[0].mxu0
      %v2221 = vadd.f32 %v1996, %v2220
      %v2222 = vpop.f32.mrb[0].mxu0
      %2223 = vmatprep.mubr.f32.mxu0 %v956
      %2224 = vmatmul.mubr.f32.gmra.mrb[0].mxu0 %v1128
      %v2225 = vpop.f32.mrb[0].mxu0
      %v2226 = vadd.f32 %v2001, %v2225
      %v2227 = vpop.f32.mrb[0].mxu0
      %2228 = vmatprep.mubr.f32.mxu0 %v957
      %2229 = vmatmul.mubr.f32.gmra.mrb[0].mxu0 %v1129
      %v2230 = vpop.f32.mrb[0].mxu0
      %v2231 = vadd.f32 %v2006, %v2230
      %v2232 = vpop.f32.mrb[0].mxu0
      %2233 = vmatprep.mubr.f32.mxu0 %v958
      %2234 = vmatmul.mubr.f32.gmra.mrb[0].mxu0 %v1130
      %v2235 = vpop.f32.mrb[0].mxu0
      %v2236 = vadd.f32 %v2011, %v2235
      %v2237 = vpop.f32.mrb[0].mxu0
      %2238 = vmatprep.mubr.f32.mxu0 %v959
      %2239 = vmatmul.mubr.f32.gmra.mrb[0].mxu0 %v1131
      %v2240 = vpop.f32.mrb[0].mxu0
      %v2241 = vadd.f32 %v2016, %v2240
      %v2242 = vpop.f32.mrb[0].mxu0
      %2243 = vmatprep.mubr.f32.mxu0 %v960
      %2244 = vmatmul.mubr.f32.gmra.mrb[0].mxu0 %v1132
      %v2245 = vpop.f32.mrb[0].mxu0
      %v2246 = vadd.f32 %v2021, %v2245
      %v2247 = vpop.f32.mrb[0].mxu0
      %2248 = vmatprep.mubr.f32.mxu0 %v961
      %2249 = vmatmul.mubr.f32.gmra.mrb[0].mxu0 %v1133
      %v2250 = vpop.f32.mrb[0].mxu0
      %v2251 = vadd.f32 %v2026, %v2250
      %v2252 = vpop.f32.mrb[0].mxu0
      %2253 = vmatprep.mubr.f32.mxu0 %v962
      %2254 = vmatmul.mubr.f32.gmra.mrb[0].mxu0 %v1134
      %v2255 = vpop.f32.mrb[0].mxu0
      %v2256 = vadd.f32 %v2031, %v2255
      %v2257 = vpop.f32.mrb[0].mxu0
      %2258 = vmatprep.mubr.f32.mxu0 %v963
      %2259 = vmatmul.mubr.f32.gmra.mrb[0].mxu0 %v1135
      %v2260 = vpop.f32.mrb[0].mxu0
      %v2261 = vadd.f32 %v2036, %v2260
      %v2262 = vpop.f32.mrb[0].mxu0
      %2263 = vmatprep.mubr.f32.mxu0 %v964
      %2264 = vmatmul.mubr.f32.gmra.mrb[0].mxu0 %v1136
      %v2265 = vpop.f32.mrb[0].mxu0
      %v2266 = vadd.f32 %v2041, %v2265
      %v2267 = vpop.f32.mrb[0].mxu0
      %2268 = vmatprep.mubr.f32.mxu0 %v965
      %2269 = vmatmul.mubr.f32.gmra.mrb[0].mxu0 %v1137
      %v2270 = vpop.f32.mrb[0].mxu0
      %v2271 = vadd.f32 %v2046, %v2270
      %v2272 = vpop.f32.mrb[0].mxu0
      %2273 = vmatprep.mubr.f32.mxu0 %v966
      %2274 = vmatmul.mubr.f32.gmra.mrb[0].mxu0 %v1138
      %v2275 = vpop.f32.mrb[0].mxu0
      %v2276 = vadd.f32 %v2051, %v2275
      %v2277 = vpop.f32.mrb[0].mxu0
      %2278 = vmatprep.mubr.f32.mxu0 %v967
      %2279 = vmatmul.mubr.f32.gmra.mrb[0].mxu0 %v1139
      %v2280 = vpop.f32.mrb[0].mxu0
      %v2281 = vadd.f32 %v2056, %v2280
      %v2282 = vpop.f32.mrb[0].mxu0
      %2283 = vmatprep.mubr.f32.mxu0 %v968
      %2284 = vmatmul.mubr.f32.gmra.mrb[0].mxu0 %v1140
      %v2285 = vpop.f32.mrb[0].mxu0
      %v2286 = vadd.f32 %v2061, %v2285
      %v2287 = vpop.f32.mrb[0].mxu0
      %2288 = vmatprep.mubr.f32.mxu0 %v969
      %2289 = vmatmul.mubr.f32.gmra.mrb[0].mxu0 %v1141
      %v2290 = vpop.f32.mrb[0].mxu0
      %v2291 = vadd.f32 %v2066, %v2290
      %v2292 = vpop.f32.mrb[0].mxu0
      %2293 = vmatprep.mubr.f32.mxu0 %v970
      %2294 = vmatmul.mubr.f32.gmra.mrb[0].mxu0 %v1142
      %v2295 = vpop.f32.mrb[0].mxu0
      %v2296 = vadd.f32 %v2071, %v2295
      %v2297 = vpop.f32.mrb[0].mxu0
      %2298 = vmatprep.mubr.f32.mxu0 %v971
      %2299 = vmatmul.mubr.f32.gmra.mrb[0].mxu0 %v1143
      %v2300 = vpop.f32.mrb[0].mxu0
      %v2301 = vadd.f32 %v2076, %v2300
      %v2302 = vpop.f32.mrb[0].mxu0
      %2303 = vmatprep.mubr.f32.mxu0 %v972
      %2304 = vmatmul.mubr.f32.gmra.mrb[0].mxu0 %v1144
      %v2305 = vpop.f32.mrb[0].mxu0
      %v2306 = vadd.f32 %v2081, %v2305
      %v2307 = vpop.f32.mrb[0].mxu0
      %2308 = vmatprep.mubr.f32.mxu0 %v973
      %2309 = vmatmul.mubr.f32.gmra.mrb[0].mxu0 %v1145
      %v2310 = vpop.f32.mrb[0].mxu0
      %v2311 = vadd.f32 %v2086, %v2310
      %v2312 = vpop.f32.mrb[0].mxu0
      %2313 = vmatprep.mubr.f32.mxu0 %v974
      %2314 = vmatmul.mubr.f32.gmra.mrb[0].mxu0 %v1146
      %v2315 = vpop.f32.mrb[0].mxu0
      %v2316 = vadd.f32 %v2091, %v2315
      %v2317 = vpop.f32.mrb[0].mxu0
      %2318 = vmatprep.mubr.f32.mxu0 %v975
      %2319 = vmatmul.mubr.f32.gmra.mrb[0].mxu0 %v1147
      %v2320 = vpop.f32.mrb[0].mxu0
      %v2321 = vadd.f32 %v2096, %v2320
      %v2322 = vpop.f32.mrb[0].mxu0
      %2323 = vmatprep.mubr.f32.mxu0 %v976
      %2324 = vmatmul.mubr.f32.gmra.mrb[0].mxu0 %v1148
      %v2325 = vpop.f32.mrb[0].mxu0
      %v2326 = vadd.f32 %v2101, %v2325
      %v2327 = vpop.f32.mrb[0].mxu0
      %2328 = vmatprep.mubr.f32.mxu0 0.0
      %2329 = vmatmul.mubr.f32.gmra.mrb[0].mxu0 %v1149
      %v2330 = vpop.f32.mrb[0].mxu0
      %v2331 = vadd.f32 %v2106, %v2330
      %v2332 = vpop.f32.mrb[0].mxu0
      %2333 = vmatprep.mubr.f32.mxu0 0.0
      %2334 = vmatmul.mubr.f32.gmra.mrb[0].mxu0 %v1116
      %v2335 = vpop.f32.mrb[0].mxu0
      %v2336 = vadd.f32 %v2111, %v2335
      %v2337 = vpop.f32.mrb[0].mxu0
      %2338 = vdwg.mxu0
      %2339 = vmatprep.subr.mxu0 0.0
      %2340 = vmatpush1.msra.mxu0 %v1417
      %2341 = vmatprep.subr.mxu0 0.0
      %2342 = vmatpush1.msra.mxu0 %v1418
      %2343 = vmatprep.subr.mxu0 0.0
      %2344 = vmatpush1.msra.mxu0 %v1419
      %2345 = vmatprep.subr.mxu0 0.0
      %2346 = vmatpush1.msra.mxu0 %v1420
      %2347 = vmatprep.subr.mxu0 0.0
      %2348 = vmatpush1.msra.mxu0 %v1421
      %2349 = vmatprep.subr.mxu0 0.0
      %2350 = vmatpush1.msra.mxu0 %v1422
      %2351 = vmatprep.subr.mxu0 0.0
      %2352 = vmatpush1.msra.mxu0 %v1423
      %2353 = vmatprep.subr.mxu0 0.0
      %2354 = vmatpush1.msra.mxu0 %v1424
      %2355 = vmatprep.subr.mxu0 0.0
      %2356 = vmatpush1.msra.mxu0 %v1425
      %2357 = vmatprep.subr.mxu0 0.0
      %2358 = vmatpush1.msra.mxu0 %v1426
      %2359 = vmatprep.subr.mxu0 0.0
      %2360 = vmatpush1.msra.mxu0 %v1427
      %2361 = vmatprep.subr.mxu0 0.0
      %2362 = vmatpush1.msra.mxu0 %v1428
      %2363 = vmatprep.subr.mxu0 0.0
      %2364 = vmatpush1.msra.mxu0 %v1429
      %2365 = vmatprep.subr.mxu0 0.0
      %2366 = vmatpush1.msra.mxu0 %v1430
      %2367 = vmatprep.subr.mxu0 0.0
      %2368 = vmatpush1.msra.mxu0 %v1431
      %2369 = vmatprep.subr.mxu0 0.0
      %2370 = vmatpush1.msra.mxu0 %v1432
      %2371 = vmatprep.subr.mxu0 0.0
      %2372 = vmatpush1.msra.mxu0 0.0
      %2373 = vmatprep.subr.mxu0 0.0
      %2374 = vmatpush1.msra.mxu0 0.0
      %2375 = vmatprep.subr.mxu0 0.0
      %2376 = vmatpush1.msra.mxu0 0.0
      %2377 = vmatprep.subr.mxu0 0.0
      %2378 = vmatpush1.msra.mxu0 0.0
      %2379 = vmatprep.subr.mxu0 0.0
      %2380 = vmatpush1.msra.mxu0 0.0
      %2381 = vmatprep.subr.mxu0 0.0
      %2382 = vmatpush1.msra.mxu0 0.0
      %2383 = vmatprep.subr.mxu0 0.0
      %2384 = vmatpush1.msra.mxu0 0.0
      %2385 = vmatprep.subr.mxu0 0.0
      %2386 = vmatpush1.msra.mxu0 0.0
      %2387 = vmatprep.subr.mxu0 0.0
      %2388 = vmatpush1.msra.mxu0 0.0
      %2389 = vmatprep.subr.mxu0 0.0
      %2390 = vmatpush1.msra.mxu0 0.0
      %2391 = vmatprep.subr.mxu0 0.0
      %2392 = vmatpush1.msra.mxu0 0.0
      %2393 = vmatprep.subr.mxu0 0.0
      %2394 = vmatpush1.msra.mxu0 0.0
      %2395 = vmatprep.subr.mxu0 0.0
      %2396 = vmatpush1.msra.mxu0 0.0
      %2397 = vmatprep.subr.mxu0 0.0
      %2398 = vmatpush1.msra.mxu0 0.0
      %2399 = vmatprep.subr.mxu0 0.0
      %2400 = vmatpush1.msra.mxu0 0.0
      %2401 = vmatprep.subr.mxu0 0.0
      %2402 = vmatpush1.msra.mxu0 0.0
      %2403 = vmatprep.mubr.f32.mxu0 0.0
      %2404 = vmatmul.mubr.f32.gmra.mrb[0].mxu0 %v1258
      %v2405 = vpop.f32.mrb[0].mxu0
      %v2406 = vadd.f32 %v2181, %v2405
      %v2407 = vpop.f32.mrb[0].mxu0
      %2408 = vmatprep.mubr.f32.mxu0 0.0
      %2409 = vmatmul.mubr.f32.gmra.mrb[0].mxu0 %v1259
      %v2410 = vpop.f32.mrb[0].mxu0
      %v2411 = vadd.f32 %v2186, %v2410
      %v2412 = vpop.f32.mrb[0].mxu0
      %2413 = vmatprep.mubr.f32.mxu0 0.0
      %2414 = vmatmul.mubr.f32.gmra.mrb[0].mxu0 %v1260
      %v2415 = vpop.f32.mrb[0].mxu0
      %v2416 = vadd.f32 %v2191, %v2415
      %v2417 = vpop.f32.mrb[0].mxu0
      %2418 = vmatprep.mubr.f32.mxu0 0.0
      %2419 = vmatmul.mubr.f32.gmra.mrb[0].mxu0 %v1261
      %v2420 = vpop.f32.mrb[0].mxu0
      %v2421 = vadd.f32 %v2196, %v2420
      %v2422 = vpop.f32.mrb[0].mxu0
      %2423 = vmatprep.mubr.f32.mxu0 0.0
      %2424 = vmatmul.mubr.f32.gmra.mrb[0].mxu0 %v1262
      %v2425 = vpop.f32.mrb[0].mxu0
      %v2426 = vadd.f32 %v2201, %v2425
      %v2427 = vpop.f32.mrb[0].mxu0
      %2428 = vmatprep.mubr.f32.mxu0 0.0
      %2429 = vmatmul.mubr.f32.gmra.mrb[0].mxu0 %v1263
      %v2430 = vpop.f32.mrb[0].mxu0
      %v2431 = vadd.f32 %v2206, %v2430
      %v2432 = vpop.f32.mrb[0].mxu0
      %2433 = vmatprep.mubr.f32.mxu0 0.0
      %2434 = vmatmul.mubr.f32.gmra.mrb[0].mxu0 %v1264
      %v2435 = vpop.f32.mrb[0].mxu0
      %v2436 = vadd.f32 %v2211, %v2435
      %v2437 = vpop.f32.mrb[0].mxu0
      %2438 = vmatprep.mubr.f32.mxu0 0.0
      %2439 = vmatmul.mubr.f32.gmra.mrb[0].mxu0 %v1265
      %v2440 = vpop.f32.mrb[0].mxu0
      %v2441 = vadd.f32 %v2216, %v2440
      %v2442 = vpop.f32.mrb[0].mxu0
      %2443 = vmatprep.mubr.f32.mxu0 0.0
      %2444 = vmatmul.mubr.f32.gmra.mrb[0].mxu0 %v1266
      %v2445 = vpop.f32.mrb[0].mxu0
      %v2446 = vadd.f32 %v2221, %v2445
      %v2447 = vpop.f32.mrb[0].mxu0
      %2448 = vmatprep.mubr.f32.mxu0 0.0
      %2449 = vmatmul.mubr.f32.gmra.mrb[0].mxu0 %v1267
      %v2450 = vpop.f32.mrb[0].mxu0
      %v2451 = vadd.f32 %v2226, %v2450
      %v2452 = vpop.f32.mrb[0].mxu0
      %2453 = vmatprep.mubr.f32.mxu0 0.0
      %2454 = vmatmul.mubr.f32.gmra.mrb[0].mxu0 %v1268
      %v2455 = vpop.f32.mrb[0].mxu0
      %v2456 = vadd.f32 %v2231, %v2455
      %v2457 = vpop.f32.mrb[0].mxu0
      %2458 = vmatprep.mubr.f32.mxu0 0.0
      %2459 = vmatmul.mubr.f32.gmra.mrb[0].mxu0 %v1269
      %v2460 = vpop.f32.mrb[0].mxu0
      %v2461 = vadd.f32 %v2236, %v2460
      %v2462 = vpop.f32.mrb[0].mxu0
      %2463 = vmatprep.mubr.f32.mxu0 0.0
      %2464 = vmatmul.mubr.f32.gmra.mrb[0].mxu0 %v1270
      %v2465 = vpop.f32.mrb[0].mxu0
      %v2466 = vadd.f32 %v2241, %v2465
      %v2467 = vpop.f32.mrb[0].mxu0
      %2468 = vmatprep.mubr.f32.mxu0 0.0
      %2469 = vmatmul.mubr.f32.gmra.mrb[0].mxu0 %v1271
      %v2470 = vpop.f32.mrb[0].mxu0
      %v2471 = vadd.f32 %v2246, %v2470
      %v2472 = vpop.f32.mrb[0].mxu0
      %2473 = vmatprep.mubr.f32.mxu0 0.0
      %2474 = vmatmul.mubr.f32.gmra.mrb[0].mxu0 %v1272
      %v2475 = vpop.f32.mrb[0].mxu0
      %v2476 = vadd.f32 %v2251, %v2475
      %v2477 = vpop.f32.mrb[0].mxu0
      %2478 = vmatprep.mubr.f32.mxu0 0.0
      %2479 = vmatmul.mubr.f32.gmra.mrb[0].mxu0 %v1273
      %v2480 = vpop.f32.mrb[0].mxu0
      %v2481 = vadd.f32 %v2256, %v2480
      %v2482 = vpop.f32.mrb[0].mxu0
      %2483 = vmatprep.mubr.f32.mxu0 0.0
      %2484 = vmatmul.mubr.f32.gmra.mrb[0].mxu0 %v1274
      %v2485 = vpop.f32.mrb[0].mxu0
      %v2486 = vadd.f32 %v2261, %v2485
      %v2487 = vpop.f32.mrb[0].mxu0
      %2488 = vmatprep.mubr.f32.mxu0 0.0
      %2489 = vmatmul.mubr.f32.gmra.mrb[0].mxu0 %v1275
      %v2490 = vpop.f32.mrb[0].mxu0
      %v2491 = vadd.f32 %v2266, %v2490
      %v2492 = vpop.f32.mrb[0].mxu0
      %2493 = vmatprep.mubr.f32.mxu0 0.0
      %2494 = vmatmul.mubr.f32.gmra.mrb[0].mxu0 %v1276
      %v2495 = vpop.f32.mrb[0].mxu0
      %v2496 = vadd.f32 %v2271, %v2495
      %v2497 = vpop.f32.mrb[0].mxu0
      %2498 = vmatprep.mubr.f32.mxu0 0.0
      %2499 = vmatmul.mubr.f32.gmra.mrb[0].mxu0 %v1277
      %v2500 = vpop.f32.mrb[0].mxu0
      %v2501 = vadd.f32 %v2276, %v2500
      %v2502 = vpop.f32.mrb[0].mxu0
      %2503 = vmatprep.mubr.f32.mxu0 0.0
      %2504 = vmatmul.mubr.f32.gmra.mrb[0].mxu0 %v1278
      %v2505 = vpop.f32.mrb[0].mxu0
      %v2506 = vadd.f32 %v2281, %v2505
      %v2507 = vpop.f32.mrb[0].mxu0
      %2508 = vmatprep.mubr.f32.mxu0 0.0
      %2509 = vmatmul.mubr.f32.gmra.mrb[0].mxu0 %v1279
      %v2510 = vpop.f32.mrb[0].mxu0
      %v2511 = vadd.f32 %v2286, %v2510
      %v2512 = vpop.f32.mrb[0].mxu0
      %2513 = vmatprep.mubr.f32.mxu0 0.0
      %2514 = vmatmul.mubr.f32.gmra.mrb[0].mxu0 %v1280
      %v2515 = vpop.f32.mrb[0].mxu0
      %v2516 = vadd.f32 %v2291, %v2515
      %v2517 = vpop.f32.mrb[0].mxu0
      %2518 = vmatprep.mubr.f32.mxu0 0.0
      %2519 = vmatmul.mubr.f32.gmra.mrb[0].mxu0 %v1281
      %v2520 = vpop.f32.mrb[0].mxu0
      %v2521 = vadd.f32 %v2296, %v2520
      %v2522 = vpop.f32.mrb[0].mxu0
      %2523 = vmatprep.mubr.f32.mxu0 0.0
      %2524 = vmatmul.mubr.f32.gmra.mrb[0].mxu0 %v1282
      %v2525 = vpop.f32.mrb[0].mxu0
      %v2526 = vadd.f32 %v2301, %v2525
      %v2527 = vpop.f32.mrb[0].mxu0
      %2528 = vmatprep.mubr.f32.mxu0 0.0
      %2529 = vmatmul.mubr.f32.gmra.mrb[0].mxu0 %v1283
      %v2530 = vpop.f32.mrb[0].mxu0
      %v2531 = vadd.f32 %v2306, %v2530
      %v2532 = vpop.f32.mrb[0].mxu0
      %2533 = vmatprep.mubr.f32.mxu0 0.0
      %2534 = vmatmul.mubr.f32.gmra.mrb[0].mxu0 %v1284
      %v2535 = vpop.f32.mrb[0].mxu0
      %v2536 = vadd.f32 %v2311, %v2535
      %v2537 = vpop.f32.mrb[0].mxu0
      %2538 = vmatprep.mubr.f32.mxu0 0.0
      %2539 = vmatmul.mubr.f32.gmra.mrb[0].mxu0 %v1285
      %v2540 = vpop.f32.mrb[0].mxu0
      %v2541 = vadd.f32 %v2316, %v2540
      %v2542 = vpop.f32.mrb[0].mxu0
      %2543 = vmatprep.mubr.f32.mxu0 0.0
      %2544 = vmatmul.mubr.f32.gmra.mrb[0].mxu0 %v1286
      %v2545 = vpop.f32.mrb[0].mxu0
      %v2546 = vadd.f32 %v2321, %v2545
      %v2547 = vpop.f32.mrb[0].mxu0
      %2548 = vmatprep.mubr.f32.mxu0 0.0
      %2549 = vmatmul.mubr.f32.gmra.mrb[0].mxu0 %v1287
      %v2550 = vpop.f32.mrb[0].mxu0
      %v2551 = vadd.f32 %v2326, %v2550
      %v2552 = vpop.f32.mrb[0].mxu0
      %2553 = vmatprep.mubr.f32.mxu0 0.0
      %2554 = vmatmul.mubr.f32.gmra.mrb[0].mxu0 %v1254
      %v2555 = vpop.f32.mrb[0].mxu0
      %v2556 = vadd.f32 %v2331, %v2555
      %v2557 = vpop.f32.mrb[0].mxu0
      %2558 = vmatprep.mubr.f32.mxu0 0.0
      %2559 = vmatmul.mubr.f32.gmra.mrb[0].mxu0 %v1288
      %v2560 = vpop.f32.mrb[0].mxu0
      %v2561 = vadd.f32 %v2336, %v2560
      %v2562 = vpop.f32.mrb[0].mxu0
      %2563 = vdwg.mxu0
      %v2564 = vld [vmem:[%s395] sm:$0x1]
      %v2566 = vlaneseq
      %v2567 = vshrl.u32 %v2566, 7
      %v2568 = vsub.s32 0, %v2567
      %v2569 = vrot.slane %v2564, %v2568
      %v2571 = vadd.f32 %v2406, %v2569
      %v2572 = vadd.f32 %v2411, %v2569
      %v2573 = vadd.f32 %v2416, %v2569
      %v2574 = vadd.f32 %v2421, %v2569
      %v2575 = vadd.f32 %v2426, %v2569
      %v2576 = vadd.f32 %v2431, %v2569
      %v2577 = vadd.f32 %v2436, %v2569
      %v2578 = vadd.f32 %v2441, %v2569
      %v2579 = vadd.f32 %v2446, %v2569
      %v2580 = vadd.f32 %v2451, %v2569
      %v2581 = vadd.f32 %v2456, %v2569
      %v2582 = vadd.f32 %v2461, %v2569
      %v2583 = vadd.f32 %v2466, %v2569
      %v2584 = vadd.f32 %v2471, %v2569
      %v2585 = vadd.f32 %v2476, %v2569
      %v2586 = vadd.f32 %v2481, %v2569
      %v2587 = vadd.f32 %v2486, %v2569
      %v2588 = vadd.f32 %v2491, %v2569
      %v2589 = vadd.f32 %v2496, %v2569
      %v2590 = vadd.f32 %v2501, %v2569
      %v2591 = vadd.f32 %v2506, %v2569
      %v2592 = vadd.f32 %v2511, %v2569
      %v2593 = vadd.f32 %v2516, %v2569
      %v2594 = vadd.f32 %v2521, %v2569
      %v2595 = vadd.f32 %v2526, %v2569
      %v2596 = vadd.f32 %v2531, %v2569
      %v2597 = vadd.f32 %v2536, %v2569
      %v2598 = vadd.f32 %v2541, %v2569
      %v2599 = vadd.f32 %v2546, %v2569
      %v2600 = vadd.f32 %v2551, %v2569
      %v2601 = vadd.f32 %v2556, %v2569
      %v2602 = vadd.f32 %v2561, %v2569
      %v2603 = vld [vmem:[%s7] sm:$0x1]
      %v2604 = vld [vmem:[%s8] sm:$0x1]
      %v2605 = vadd.f32 %v2571, %v2572
      %v2606 = vadd.f32 %v2605, %v2573
      %v2607 = vadd.f32 %v2606, %v2574
      %v2608 = vadd.f32 %v2607, %v2575
      %v2609 = vadd.f32 %v2608, %v2576
      %v2610 = vadd.f32 %v2609, %v2577
      %v2611 = vadd.f32 %v2610, %v2578
      %v2612 = vadd.f32 %v2611, %v2579
      %v2613 = vadd.f32 %v2612, %v2580
      %v2614 = vadd.f32 %v2613, %v2581
      %v2615 = vadd.f32 %v2614, %v2582
      %v2616 = vadd.f32 %v2615, %v2583
      %v2617 = vadd.f32 %v2616, %v2584
      %v2618 = vadd.f32 %v2617, %v2585
      %v2619 = vadd.f32 %v2618, %v2586
      %v2620 = vadd.f32 %v2619, %v2587
      %v2621 = vadd.f32 %v2620, %v2588
      %v2622 = vadd.f32 %v2621, %v2589
      %v2623 = vadd.f32 %v2622, %v2590
      %v2624 = vadd.f32 %v2623, %v2591
      %v2625 = vadd.f32 %v2624, %v2592
      %v2626 = vadd.f32 %v2625, %v2593
      %v2627 = vadd.f32 %v2626, %v2594
      %v2628 = vadd.f32 %v2627, %v2595
      %v2629 = vadd.f32 %v2628, %v2596
      %v2630 = vadd.f32 %v2629, %v2597
      %v2631 = vadd.f32 %v2630, %v2598
      %v2632 = vadd.f32 %v2631, %v2599
      %v2633 = vadd.f32 %v2632, %v2600
      %v2634 = vadd.f32 %v2633, %v2601
      %v2635 = vadd.f32 %v2634, %v2602
      %v2636 = vrot.slane %v2635, 4
      %v2637 = vadd.f32 %v2635, %v2636
      %v2638 = vrot.slane %v2637, 2
      %v2639 = vadd.f32 %v2637, %v2638
      %v2640 = vrot.slane %v2639, 1
      %v2641 = vadd.f32 %v2639, %v2640
      %v2642 = vmul.f32 %v2571, %v2571
      %v2643 = vmul.f32 %v2572, %v2572
      %v2644 = vmul.f32 %v2573, %v2573
      %v2645 = vmul.f32 %v2574, %v2574
      %v2646 = vmul.f32 %v2575, %v2575
      %v2647 = vmul.f32 %v2576, %v2576
      %v2648 = vmul.f32 %v2577, %v2577
      %v2649 = vmul.f32 %v2578, %v2578
      %v2650 = vmul.f32 %v2579, %v2579
      %v2651 = vmul.f32 %v2580, %v2580
      %v2652 = vmul.f32 %v2581, %v2581
      %v2653 = vmul.f32 %v2582, %v2582
      %v2654 = vmul.f32 %v2583, %v2583
      %v2655 = vmul.f32 %v2584, %v2584
      %v2656 = vmul.f32 %v2585, %v2585
      %v2657 = vmul.f32 %v2586, %v2586
      %v2658 = vmul.f32 %v2587, %v2587
      %v2659 = vmul.f32 %v2588, %v2588
      %v2660 = vmul.f32 %v2589, %v2589
      %v2661 = vmul.f32 %v2590, %v2590
      %v2662 = vmul.f32 %v2591, %v2591
      %v2663 = vmul.f32 %v2592, %v2592
      %v2664 = vmul.f32 %v2593, %v2593
      %v2665 = vmul.f32 %v2594, %v2594
      %v2666 = vmul.f32 %v2595, %v2595
      %v2667 = vmul.f32 %v2596, %v2596
      %v2668 = vmul.f32 %v2597, %v2597
      %v2669 = vmul.f32 %v2598, %v2598
      %v2670 = vmul.f32 %v2599, %v2599
      %v2671 = vmul.f32 %v2600, %v2600
      %v2672 = vmul.f32 %v2601, %v2601
      %v2673 = vmul.f32 %v2602, %v2602
      %v2674 = vadd.f32 %v2642, %v2643
      %v2675 = vadd.f32 %v2674, %v2644
      %v2676 = vadd.f32 %v2675, %v2645
      %v2677 = vadd.f32 %v2676, %v2646
      %v2678 = vadd.f32 %v2677, %v2647
      %v2679 = vadd.f32 %v2678, %v2648
      %v2680 = vadd.f32 %v2679, %v2649
      %v2681 = vadd.f32 %v2680, %v2650
      %v2682 = vadd.f32 %v2681, %v2651
      %v2683 = vadd.f32 %v2682, %v2652
      %v2684 = vadd.f32 %v2683, %v2653
      %v2685 = vadd.f32 %v2684, %v2654
      %v2686 = vadd.f32 %v2685, %v2655
      %v2687 = vadd.f32 %v2686, %v2656
      %v2688 = vadd.f32 %v2687, %v2657
      %v2689 = vadd.f32 %v2688, %v2658
      %v2690 = vadd.f32 %v2689, %v2659
      %v2691 = vadd.f32 %v2690, %v2660
      %v2692 = vadd.f32 %v2691, %v2661
      %v2693 = vadd.f32 %v2692, %v2662
      %v2694 = vadd.f32 %v2693, %v2663
      %v2695 = vadd.f32 %v2694, %v2664
      %v2696 = vadd.f32 %v2695, %v2665
      %v2697 = vadd.f32 %v2696, %v2666
      %v2698 = vadd.f32 %v2697, %v2667
      %v2699 = vadd.f32 %v2698, %v2668
      %v2700 = vadd.f32 %v2699, %v2669
      %v2701 = vadd.f32 %v2700, %v2670
      %v2702 = vadd.f32 %v2701, %v2671
      %v2703 = vadd.f32 %v2702, %v2672
      %v2704 = vadd.f32 %v2703, %v2673
      %v2705 = vrot.slane %v2704, 4
      %v2706 = vadd.f32 %v2704, %v2705
      %v2707 = vrot.slane %v2706, 2
      %v2708 = vadd.f32 %v2706, %v2707
      %v2709 = vrot.slane %v2708, 1
      %v2710 = vadd.f32 %v2708, %v2709
      %2711 = vmatprep.subr.mxu0 0.0
      %2712 = vmatpush1.msra.mxu0 %v433
      %2713 = vmatprep.subr.mxu0 0.0
      %2714 = vmatpush1.msra.mxu0 %v434
      %2715 = vmatprep.subr.mxu0 0.0
      %2716 = vmatpush1.msra.mxu0 %v435
      %2717 = vmatprep.subr.mxu0 0.0
      %2718 = vmatpush1.msra.mxu0 %v436
      %2719 = vmatprep.subr.mxu0 0.0
      %2720 = vmatpush1.msra.mxu0 %v437
      %2721 = vmatprep.subr.mxu0 0.0
      %2722 = vmatpush1.msra.mxu0 %v438
      %2723 = vmatprep.subr.mxu0 0.0
      %2724 = vmatpush1.msra.mxu0 %v439
      %2725 = vmatprep.subr.mxu0 0.0
      %2726 = vmatpush1.msra.mxu0 %v440
      %2727 = vmatprep.subr.mxu0 0.0
      %2728 = vmatpush1.msra.mxu0 %v441
      %2729 = vmatprep.subr.mxu0 0.0
      %2730 = vmatpush1.msra.mxu0 %v442
      %2731 = vmatprep.subr.mxu0 0.0
      %2732 = vmatpush1.msra.mxu0 %v443
      %2733 = vmatprep.subr.mxu0 0.0
      %2734 = vmatpush1.msra.mxu0 %v444
      %2735 = vmatprep.subr.mxu0 0.0
      %2736 = vmatpush1.msra.mxu0 %v445
      %2737 = vmatprep.subr.mxu0 0.0
      %2738 = vmatpush1.msra.mxu0 %v446
      %2739 = vmatprep.subr.mxu0 0.0
      %2740 = vmatpush1.msra.mxu0 %v447
      %2741 = vmatprep.subr.mxu0 0.0
      %2742 = vmatpush1.msra.mxu0 %v448
      %2743 = vmatprep.subr.mxu0 0.0
      %2744 = vmatpush1.msra.mxu0 0.0
      %2745 = vmatprep.subr.mxu0 0.0
      %2746 = vmatpush1.msra.mxu0 0.0
      %2747 = vmatprep.subr.mxu0 0.0
      %2748 = vmatpush1.msra.mxu0 0.0
      %2749 = vmatprep.subr.mxu0 0.0
      %2750 = vmatpush1.msra.mxu0 0.0
      %2751 = vmatprep.subr.mxu0 0.0
      %2752 = vmatpush1.msra.mxu0 0.0
      %2753 = vmatprep.subr.mxu0 0.0
      %2754 = vmatpush1.msra.mxu0 0.0
      %2755 = vmatprep.subr.mxu0 0.0
      %2756 = vmatpush1.msra.mxu0 0.0
      %2757 = vmatprep.subr.mxu0 0.0
      %2758 = vmatpush1.msra.mxu0 0.0
      %2759 = vmatprep.subr.mxu0 0.0
      %2760 = vmatpush1.msra.mxu0 0.0
      %2761 = vmatprep.subr.mxu0 0.0
      %2762 = vmatpush1.msra.mxu0 0.0
      %2763 = vmatprep.subr.mxu0 0.0
      %2764 = vmatpush1.msra.mxu0 0.0
      %2765 = vmatprep.subr.mxu0 0.0
      %2766 = vmatpush1.msra.mxu0 0.0
      %2767 = vmatprep.subr.mxu0 0.0
      %2768 = vmatpush1.msra.mxu0 0.0
      %2769 = vmatprep.subr.mxu0 0.0
      %2770 = vmatpush1.msra.mxu0 0.0
      %2771 = vmatprep.subr.mxu0 0.0
      %2772 = vmatpush1.msra.mxu0 0.0
      %2773 = vmatprep.subr.mxu0 0.0
      %2774 = vmatpush1.msra.mxu0 0.0
      %2775 = vmatprep.mubr.f32.mxu0 0.0
      %2776 = vmatmul.mubr.f32.gmra.mrb[0].mxu0 %v2641
      %v2777 = vpop.f32.mrb[0].mxu0
      %v2778 = vadd.f32 0.0, %v2777
      %v2779 = vpop.f32.mrb[0].mxu0
      %2780 = vdwg.mxu0
      %2781 = vmatprep.subr.mxu0 0.0
      %2782 = vmatpush1.msra.mxu0 %v433
      %2783 = vmatprep.subr.mxu0 0.0
      %2784 = vmatpush1.msra.mxu0 %v434
      %2785 = vmatprep.subr.mxu0 0.0
      %2786 = vmatpush1.msra.mxu0 %v435
      %2787 = vmatprep.subr.mxu0 0.0
      %2788 = vmatpush1.msra.mxu0 %v436
      %2789 = vmatprep.subr.mxu0 0.0
      %2790 = vmatpush1.msra.mxu0 %v437
      %2791 = vmatprep.subr.mxu0 0.0
      %2792 = vmatpush1.msra.mxu0 %v438
      %2793 = vmatprep.subr.mxu0 0.0
      %2794 = vmatpush1.msra.mxu0 %v439
      %2795 = vmatprep.subr.mxu0 0.0
      %2796 = vmatpush1.msra.mxu0 %v440
      %2797 = vmatprep.subr.mxu0 0.0
      %2798 = vmatpush1.msra.mxu0 %v441
      %2799 = vmatprep.subr.mxu0 0.0
      %2800 = vmatpush1.msra.mxu0 %v442
      %2801 = vmatprep.subr.mxu0 0.0
      %2802 = vmatpush1.msra.mxu0 %v443
      %2803 = vmatprep.subr.mxu0 0.0
      %2804 = vmatpush1.msra.mxu0 %v444
      %2805 = vmatprep.subr.mxu0 0.0
      %2806 = vmatpush1.msra.mxu0 %v445
      %2807 = vmatprep.subr.mxu0 0.0
      %2808 = vmatpush1.msra.mxu0 %v446
      %2809 = vmatprep.subr.mxu0 0.0
      %2810 = vmatpush1.msra.mxu0 %v447
      %2811 = vmatprep.subr.mxu0 0.0
      %2812 = vmatpush1.msra.mxu0 %v448
      %2813 = vmatprep.subr.mxu0 0.0
      %2814 = vmatpush1.msra.mxu0 0.0
      %2815 = vmatprep.subr.mxu0 0.0
      %2816 = vmatpush1.msra.mxu0 0.0
      %2817 = vmatprep.subr.mxu0 0.0
      %2818 = vmatpush1.msra.mxu0 0.0
      %2819 = vmatprep.subr.mxu0 0.0
      %2820 = vmatpush1.msra.mxu0 0.0
      %2821 = vmatprep.subr.mxu0 0.0
      %2822 = vmatpush1.msra.mxu0 0.0
      %2823 = vmatprep.subr.mxu0 0.0
      %2824 = vmatpush1.msra.mxu0 0.0
      %2825 = vmatprep.subr.mxu0 0.0
      %2826 = vmatpush1.msra.mxu0 0.0
      %2827 = vmatprep.subr.mxu0 0.0
      %2828 = vmatpush1.msra.mxu0 0.0
      %2829 = vmatprep.subr.mxu0 0.0
      %2830 = vmatpush1.msra.mxu0 0.0
      %2831 = vmatprep.subr.mxu0 0.0
      %2832 = vmatpush1.msra.mxu0 0.0
      %2833 = vmatprep.subr.mxu0 0.0
      %2834 = vmatpush1.msra.mxu0 0.0
      %2835 = vmatprep.subr.mxu0 0.0
      %2836 = vmatpush1.msra.mxu0 0.0
      %2837 = vmatprep.subr.mxu0 0.0
      %2838 = vmatpush1.msra.mxu0 0.0
      %2839 = vmatprep.subr.mxu0 0.0
      %2840 = vmatpush1.msra.mxu0 0.0
      %2841 = vmatprep.subr.mxu0 0.0
      %2842 = vmatpush1.msra.mxu0 0.0
      %2843 = vmatprep.subr.mxu0 0.0
      %2844 = vmatpush1.msra.mxu0 0.0
      %2845 = vmatprep.mubr.f32.mxu0 0.0
      %2846 = vmatmul.mubr.f32.gmra.mrb[0].mxu0 %v2710
      %v2847 = vpop.f32.mrb[0].mxu0
      %v2848 = vadd.f32 0.0, %v2847
      %v2849 = vpop.f32.mrb[0].mxu0
      %2850 = vdwg.mxu0
      %v2851 = vmul.f32 %v2778, %v2778
      %v2852 = vsub.f32 %v2848, %v2851
      %v2853 = vadd.f32 %v2852, 1e-06
      %v2854 = vrsqrt.pop %v2853
      %v2855 = vmul.f32 %v2854, %v2603
      %v2856 = vmul.f32 %v2778, %v2855
      %v2857 = vsub.f32 %v2604, %v2856
      %v2858 = vlaneseq
      %v2859 = vshrl.u32 %v2858, 7
      %v2860 = vsub.s32 0, %v2859
      %v2861 = vrot.slane %v2855, %v2860
      %v2862 = vmul.f32 %v2571, %v2861
      %v2863 = vmul.f32 %v2572, %v2861
      %v2864 = vmul.f32 %v2573, %v2861
      %v2865 = vmul.f32 %v2574, %v2861
      %v2866 = vmul.f32 %v2575, %v2861
      %v2867 = vmul.f32 %v2576, %v2861
      %v2868 = vmul.f32 %v2577, %v2861
      %v2869 = vmul.f32 %v2578, %v2861
      %v2870 = vmul.f32 %v2579, %v2861
      %v2871 = vmul.f32 %v2580, %v2861
      %v2872 = vmul.f32 %v2581, %v2861
      %v2873 = vmul.f32 %v2582, %v2861
      %v2874 = vmul.f32 %v2583, %v2861
      %v2875 = vmul.f32 %v2584, %v2861
      %v2876 = vmul.f32 %v2585, %v2861
      %v2877 = vmul.f32 %v2586, %v2861
      %v2878 = vmul.f32 %v2587, %v2861
      %v2879 = vmul.f32 %v2588, %v2861
      %v2880 = vmul.f32 %v2589, %v2861
      %v2881 = vmul.f32 %v2590, %v2861
      %v2882 = vmul.f32 %v2591, %v2861
      %v2883 = vmul.f32 %v2592, %v2861
      %v2884 = vmul.f32 %v2593, %v2861
      %v2885 = vmul.f32 %v2594, %v2861
      %v2886 = vmul.f32 %v2595, %v2861
      %v2887 = vmul.f32 %v2596, %v2861
      %v2888 = vmul.f32 %v2597, %v2861
      %v2889 = vmul.f32 %v2598, %v2861
      %v2890 = vmul.f32 %v2599, %v2861
      %v2891 = vmul.f32 %v2600, %v2861
      %v2892 = vmul.f32 %v2601, %v2861
      %v2893 = vmul.f32 %v2602, %v2861
      %v2895 = vlaneseq
      %v2896 = vshrl.u32 %v2895, 7
      %v2897 = vsub.s32 0, %v2896
      %v2898 = vrot.slane %v2857, %v2897
      %v2900 = vadd.f32 %v2862, %v2898
      %v2901 = vadd.f32 %v2863, %v2898
      %v2902 = vadd.f32 %v2864, %v2898
      %v2903 = vadd.f32 %v2865, %v2898
      %v2904 = vadd.f32 %v2866, %v2898
      %v2905 = vadd.f32 %v2867, %v2898
      %v2906 = vadd.f32 %v2868, %v2898
      %v2907 = vadd.f32 %v2869, %v2898
      %v2908 = vadd.f32 %v2870, %v2898
      %v2909 = vadd.f32 %v2871, %v2898
      %v2910 = vadd.f32 %v2872, %v2898
      %v2911 = vadd.f32 %v2873, %v2898
      %v2912 = vadd.f32 %v2874, %v2898
      %v2913 = vadd.f32 %v2875, %v2898
      %v2914 = vadd.f32 %v2876, %v2898
      %v2915 = vadd.f32 %v2877, %v2898
      %v2916 = vadd.f32 %v2878, %v2898
      %v2917 = vadd.f32 %v2879, %v2898
      %v2918 = vadd.f32 %v2880, %v2898
      %v2919 = vadd.f32 %v2881, %v2898
      %v2920 = vadd.f32 %v2882, %v2898
      %v2921 = vadd.f32 %v2883, %v2898
      %v2922 = vadd.f32 %v2884, %v2898
      %v2923 = vadd.f32 %v2885, %v2898
      %v2924 = vadd.f32 %v2886, %v2898
      %v2925 = vadd.f32 %v2887, %v2898
      %v2926 = vadd.f32 %v2888, %v2898
      %v2927 = vadd.f32 %v2889, %v2898
      %v2928 = vadd.f32 %v2890, %v2898
      %v2929 = vadd.f32 %v2891, %v2898
      %v2930 = vadd.f32 %v2892, %v2898
      %v2931 = vadd.f32 %v2893, %v2898
      %v2932 = vsub.f32 0.0, %v2900
      %v2933 = vsub.f32 0.0, %v2901
      %v2934 = vsub.f32 0.0, %v2902
      %v2935 = vsub.f32 0.0, %v2903
      %v2936 = vsub.f32 0.0, %v2904
      %v2937 = vsub.f32 0.0, %v2905
      %v2938 = vsub.f32 0.0, %v2906
      %v2939 = vsub.f32 0.0, %v2907
      %v2940 = vsub.f32 0.0, %v2908
      %v2941 = vsub.f32 0.0, %v2909
      %v2942 = vsub.f32 0.0, %v2910
      %v2943 = vsub.f32 0.0, %v2911
      %v2944 = vsub.f32 0.0, %v2912
      %v2945 = vsub.f32 0.0, %v2913
      %v2946 = vsub.f32 0.0, %v2914
      %v2947 = vsub.f32 0.0, %v2915
      %v2948 = vsub.f32 0.0, %v2916
      %v2949 = vsub.f32 0.0, %v2917
      %v2950 = vsub.f32 0.0, %v2918
      %v2951 = vsub.f32 0.0, %v2919
      %v2952 = vsub.f32 0.0, %v2920
      %v2953 = vsub.f32 0.0, %v2921
      %v2954 = vsub.f32 0.0, %v2922
      %v2955 = vsub.f32 0.0, %v2923
      %v2956 = vsub.f32 0.0, %v2924
      %v2957 = vsub.f32 0.0, %v2925
      %v2958 = vsub.f32 0.0, %v2926
      %v2959 = vsub.f32 0.0, %v2927
      %v2960 = vsub.f32 0.0, %v2928
      %v2961 = vsub.f32 0.0, %v2929
      %v2962 = vsub.f32 0.0, %v2930
      %v2963 = vsub.f32 0.0, %v2931
      %v2964 = vmul.f32 %v2932, 1.442695
      %v2965 = vpow.pop %v2964
      %v2966 = vmul.f32 %v2933, 1.442695
      %v2967 = vpow.pop %v2966
      %v2968 = vmul.f32 %v2934, 1.442695
      %v2969 = vpow.pop %v2968
      %v2970 = vmul.f32 %v2935, 1.442695
      %v2971 = vpow.pop %v2970
      %v2972 = vmul.f32 %v2936, 1.442695
      %v2973 = vpow.pop %v2972
      %v2974 = vmul.f32 %v2937, 1.442695
      %v2975 = vpow.pop %v2974
      %v2976 = vmul.f32 %v2938, 1.442695
      %v2977 = vpow.pop %v2976
      %v2978 = vmul.f32 %v2939, 1.442695
      %v2979 = vpow.pop %v2978
      %v2980 = vmul.f32 %v2940, 1.442695
      %v2981 = vpow.pop %v2980
      %v2982 = vmul.f32 %v2941, 1.442695
      %v2983 = vpow.pop %v2982
      %v2984 = vmul.f32 %v2942, 1.442695
      %v2985 = vpow.pop %v2984
      %v2986 = vmul.f32 %v2943, 1.442695
      %v2987 = vpow.pop %v2986
      %v2988 = vmul.f32 %v2944, 1.442695
      %v2989 = vpow.pop %v2988
      %v2990 = vmul.f32 %v2945, 1.442695
      %v2991 = vpow.pop %v2990
      %v2992 = vmul.f32 %v2946, 1.442695
      %v2993 = vpow.pop %v2992
      %v2994 = vmul.f32 %v2947, 1.442695
      %v2995 = vpow.pop %v2994
      %v2996 = vmul.f32 %v2948, 1.442695
      %v2997 = vpow.pop %v2996
      %v2998 = vmul.f32 %v2949, 1.442695
      %v2999 = vpow.pop %v2998
      %v3000 = vmul.f32 %v2950, 1.442695
      %v3001 = vpow.pop %v3000
      %v3002 = vmul.f32 %v2951, 1.442695
      %v3003 = vpow.pop %v3002
      %v3004 = vmul.f32 %v2952, 1.442695
      %v3005 = vpow.pop %v3004
      %v3006 = vmul.f32 %v2953, 1.442695
      %v3007 = vpow.pop %v3006
      %v3008 = vmul.f32 %v2954, 1.442695
      %v3009 = vpow.pop %v3008
      %v3010 = vmul.f32 %v2955, 1.442695
      %v3011 = vpow.pop %v3010
      %v3012 = vmul.f32 %v2956, 1.442695
      %v3013 = vpow.pop %v3012
      %v3014 = vmul.f32 %v2957, 1.442695
      %v3015 = vpow.pop %v3014
      %v3016 = vmul.f32 %v2958, 1.442695
      %v3017 = vpow.pop %v3016
      %v3018 = vmul.f32 %v2959, 1.442695
      %v3019 = vpow.pop %v3018
      %v3020 = vmul.f32 %v2960, 1.442695
      %v3021 = vpow.pop %v3020
      %v3022 = vmul.f32 %v2961, 1.442695
      %v3023 = vpow.pop %v3022
      %v3024 = vmul.f32 %v2962, 1.442695
      %v3025 = vpow.pop %v3024
      %v3026 = vmul.f32 %v2963, 1.442695
      %v3027 = vpow.pop %v3026
      %v3028 = vadd.f32 %v2965, 1.0
      %v3029 = vadd.f32 %v2967, 1.0
      %v3030 = vadd.f32 %v2969, 1.0
      %v3031 = vadd.f32 %v2971, 1.0
      %v3032 = vadd.f32 %v2973, 1.0
      %v3033 = vadd.f32 %v2975, 1.0
      %v3034 = vadd.f32 %v2977, 1.0
      %v3035 = vadd.f32 %v2979, 1.0
      %v3036 = vadd.f32 %v2981, 1.0
      %v3037 = vadd.f32 %v2983, 1.0
      %v3038 = vadd.f32 %v2985, 1.0
      %v3039 = vadd.f32 %v2987, 1.0
      %v3040 = vadd.f32 %v2989, 1.0
      %v3041 = vadd.f32 %v2991, 1.0
      %v3042 = vadd.f32 %v2993, 1.0
      %v3043 = vadd.f32 %v2995, 1.0
      %v3044 = vadd.f32 %v2997, 1.0
      %v3045 = vadd.f32 %v2999, 1.0
      %v3046 = vadd.f32 %v3001, 1.0
      %v3047 = vadd.f32 %v3003, 1.0
      %v3048 = vadd.f32 %v3005, 1.0
      %v3049 = vadd.f32 %v3007, 1.0
      %v3050 = vadd.f32 %v3009, 1.0
      %v3051 = vadd.f32 %v3011, 1.0
      %v3052 = vadd.f32 %v3013, 1.0
      %v3053 = vadd.f32 %v3015, 1.0
      %v3054 = vadd.f32 %v3017, 1.0
      %v3055 = vadd.f32 %v3019, 1.0
      %v3056 = vadd.f32 %v3021, 1.0
      %v3057 = vadd.f32 %v3023, 1.0
      %v3058 = vadd.f32 %v3025, 1.0
      %v3059 = vadd.f32 %v3027, 1.0
      %v3060 = vrcp.pop %v3028
      %v3061 = vrcp.pop %v3029
      %v3062 = vrcp.pop %v3030
      %v3063 = vrcp.pop %v3031
      %v3064 = vrcp.pop %v3032
      %v3065 = vrcp.pop %v3033
      %v3066 = vrcp.pop %v3034
      %v3067 = vrcp.pop %v3035
      %v3068 = vrcp.pop %v3036
      %v3069 = vrcp.pop %v3037
      %v3070 = vrcp.pop %v3038
      %v3071 = vrcp.pop %v3039
      %v3072 = vrcp.pop %v3040
      %v3073 = vrcp.pop %v3041
      %v3074 = vrcp.pop %v3042
      %v3075 = vrcp.pop %v3043
      %v3076 = vrcp.pop %v3044
      %v3077 = vrcp.pop %v3045
      %v3078 = vrcp.pop %v3046
      %v3079 = vrcp.pop %v3047
      %v3080 = vrcp.pop %v3048
      %v3081 = vrcp.pop %v3049
      %v3082 = vrcp.pop %v3050
      %v3083 = vrcp.pop %v3051
      %v3084 = vrcp.pop %v3052
      %v3085 = vrcp.pop %v3053
      %v3086 = vrcp.pop %v3054
      %v3087 = vrcp.pop %v3055
      %v3088 = vrcp.pop %v3056
      %v3089 = vrcp.pop %v3057
      %v3090 = vrcp.pop %v3058
      %v3091 = vrcp.pop %v3059
      %v3092 = vmul.f32 %v2900, %v3060
      %v3093 = vmul.f32 %v2901, %v3061
      %v3094 = vmul.f32 %v2902, %v3062
      %v3095 = vmul.f32 %v2903, %v3063
      %v3096 = vmul.f32 %v2904, %v3064
      %v3097 = vmul.f32 %v2905, %v3065
      %v3098 = vmul.f32 %v2906, %v3066
      %v3099 = vmul.f32 %v2907, %v3067
      %v3100 = vmul.f32 %v2908, %v3068
      %v3101 = vmul.f32 %v2909, %v3069
      %v3102 = vmul.f32 %v2910, %v3070
      %v3103 = vmul.f32 %v2911, %v3071
      %v3104 = vmul.f32 %v2912, %v3072
      %v3105 = vmul.f32 %v2913, %v3073
      %v3106 = vmul.f32 %v2914, %v3074
      %v3107 = vmul.f32 %v2915, %v3075
      %v3108 = vmul.f32 %v2916, %v3076
      %v3109 = vmul.f32 %v2917, %v3077
      %v3110 = vmul.f32 %v2918, %v3078
      %v3111 = vmul.f32 %v2919, %v3079
      %v3112 = vmul.f32 %v2920, %v3080
      %v3113 = vmul.f32 %v2921, %v3081
      %v3114 = vmul.f32 %v2922, %v3082
      %v3115 = vmul.f32 %v2923, %v3083
      %v3116 = vmul.f32 %v2924, %v3084
      %v3117 = vmul.f32 %v2925, %v3085
      %v3118 = vmul.f32 %v2926, %v3086
      %v3119 = vmul.f32 %v2927, %v3087
      %v3120 = vmul.f32 %v2928, %v3088
      %v3121 = vmul.f32 %v2929, %v3089
      %v3122 = vmul.f32 %v2930, %v3090
      %v3123 = vmul.f32 %v2931, %v3091
      %v3124 = vld [vmem:[%s10] sm:$0x1]
      %v3157 = vrot.slane %v3092, 7
      %v3158 = vsel %vm1011, %v1012, %v3157
      %v3159 = vrot.slane %v3093, 7
      %v3160 = vsel %vm1011, %v3157, %v3159
      %v3161 = vrot.slane %v3094, 7
      %v3162 = vsel %vm1011, %v3159, %v3161
      %v3163 = vrot.slane %v3095, 7
      %v3164 = vsel %vm1011, %v3161, %v3163
      %v3165 = vrot.slane %v3096, 7
      %v3166 = vsel %vm1011, %v3163, %v3165
      %v3167 = vrot.slane %v3097, 7
      %v3168 = vsel %vm1011, %v3165, %v3167
      %v3169 = vrot.slane %v3098, 7
      %v3170 = vsel %vm1011, %v3167, %v3169
      %v3171 = vrot.slane %v3099, 7
      %v3172 = vsel %vm1011, %v3169, %v3171
      %v3173 = vrot.slane %v3100, 7
      %v3174 = vsel %vm1011, %v3171, %v3173
      %v3175 = vrot.slane %v3101, 7
      %v3176 = vsel %vm1011, %v3173, %v3175
      %v3177 = vrot.slane %v3102, 7
      %v3178 = vsel %vm1011, %v3175, %v3177
      %v3179 = vrot.slane %v3103, 7
      %v3180 = vsel %vm1011, %v3177, %v3179
      %v3181 = vrot.slane %v3104, 7
      %v3182 = vsel %vm1011, %v3179, %v3181
      %v3183 = vrot.slane %v3105, 7
      %v3184 = vsel %vm1011, %v3181, %v3183
      %v3185 = vrot.slane %v3106, 7
      %v3186 = vsel %vm1011, %v3183, %v3185
      %v3187 = vrot.slane %v3107, 7
      %v3188 = vsel %vm1011, %v3185, %v3187
      %v3189 = vrot.slane %v3108, 7
      %v3190 = vsel %vm1011, %v3187, %v3189
      %v3191 = vrot.slane %v3109, 7
      %v3192 = vsel %vm1011, %v3189, %v3191
      %v3193 = vrot.slane %v3110, 7
      %v3194 = vsel %vm1011, %v3191, %v3193
      %v3195 = vrot.slane %v3111, 7
      %v3196 = vsel %vm1011, %v3193, %v3195
      %v3197 = vrot.slane %v3112, 7
      %v3198 = vsel %vm1011, %v3195, %v3197
      %v3199 = vrot.slane %v3113, 7
      %v3200 = vsel %vm1011, %v3197, %v3199
      %v3201 = vrot.slane %v3114, 7
      %v3202 = vsel %vm1011, %v3199, %v3201
      %v3203 = vrot.slane %v3115, 7
      %v3204 = vsel %vm1011, %v3201, %v3203
      %v3205 = vrot.slane %v3116, 7
      %v3206 = vsel %vm1011, %v3203, %v3205
      %v3207 = vrot.slane %v3117, 7
      %v3208 = vsel %vm1011, %v3205, %v3207
      %v3209 = vrot.slane %v3118, 7
      %v3210 = vsel %vm1011, %v3207, %v3209
      %v3211 = vrot.slane %v3119, 7
      %v3212 = vsel %vm1011, %v3209, %v3211
      %v3213 = vrot.slane %v3120, 7
      %v3214 = vsel %vm1011, %v3211, %v3213
      %v3215 = vrot.slane %v3121, 7
      %v3216 = vsel %vm1011, %v3213, %v3215
      %v3217 = vrot.slane %v3122, 7
      %v3218 = vsel %vm1011, %v3215, %v3217
      %v3219 = vrot.slane %v3123, 7
      %v3220 = vsel %vm1011, %v3217, %v3219
      %v3221 = vsel %vm1011, %v3219, %v1012
      %v3255 = vsel %vm452, %v3158, 0.0
      %v3256 = vsel %vm453, %v3160, 0.0
      %v3257 = vsel %vm452, %v3162, 0.0
      %v3258 = vsel %vm453, %v3164, 0.0
      %v3259 = vsel %vm452, %v3166, 0.0
      %v3260 = vsel %vm453, %v3168, 0.0
      %v3261 = vsel %vm452, %v3170, 0.0
      %v3262 = vsel %vm453, %v3172, 0.0
      %v3263 = vsel %vm452, %v3174, 0.0
      %v3264 = vsel %vm453, %v3176, 0.0
      %v3265 = vsel %vm452, %v3178, 0.0
      %v3266 = vsel %vm453, %v3180, 0.0
      %v3267 = vsel %vm452, %v3182, 0.0
      %v3268 = vsel %vm453, %v3184, 0.0
      %v3269 = vsel %vm452, %v3186, 0.0
      %v3270 = vsel %vm453, %v3188, 0.0
      %v3271 = vsel %vm452, %v3190, 0.0
      %v3272 = vsel %vm453, %v3192, 0.0
      %v3273 = vsel %vm452, %v3194, 0.0
      %v3274 = vsel %vm453, %v3196, 0.0
      %v3275 = vsel %vm452, %v3198, 0.0
      %v3276 = vsel %vm453, %v3200, 0.0
      %v3277 = vsel %vm452, %v3202, 0.0
      %v3278 = vsel %vm453, %v3204, 0.0
      %v3279 = vsel %vm452, %v3206, 0.0
      %v3280 = vsel %vm453, %v3208, 0.0
      %v3281 = vsel %vm452, %v3210, 0.0
      %v3282 = vsel %vm453, %v3212, 0.0
      %v3283 = vsel %vm452, %v3214, 0.0
      %v3284 = vsel %vm453, %v3216, 0.0
      %v3285 = vsel %vm452, %v3218, 0.0
      %v3286 = vsel %vm453, %v3220, 0.0
      %v3287 = vsel %vm452, %v3221, 0.0
      %v3288 = vrot.slane %v3092, 1
      %v3289 = vsel %vm1150, %v1151, %v3288
      %v3290 = vrot.slane %v3093, 1
      %v3291 = vsel %vm1150, %v3288, %v3290
      %v3292 = vrot.slane %v3094, 1
      %v3293 = vsel %vm1150, %v3290, %v3292
      %v3294 = vrot.slane %v3095, 1
      %v3295 = vsel %vm1150, %v3292, %v3294
      %v3296 = vrot.slane %v3096, 1
      %v3297 = vsel %vm1150, %v3294, %v3296
      %v3298 = vrot.slane %v3097, 1
      %v3299 = vsel %vm1150, %v3296, %v3298
      %v3300 = vrot.slane %v3098, 1
      %v3301 = vsel %vm1150, %v3298, %v3300
      %v3302 = vrot.slane %v3099, 1
      %v3303 = vsel %vm1150, %v3300, %v3302
      %v3304 = vrot.slane %v3100, 1
      %v3305 = vsel %vm1150, %v3302, %v3304
      %v3306 = vrot.slane %v3101, 1
      %v3307 = vsel %vm1150, %v3304, %v3306
      %v3308 = vrot.slane %v3102, 1
      %v3309 = vsel %vm1150, %v3306, %v3308
      %v3310 = vrot.slane %v3103, 1
      %v3311 = vsel %vm1150, %v3308, %v3310
      %v3312 = vrot.slane %v3104, 1
      %v3313 = vsel %vm1150, %v3310, %v3312
      %v3314 = vrot.slane %v3105, 1
      %v3315 = vsel %vm1150, %v3312, %v3314
      %v3316 = vrot.slane %v3106, 1
      %v3317 = vsel %vm1150, %v3314, %v3316
      %v3318 = vrot.slane %v3107, 1
      %v3319 = vsel %vm1150, %v3316, %v3318
      %v3320 = vrot.slane %v3108, 1
      %v3321 = vsel %vm1150, %v3318, %v3320
      %v3322 = vrot.slane %v3109, 1
      %v3323 = vsel %vm1150, %v3320, %v3322
      %v3324 = vrot.slane %v3110, 1
      %v3325 = vsel %vm1150, %v3322, %v3324
      %v3326 = vrot.slane %v3111, 1
      %v3327 = vsel %vm1150, %v3324, %v3326
      %v3328 = vrot.slane %v3112, 1
      %v3329 = vsel %vm1150, %v3326, %v3328
      %v3330 = vrot.slane %v3113, 1
      %v3331 = vsel %vm1150, %v3328, %v3330
      %v3332 = vrot.slane %v3114, 1
      %v3333 = vsel %vm1150, %v3330, %v3332
      %v3334 = vrot.slane %v3115, 1
      %v3335 = vsel %vm1150, %v3332, %v3334
      %v3336 = vrot.slane %v3116, 1
      %v3337 = vsel %vm1150, %v3334, %v3336
      %v3338 = vrot.slane %v3117, 1
      %v3339 = vsel %vm1150, %v3336, %v3338
      %v3340 = vrot.slane %v3118, 1
      %v3341 = vsel %vm1150, %v3338, %v3340
      %v3342 = vrot.slane %v3119, 1
      %v3343 = vsel %vm1150, %v3340, %v3342
      %v3344 = vrot.slane %v3120, 1
      %v3345 = vsel %vm1150, %v3342, %v3344
      %v3346 = vrot.slane %v3121, 1
      %v3347 = vsel %vm1150, %v3344, %v3346
      %v3348 = vrot.slane %v3122, 1
      %v3349 = vsel %vm1150, %v3346, %v3348
      %v3350 = vrot.slane %v3123, 1
      %v3351 = vsel %vm1150, %v3348, %v3350
      %v3352 = vsel %vm1150, %v3350, %v1151
      %v3386 = vsel %vm455, %v3289, 0.0
      %v3387 = vsel %vm454, %v3291, 0.0
      %v3388 = vsel %vm455, %v3293, 0.0
      %v3389 = vsel %vm454, %v3295, 0.0
      %v3390 = vsel %vm455, %v3297, 0.0
      %v3391 = vsel %vm454, %v3299, 0.0
      %v3392 = vsel %vm455, %v3301, 0.0
      %v3393 = vsel %vm454, %v3303, 0.0
      %v3394 = vsel %vm455, %v3305, 0.0
      %v3395 = vsel %vm454, %v3307, 0.0
      %v3396 = vsel %vm455, %v3309, 0.0
      %v3397 = vsel %vm454, %v3311, 0.0
      %v3398 = vsel %vm455, %v3313, 0.0
      %v3399 = vsel %vm454, %v3315, 0.0
      %v3400 = vsel %vm455, %v3317, 0.0
      %v3401 = vsel %vm454, %v3319, 0.0
      %v3402 = vsel %vm455, %v3321, 0.0
      %v3403 = vsel %vm454, %v3323, 0.0
      %v3404 = vsel %vm455, %v3325, 0.0
      %v3405 = vsel %vm454, %v3327, 0.0
      %v3406 = vsel %vm455, %v3329, 0.0
      %v3407 = vsel %vm454, %v3331, 0.0
      %v3408 = vsel %vm455, %v3333, 0.0
      %v3409 = vsel %vm454, %v3335, 0.0
      %v3410 = vsel %vm455, %v3337, 0.0
      %v3411 = vsel %vm454, %v3339, 0.0
      %v3412 = vsel %vm455, %v3341, 0.0
      %v3413 = vsel %vm454, %v3343, 0.0
      %v3414 = vsel %vm455, %v3345, 0.0
      %v3415 = vsel %vm454, %v3347, 0.0
      %v3416 = vsel %vm455, %v3349, 0.0
      %v3417 = vsel %vm454, %v3351, 0.0
      %v3418 = vsel %vm455, %v3352, 0.0
      %v3419 = vld [vmem:[%s9] sm:$0xff]
      %v3420 = vld [vmem:[%s9 + $0x8] sm:$0xff]
      %v3421 = vld [vmem:[%s9 + $0x10] sm:$0xff]
      %v3422 = vld [vmem:[%s9 + $0x18] sm:$0xff]
      %v3423 = vld [vmem:[%s9 + $0x20] sm:$0xff]
      %v3424 = vld [vmem:[%s9 + $0x28] sm:$0xff]
      %v3425 = vld [vmem:[%s9 + $0x30] sm:$0xff]
      %v3426 = vld [vmem:[%s9 + $0x38] sm:$0xff]
      %v3427 = vld [vmem:[%s9 + $0x40] sm:$0xff]
      %v3428 = vld [vmem:[%s9 + $0x48] sm:$0xff]
      %v3429 = vld [vmem:[%s9 + $0x50] sm:$0xff]
      %v3430 = vld [vmem:[%s9 + $0x58] sm:$0xff]
      %v3431 = vld [vmem:[%s9 + $0x60] sm:$0xff]
      %v3432 = vld [vmem:[%s9 + $0x68] sm:$0xff]
      %v3433 = vld [vmem:[%s9 + $0x70] sm:$0xff]
      %v3434 = vld [vmem:[%s9 + $0x78] sm:$0xff]
      %v3435 = vld [vmem:[%s9 + $0x80] sm:$0xff]
      %v3436 = vld [vmem:[%s9 + $0x88] sm:$0xff]
      %v3437 = vld [vmem:[%s9 + $0x90] sm:$0xff]
      %v3438 = vld [vmem:[%s9 + $0x98] sm:$0xff]
      %v3439 = vld [vmem:[%s9 + $0xa0] sm:$0xff]
      %v3440 = vld [vmem:[%s9 + $0xa8] sm:$0xff]
      %v3441 = vld [vmem:[%s9 + $0xb0] sm:$0xff]
      %v3442 = vld [vmem:[%s9 + $0xb8] sm:$0xff]
      %v3443 = vld [vmem:[%s9 + $0xc0] sm:$0xff]
      %v3444 = vld [vmem:[%s9 + $0xc8] sm:$0xff]
      %v3445 = vld [vmem:[%s9 + $0xd0] sm:$0xff]
      %v3446 = vld [vmem:[%s9 + $0xd8] sm:$0xff]
      %v3447 = vld [vmem:[%s9 + $0xe0] sm:$0xff]
      %v3448 = vld [vmem:[%s9 + $0xe8] sm:$0xff]
      %v3449 = vld [vmem:[%s9 + $0xf0] sm:$0xff]
      %v3450 = vld [vmem:[%s9 + $0xf8] sm:$0xff]
      %v3451 = vld [vmem:[%s9 + $0x100] sm:$0xff]
      %v3452 = vld [vmem:[%s9 + $0x108] sm:$0xff]
      %v3453 = vld [vmem:[%s9 + $0x110] sm:$0xff]
      %v3454 = vld [vmem:[%s9 + $0x118] sm:$0xff]
      %v3455 = vld [vmem:[%s9 + $0x120] sm:$0xff]
      %v3456 = vld [vmem:[%s9 + $0x128] sm:$0xff]
      %v3457 = vld [vmem:[%s9 + $0x130] sm:$0xff]
      %v3458 = vld [vmem:[%s9 + $0x138] sm:$0xff]
      %v3459 = vld [vmem:[%s9 + $0x140] sm:$0xff]
      %v3460 = vld [vmem:[%s9 + $0x148] sm:$0xff]
      %v3461 = vld [vmem:[%s9 + $0x150] sm:$0xff]
      %v3462 = vld [vmem:[%s9 + $0x158] sm:$0xff]
      %v3463 = vld [vmem:[%s9 + $0x160] sm:$0xff]
      %v3464 = vld [vmem:[%s9 + $0x168] sm:$0xff]
      %v3465 = vld [vmem:[%s9 + $0x170] sm:$0xff]
      %v3466 = vld [vmem:[%s9 + $0x178] sm:$0xff]
      %v3467 = vld [vmem:[%s9 + $0x180] sm:$0xff]
      %v3468 = vld [vmem:[%s9 + $0x188] sm:$0xff]
      %v3469 = vld [vmem:[%s9 + $0x190] sm:$0xff]
      %v3470 = vld [vmem:[%s9 + $0x198] sm:$0xff]
      %v3471 = vld [vmem:[%s9 + $0x1a0] sm:$0xff]
      %v3472 = vld [vmem:[%s9 + $0x1a8] sm:$0xff]
      %v3473 = vld [vmem:[%s9 + $0x1b0] sm:$0xff]
      %v3474 = vld [vmem:[%s9 + $0x1b8] sm:$0xff]
      %v3475 = vld [vmem:[%s9 + $0x1c0] sm:$0xff]
      %v3476 = vld [vmem:[%s9 + $0x1c8] sm:$0xff]
      %v3477 = vld [vmem:[%s9 + $0x1d0] sm:$0xff]
      %v3478 = vld [vmem:[%s9 + $0x1d8] sm:$0xff]
      %v3479 = vld [vmem:[%s9 + $0x1e0] sm:$0xff]
      %v3480 = vld [vmem:[%s9 + $0x1e8] sm:$0xff]
      %v3481 = vld [vmem:[%s9 + $0x1f0] sm:$0xff]
      %v3482 = vld [vmem:[%s9 + $0x1f8] sm:$0xff]
      %v3483 = vld [vmem:[%s9 + $0x200] sm:$0xff]
      %v3484 = vld [vmem:[%s9 + $0x208] sm:$0xff]
      %v3485 = vld [vmem:[%s9 + $0x210] sm:$0xff]
      %v3486 = vld [vmem:[%s9 + $0x218] sm:$0xff]
      %v3487 = vld [vmem:[%s9 + $0x220] sm:$0xff]
      %v3488 = vld [vmem:[%s9 + $0x228] sm:$0xff]
      %v3489 = vld [vmem:[%s9 + $0x230] sm:$0xff]
      %v3490 = vld [vmem:[%s9 + $0x238] sm:$0xff]
      %v3491 = vld [vmem:[%s9 + $0x240] sm:$0xff]
      %v3492 = vld [vmem:[%s9 + $0x248] sm:$0xff]
      %v3493 = vld [vmem:[%s9 + $0x250] sm:$0xff]
      %v3494 = vld [vmem:[%s9 + $0x258] sm:$0xff]
      %v3495 = vld [vmem:[%s9 + $0x260] sm:$0xff]
      %v3496 = vld [vmem:[%s9 + $0x268] sm:$0xff]
      %v3497 = vld [vmem:[%s9 + $0x270] sm:$0xff]
      %v3498 = vld [vmem:[%s9 + $0x278] sm:$0xff]
      %v3499 = vld [vmem:[%s9 + $0x280] sm:$0xff]
      %v3500 = vld [vmem:[%s9 + $0x288] sm:$0xff]
      %v3501 = vld [vmem:[%s9 + $0x290] sm:$0xff]
      %v3502 = vld [vmem:[%s9 + $0x298] sm:$0xff]
      %v3503 = vld [vmem:[%s9 + $0x2a0] sm:$0xff]
      %v3504 = vld [vmem:[%s9 + $0x2a8] sm:$0xff]
      %v3505 = vld [vmem:[%s9 + $0x2b0] sm:$0xff]
      %v3506 = vld [vmem:[%s9 + $0x2b8] sm:$0xff]
      %v3507 = vld [vmem:[%s9 + $0x2c0] sm:$0xff]
      %v3508 = vld [vmem:[%s9 + $0x2c8] sm:$0xff]
      %v3509 = vld [vmem:[%s9 + $0x2d0] sm:$0xff]
      %v3510 = vld [vmem:[%s9 + $0x2d8] sm:$0xff]
      %v3511 = vld [vmem:[%s9 + $0x2e0] sm:$0xff]
      %v3512 = vld [vmem:[%s9 + $0x2e8] sm:$0xff]
      %v3513 = vld [vmem:[%s9 + $0x2f0] sm:$0xff]
      %v3514 = vld [vmem:[%s9 + $0x2f8] sm:$0xff]
      %v3515 = vld [vmem:[%s9 + $0x300] sm:$0xff]
      %v3516 = vld [vmem:[%s9 + $0x308] sm:$0xff]
      %v3517 = vld [vmem:[%s9 + $0x310] sm:$0xff]
      %v3518 = vld [vmem:[%s9 + $0x318] sm:$0xff]
      %v3519 = vld [vmem:[%s9 + $0x320] sm:$0xff]
      %v3520 = vld [vmem:[%s9 + $0x328] sm:$0xff]
      %v3521 = vld [vmem:[%s9 + $0x330] sm:$0xff]
      %v3522 = vld [vmem:[%s9 + $0x338] sm:$0xff]
      %v3523 = vld [vmem:[%s9 + $0x340] sm:$0xff]
      %v3524 = vld [vmem:[%s9 + $0x348] sm:$0xff]
      %v3525 = vld [vmem:[%s9 + $0x350] sm:$0xff]
      %v3526 = vld [vmem:[%s9 + $0x358] sm:$0xff]
      %v3527 = vld [vmem:[%s9 + $0x360] sm:$0xff]
      %v3528 = vld [vmem:[%s9 + $0x368] sm:$0xff]
      %v3529 = vld [vmem:[%s9 + $0x370] sm:$0xff]
      %v3530 = vld [vmem:[%s9 + $0x378] sm:$0xff]
      %v3531 = vld [vmem:[%s9 + $0x380] sm:$0xff]
      %v3532 = vld [vmem:[%s9 + $0x388] sm:$0xff]
      %v3533 = vld [vmem:[%s9 + $0x390] sm:$0xff]
      %v3534 = vld [vmem:[%s9 + $0x398] sm:$0xff]
      %v3535 = vld [vmem:[%s9 + $0x3a0] sm:$0xff]
      %v3536 = vld [vmem:[%s9 + $0x3a8] sm:$0xff]
      %v3537 = vld [vmem:[%s9 + $0x3b0] sm:$0xff]
      %v3538 = vld [vmem:[%s9 + $0x3b8] sm:$0xff]
      %v3539 = vld [vmem:[%s9 + $0x3c0] sm:$0xff]
      %v3540 = vld [vmem:[%s9 + $0x3c8] sm:$0xff]
      %v3541 = vld [vmem:[%s9 + $0x3d0] sm:$0xff]
      %v3542 = vld [vmem:[%s9 + $0x3d8] sm:$0xff]
      %v3543 = vld [vmem:[%s9 + $0x3e0] sm:$0xff]
      %v3544 = vld [vmem:[%s9 + $0x3e8] sm:$0xff]
      %v3545 = vld [vmem:[%s9 + $0x3f0] sm:$0xff]
      %v3546 = vld [vmem:[%s9 + $0x3f8] sm:$0xff]
      %v3547 = vld [vmem:[%s9 + $0x400] sm:$0xff]
      %v3548 = vld [vmem:[%s9 + $0x408] sm:$0xff]
      %v3549 = vld [vmem:[%s9 + $0x410] sm:$0xff]
      %v3550 = vld [vmem:[%s9 + $0x418] sm:$0xff]
      %v3551 = vld [vmem:[%s9 + $0x420] sm:$0xff]
      %v3552 = vld [vmem:[%s9 + $0x428] sm:$0xff]
      %v3553 = vld [vmem:[%s9 + $0x430] sm:$0xff]
      %v3554 = vld [vmem:[%s9 + $0x438] sm:$0xff]
      %v3555 = vld [vmem:[%s9 + $0x440] sm:$0xff]
      %v3556 = vld [vmem:[%s9 + $0x448] sm:$0xff]
      %v3557 = vld [vmem:[%s9 + $0x450] sm:$0xff]
      %v3558 = vld [vmem:[%s9 + $0x458] sm:$0xff]
      %v3559 = vld [vmem:[%s9 + $0x460] sm:$0xff]
      %v3560 = vld [vmem:[%s9 + $0x468] sm:$0xff]
      %v3561 = vld [vmem:[%s9 + $0x470] sm:$0xff]
      %v3562 = vld [vmem:[%s9 + $0x478] sm:$0xff]
      %v3564 = vlaneseq
      %v3565 = vshrl.u32 %v3564, 7
      %v3566 = vsub.s32 0, %v3565
      %v3567 = vrot.slane %v3124, %v3566
      %3569 = vmatprep.subr.mxu0 0.0
      %3570 = vmatpush1.msra.mxu0 %v3419
      %3571 = vmatprep.subr.mxu0 0.0
      %3572 = vmatpush1.msra.mxu0 %v3420
      %3573 = vmatprep.subr.mxu0 0.0
      %3574 = vmatpush1.msra.mxu0 %v3421
      %3575 = vmatprep.subr.mxu0 0.0
      %3576 = vmatpush1.msra.mxu0 %v3422
      %3577 = vmatprep.subr.mxu0 0.0
      %3578 = vmatpush1.msra.mxu0 %v3423
      %3579 = vmatprep.subr.mxu0 0.0
      %3580 = vmatpush1.msra.mxu0 %v3424
      %3581 = vmatprep.subr.mxu0 0.0
      %3582 = vmatpush1.msra.mxu0 %v3425
      %3583 = vmatprep.subr.mxu0 0.0
      %3584 = vmatpush1.msra.mxu0 %v3426
      %3585 = vmatprep.subr.mxu0 0.0
      %3586 = vmatpush1.msra.mxu0 %v3427
      %3587 = vmatprep.subr.mxu0 0.0
      %3588 = vmatpush1.msra.mxu0 %v3428
      %3589 = vmatprep.subr.mxu0 0.0
      %3590 = vmatpush1.msra.mxu0 %v3429
      %3591 = vmatprep.subr.mxu0 0.0
      %3592 = vmatpush1.msra.mxu0 %v3430
      %3593 = vmatprep.subr.mxu0 0.0
      %3594 = vmatpush1.msra.mxu0 %v3431
      %3595 = vmatprep.subr.mxu0 0.0
      %3596 = vmatpush1.msra.mxu0 %v3432
      %3597 = vmatprep.subr.mxu0 0.0
      %3598 = vmatpush1.msra.mxu0 %v3433
      %3599 = vmatprep.subr.mxu0 0.0
      %3600 = vmatpush1.msra.mxu0 %v3434
      %3601 = vmatprep.subr.mxu0 0.0
      %3602 = vmatpush1.msra.mxu0 %v3435
      %3603 = vmatprep.subr.mxu0 0.0
      %3604 = vmatpush1.msra.mxu0 %v3436
      %3605 = vmatprep.subr.mxu0 0.0
      %3606 = vmatpush1.msra.mxu0 %v3437
      %3607 = vmatprep.subr.mxu0 0.0
      %3608 = vmatpush1.msra.mxu0 %v3438
      %3609 = vmatprep.subr.mxu0 0.0
      %3610 = vmatpush1.msra.mxu0 %v3439
      %3611 = vmatprep.subr.mxu0 0.0
      %3612 = vmatpush1.msra.mxu0 %v3440
      %3613 = vmatprep.subr.mxu0 0.0
      %3614 = vmatpush1.msra.mxu0 %v3441
      %3615 = vmatprep.subr.mxu0 0.0
      %3616 = vmatpush1.msra.mxu0 %v3442
      %3617 = vmatprep.subr.mxu0 0.0
      %3618 = vmatpush1.msra.mxu0 %v3443
      %3619 = vmatprep.subr.mxu0 0.0
      %3620 = vmatpush1.msra.mxu0 %v3444
      %3621 = vmatprep.subr.mxu0 0.0
      %3622 = vmatpush1.msra.mxu0 %v3445
      %3623 = vmatprep.subr.mxu0 0.0
      %3624 = vmatpush1.msra.mxu0 %v3446
      %3625 = vmatprep.subr.mxu0 0.0
      %3626 = vmatpush1.msra.mxu0 %v3447
      %3627 = vmatprep.subr.mxu0 0.0
      %3628 = vmatpush1.msra.mxu0 %v3448
      %3629 = vmatprep.subr.mxu0 0.0
      %3630 = vmatpush1.msra.mxu0 %v3449
      %3631 = vmatprep.subr.mxu0 0.0
      %3632 = vmatpush1.msra.mxu0 %v3450
      %3633 = vmatprep.mubr.f32.mxu0 0.0
      %3634 = vmatmul.mubr.f32.gmra.mrb[0].mxu0 %v1115
      %v3635 = vpop.f32.mrb[0].mxu0
      %v3636 = vadd.f32 %v3567, %v3635
      %v3637 = vpop.f32.mrb[0].mxu0
      %3638 = vmatprep.mubr.f32.mxu0 0.0
      %3639 = vmatmul.mubr.f32.gmra.mrb[0].mxu0 %v1116
      %v3640 = vpop.f32.mrb[0].mxu0
      %v3641 = vadd.f32 %v3567, %v3640
      %v3642 = vpop.f32.mrb[0].mxu0
      %3643 = vmatprep.mubr.f32.mxu0 %v3092
      %3644 = vmatmul.mubr.f32.gmra.mrb[0].mxu0 %v3255
      %v3645 = vpop.f32.mrb[0].mxu0
      %v3646 = vadd.f32 %v3567, %v3645
      %v3647 = vpop.f32.mrb[0].mxu0
      %3648 = vmatprep.mubr.f32.mxu0 %v3093
      %3649 = vmatmul.mubr.f32.gmra.mrb[0].mxu0 %v3256
      %v3650 = vpop.f32.mrb[0].mxu0
      %v3651 = vadd.f32 %v3567, %v3650
      %v3652 = vpop.f32.mrb[0].mxu0
      %3653 = vmatprep.mubr.f32.mxu0 %v3094
      %3654 = vmatmul.mubr.f32.gmra.mrb[0].mxu0 %v3257
      %v3655 = vpop.f32.mrb[0].mxu0
      %v3656 = vadd.f32 %v3567, %v3655
      %v3657 = vpop.f32.mrb[0].mxu0
      %3658 = vmatprep.mubr.f32.mxu0 %v3095
      %3659 = vmatmul.mubr.f32.gmra.mrb[0].mxu0 %v3258
      %v3660 = vpop.f32.mrb[0].mxu0
      %v3661 = vadd.f32 %v3567, %v3660
      %v3662 = vpop.f32.mrb[0].mxu0
      %3663 = vmatprep.mubr.f32.mxu0 %v3096
      %3664 = vmatmul.mubr.f32.gmra.mrb[0].mxu0 %v3259
      %v3665 = vpop.f32.mrb[0].mxu0
      %v3666 = vadd.f32 %v3567, %v3665
      %v3667 = vpop.f32.mrb[0].mxu0
      %3668 = vmatprep.mubr.f32.mxu0 %v3097
      %3669 = vmatmul.mubr.f32.gmra.mrb[0].mxu0 %v3260
      %v3670 = vpop.f32.mrb[0].mxu0
      %v3671 = vadd.f32 %v3567, %v3670
      %v3672 = vpop.f32.mrb[0].mxu0
      %3673 = vmatprep.mubr.f32.mxu0 %v3098
      %3674 = vmatmul.mubr.f32.gmra.mrb[0].mxu0 %v3261
      %v3675 = vpop.f32.mrb[0].mxu0
      %v3676 = vadd.f32 %v3567, %v3675
      %v3677 = vpop.f32.mrb[0].mxu0
      %3678 = vmatprep.mubr.f32.mxu0 %v3099
      %3679 = vmatmul.mubr.f32.gmra.mrb[0].mxu0 %v3262
      %v3680 = vpop.f32.mrb[0].mxu0
      %v3681 = vadd.f32 %v3567, %v3680
      %v3682 = vpop.f32.mrb[0].mxu0
      %3683 = vmatprep.mubr.f32.mxu0 %v3100
      %3684 = vmatmul.mubr.f32.gmra.mrb[0].mxu0 %v3263
      %v3685 = vpop.f32.mrb[0].mxu0
      %v3686 = vadd.f32 %v3567, %v3685
      %v3687 = vpop.f32.mrb[0].mxu0
      %3688 = vmatprep.mubr.f32.mxu0 %v3101
      %3689 = vmatmul.mubr.f32.gmra.mrb[0].mxu0 %v3264
      %v3690 = vpop.f32.mrb[0].mxu0
      %v3691 = vadd.f32 %v3567, %v3690
      %v3692 = vpop.f32.mrb[0].mxu0
      %3693 = vmatprep.mubr.f32.mxu0 %v3102
      %3694 = vmatmul.mubr.f32.gmra.mrb[0].mxu0 %v3265
      %v3695 = vpop.f32.mrb[0].mxu0
      %v3696 = vadd.f32 %v3567, %v3695
      %v3697 = vpop.f32.mrb[0].mxu0
      %3698 = vmatprep.mubr.f32.mxu0 %v3103
      %3699 = vmatmul.mubr.f32.gmra.mrb[0].mxu0 %v3266
      %v3700 = vpop.f32.mrb[0].mxu0
      %v3701 = vadd.f32 %v3567, %v3700
      %v3702 = vpop.f32.mrb[0].mxu0
      %3703 = vmatprep.mubr.f32.mxu0 %v3104
      %3704 = vmatmul.mubr.f32.gmra.mrb[0].mxu0 %v3267
      %v3705 = vpop.f32.mrb[0].mxu0
      %v3706 = vadd.f32 %v3567, %v3705
      %v3707 = vpop.f32.mrb[0].mxu0
      %3708 = vmatprep.mubr.f32.mxu0 %v3105
      %3709 = vmatmul.mubr.f32.gmra.mrb[0].mxu0 %v3268
      %v3710 = vpop.f32.mrb[0].mxu0
      %v3711 = vadd.f32 %v3567, %v3710
      %v3712 = vpop.f32.mrb[0].mxu0
      %3713 = vmatprep.mubr.f32.mxu0 %v3106
      %3714 = vmatmul.mubr.f32.gmra.mrb[0].mxu0 %v3269
      %v3715 = vpop.f32.mrb[0].mxu0
      %v3716 = vadd.f32 %v3567, %v3715
      %v3717 = vpop.f32.mrb[0].mxu0
      %3718 = vmatprep.mubr.f32.mxu0 %v3107
      %3719 = vmatmul.mubr.f32.gmra.mrb[0].mxu0 %v3270
      %v3720 = vpop.f32.mrb[0].mxu0
      %v3721 = vadd.f32 %v3567, %v3720
      %v3722 = vpop.f32.mrb[0].mxu0
      %3723 = vmatprep.mubr.f32.mxu0 %v3108
      %3724 = vmatmul.mubr.f32.gmra.mrb[0].mxu0 %v3271
      %v3725 = vpop.f32.mrb[0].mxu0
      %v3726 = vadd.f32 %v3567, %v3725
      %v3727 = vpop.f32.mrb[0].mxu0
      %3728 = vmatprep.mubr.f32.mxu0 %v3109
      %3729 = vmatmul.mubr.f32.gmra.mrb[0].mxu0 %v3272
      %v3730 = vpop.f32.mrb[0].mxu0
      %v3731 = vadd.f32 %v3567, %v3730
      %v3732 = vpop.f32.mrb[0].mxu0
      %3733 = vmatprep.mubr.f32.mxu0 %v3110
      %3734 = vmatmul.mubr.f32.gmra.mrb[0].mxu0 %v3273
      %v3735 = vpop.f32.mrb[0].mxu0
      %v3736 = vadd.f32 %v3567, %v3735
      %v3737 = vpop.f32.mrb[0].mxu0
      %3738 = vmatprep.mubr.f32.mxu0 %v3111
      %3739 = vmatmul.mubr.f32.gmra.mrb[0].mxu0 %v3274
      %v3740 = vpop.f32.mrb[0].mxu0
      %v3741 = vadd.f32 %v3567, %v3740
      %v3742 = vpop.f32.mrb[0].mxu0
      %3743 = vmatprep.mubr.f32.mxu0 %v3112
      %3744 = vmatmul.mubr.f32.gmra.mrb[0].mxu0 %v3275
      %v3745 = vpop.f32.mrb[0].mxu0
      %v3746 = vadd.f32 %v3567, %v3745
      %v3747 = vpop.f32.mrb[0].mxu0
      %3748 = vmatprep.mubr.f32.mxu0 %v3113
      %3749 = vmatmul.mubr.f32.gmra.mrb[0].mxu0 %v3276
      %v3750 = vpop.f32.mrb[0].mxu0
      %v3751 = vadd.f32 %v3567, %v3750
      %v3752 = vpop.f32.mrb[0].mxu0
      %3753 = vmatprep.mubr.f32.mxu0 %v3114
      %3754 = vmatmul.mubr.f32.gmra.mrb[0].mxu0 %v3277
      %v3755 = vpop.f32.mrb[0].mxu0
      %v3756 = vadd.f32 %v3567, %v3755
      %v3757 = vpop.f32.mrb[0].mxu0
      %3758 = vmatprep.mubr.f32.mxu0 %v3115
      %3759 = vmatmul.mubr.f32.gmra.mrb[0].mxu0 %v3278
      %v3760 = vpop.f32.mrb[0].mxu0
      %v3761 = vadd.f32 %v3567, %v3760
      %v3762 = vpop.f32.mrb[0].mxu0
      %3763 = vmatprep.mubr.f32.mxu0 %v3116
      %3764 = vmatmul.mubr.f32.gmra.mrb[0].mxu0 %v3279
      %v3765 = vpop.f32.mrb[0].mxu0
      %v3766 = vadd.f32 %v3567, %v3765
      %v3767 = vpop.f32.mrb[0].mxu0
      %3768 = vmatprep.mubr.f32.mxu0 %v3117
      %3769 = vmatmul.mubr.f32.gmra.mrb[0].mxu0 %v3280
      %v3770 = vpop.f32.mrb[0].mxu0
      %v3771 = vadd.f32 %v3567, %v3770
      %v3772 = vpop.f32.mrb[0].mxu0
      %3773 = vmatprep.mubr.f32.mxu0 %v3118
      %3774 = vmatmul.mubr.f32.gmra.mrb[0].mxu0 %v3281
      %v3775 = vpop.f32.mrb[0].mxu0
      %v3776 = vadd.f32 %v3567, %v3775
      %v3777 = vpop.f32.mrb[0].mxu0
      %3778 = vmatprep.mubr.f32.mxu0 %v3119
      %3779 = vmatmul.mubr.f32.gmra.mrb[0].mxu0 %v3282
      %v3780 = vpop.f32.mrb[0].mxu0
      %v3781 = vadd.f32 %v3567, %v3780
      %v3782 = vpop.f32.mrb[0].mxu0
      %3783 = vmatprep.mubr.f32.mxu0 %v3120
      %3784 = vmatmul.mubr.f32.gmra.mrb[0].mxu0 %v3283
      %v3785 = vpop.f32.mrb[0].mxu0
      %v3786 = vadd.f32 %v3567, %v3785
      %v3787 = vpop.f32.mrb[0].mxu0
      %3788 = vmatprep.mubr.f32.mxu0 %v3121
      %3789 = vmatmul.mubr.f32.gmra.mrb[0].mxu0 %v3284
      %v3790 = vpop.f32.mrb[0].mxu0
      %v3791 = vadd.f32 %v3567, %v3790
      %v3792 = vpop.f32.mrb[0].mxu0
      %3793 = vdwg.mxu0
      %3794 = vmatprep.subr.mxu0 0.0
      %3795 = vmatpush1.msra.mxu0 %v3451
      %3796 = vmatprep.subr.mxu0 0.0
      %3797 = vmatpush1.msra.mxu0 %v3452
      %3798 = vmatprep.subr.mxu0 0.0
      %3799 = vmatpush1.msra.mxu0 %v3453
      %3800 = vmatprep.subr.mxu0 0.0
      %3801 = vmatpush1.msra.mxu0 %v3454
      %3802 = vmatprep.subr.mxu0 0.0
      %3803 = vmatpush1.msra.mxu0 %v3455
      %3804 = vmatprep.subr.mxu0 0.0
      %3805 = vmatpush1.msra.mxu0 %v3456
      %3806 = vmatprep.subr.mxu0 0.0
      %3807 = vmatpush1.msra.mxu0 %v3457
      %3808 = vmatprep.subr.mxu0 0.0
      %3809 = vmatpush1.msra.mxu0 %v3458
      %3810 = vmatprep.subr.mxu0 0.0
      %3811 = vmatpush1.msra.mxu0 %v3459
      %3812 = vmatprep.subr.mxu0 0.0
      %3813 = vmatpush1.msra.mxu0 %v3460
      %3814 = vmatprep.subr.mxu0 0.0
      %3815 = vmatpush1.msra.mxu0 %v3461
      %3816 = vmatprep.subr.mxu0 0.0
      %3817 = vmatpush1.msra.mxu0 %v3462
      %3818 = vmatprep.subr.mxu0 0.0
      %3819 = vmatpush1.msra.mxu0 %v3463
      %3820 = vmatprep.subr.mxu0 0.0
      %3821 = vmatpush1.msra.mxu0 %v3464
      %3822 = vmatprep.subr.mxu0 0.0
      %3823 = vmatpush1.msra.mxu0 %v3465
      %3824 = vmatprep.subr.mxu0 0.0
      %3825 = vmatpush1.msra.mxu0 %v3466
      %3826 = vmatprep.subr.mxu0 0.0
      %3827 = vmatpush1.msra.mxu0 %v3467
      %3828 = vmatprep.subr.mxu0 0.0
      %3829 = vmatpush1.msra.mxu0 %v3468
      %3830 = vmatprep.subr.mxu0 0.0
      %3831 = vmatpush1.msra.mxu0 %v3469
      %3832 = vmatprep.subr.mxu0 0.0
      %3833 = vmatpush1.msra.mxu0 %v3470
      %3834 = vmatprep.subr.mxu0 0.0
      %3835 = vmatpush1.msra.mxu0 %v3471
      %3836 = vmatprep.subr.mxu0 0.0
      %3837 = vmatpush1.msra.mxu0 %v3472
      %3838 = vmatprep.subr.mxu0 0.0
      %3839 = vmatpush1.msra.mxu0 %v3473
      %3840 = vmatprep.subr.mxu0 0.0
      %3841 = vmatpush1.msra.mxu0 %v3474
      %3842 = vmatprep.subr.mxu0 0.0
      %3843 = vmatpush1.msra.mxu0 %v3475
      %3844 = vmatprep.subr.mxu0 0.0
      %3845 = vmatpush1.msra.mxu0 %v3476
      %3846 = vmatprep.subr.mxu0 0.0
      %3847 = vmatpush1.msra.mxu0 %v3477
      %3848 = vmatprep.subr.mxu0 0.0
      %3849 = vmatpush1.msra.mxu0 %v3478
      %3850 = vmatprep.subr.mxu0 0.0
      %3851 = vmatpush1.msra.mxu0 %v3479
      %3852 = vmatprep.subr.mxu0 0.0
      %3853 = vmatpush1.msra.mxu0 %v3480
      %3854 = vmatprep.subr.mxu0 0.0
      %3855 = vmatpush1.msra.mxu0 %v3481
      %3856 = vmatprep.subr.mxu0 0.0
      %3857 = vmatpush1.msra.mxu0 %v3482
      %3858 = vmatprep.mubr.f32.mxu0 %v3255
      %3859 = vmatmul.mubr.f32.gmra.mrb[0].mxu0 %v1254
      %v3860 = vpop.f32.mrb[0].mxu0
      %v3861 = vadd.f32 %v3636, %v3860
      %v3862 = vpop.f32.mrb[0].mxu0
      %3863 = vmatprep.mubr.f32.mxu0 %v3256
      %3864 = vmatmul.mubr.f32.gmra.mrb[0].mxu0 %v3386
      %v3865 = vpop.f32.mrb[0].mxu0
      %v3866 = vadd.f32 %v3641, %v3865
      %v3867 = vpop.f32.mrb[0].mxu0
      %3868 = vmatprep.mubr.f32.mxu0 %v3257
      %3869 = vmatmul.mubr.f32.gmra.mrb[0].mxu0 %v3387
      %v3870 = vpop.f32.mrb[0].mxu0
      %v3871 = vadd.f32 %v3646, %v3870
      %v3872 = vpop.f32.mrb[0].mxu0
      %3873 = vmatprep.mubr.f32.mxu0 %v3258
      %3874 = vmatmul.mubr.f32.gmra.mrb[0].mxu0 %v3388
      %v3875 = vpop.f32.mrb[0].mxu0
      %v3876 = vadd.f32 %v3651, %v3875
      %v3877 = vpop.f32.mrb[0].mxu0
      %3878 = vmatprep.mubr.f32.mxu0 %v3259
      %3879 = vmatmul.mubr.f32.gmra.mrb[0].mxu0 %v3389
      %v3880 = vpop.f32.mrb[0].mxu0
      %v3881 = vadd.f32 %v3656, %v3880
      %v3882 = vpop.f32.mrb[0].mxu0
      %3883 = vmatprep.mubr.f32.mxu0 %v3260
      %3884 = vmatmul.mubr.f32.gmra.mrb[0].mxu0 %v3390
      %v3885 = vpop.f32.mrb[0].mxu0
      %v3886 = vadd.f32 %v3661, %v3885
      %v3887 = vpop.f32.mrb[0].mxu0
      %3888 = vmatprep.mubr.f32.mxu0 %v3261
      %3889 = vmatmul.mubr.f32.gmra.mrb[0].mxu0 %v3391
      %v3890 = vpop.f32.mrb[0].mxu0
      %v3891 = vadd.f32 %v3666, %v3890
      %v3892 = vpop.f32.mrb[0].mxu0
      %3893 = vmatprep.mubr.f32.mxu0 %v3262
      %3894 = vmatmul.mubr.f32.gmra.mrb[0].mxu0 %v3392
      %v3895 = vpop.f32.mrb[0].mxu0
      %v3896 = vadd.f32 %v3671, %v3895
      %v3897 = vpop.f32.mrb[0].mxu0
      %3898 = vmatprep.mubr.f32.mxu0 %v3263
      %3899 = vmatmul.mubr.f32.gmra.mrb[0].mxu0 %v3393
      %v3900 = vpop.f32.mrb[0].mxu0
      %v3901 = vadd.f32 %v3676, %v3900
      %v3902 = vpop.f32.mrb[0].mxu0
      %3903 = vmatprep.mubr.f32.mxu0 %v3264
      %3904 = vmatmul.mubr.f32.gmra.mrb[0].mxu0 %v3394
      %v3905 = vpop.f32.mrb[0].mxu0
      %v3906 = vadd.f32 %v3681, %v3905
      %v3907 = vpop.f32.mrb[0].mxu0
      %3908 = vmatprep.mubr.f32.mxu0 %v3265
      %3909 = vmatmul.mubr.f32.gmra.mrb[0].mxu0 %v3395
      %v3910 = vpop.f32.mrb[0].mxu0
      %v3911 = vadd.f32 %v3686, %v3910
      %v3912 = vpop.f32.mrb[0].mxu0
      %3913 = vmatprep.mubr.f32.mxu0 %v3266
      %3914 = vmatmul.mubr.f32.gmra.mrb[0].mxu0 %v3396
      %v3915 = vpop.f32.mrb[0].mxu0
      %v3916 = vadd.f32 %v3691, %v3915
      %v3917 = vpop.f32.mrb[0].mxu0
      %3918 = vmatprep.mubr.f32.mxu0 %v3267
      %3919 = vmatmul.mubr.f32.gmra.mrb[0].mxu0 %v3397
      %v3920 = vpop.f32.mrb[0].mxu0
      %v3921 = vadd.f32 %v3696, %v3920
      %v3922 = vpop.f32.mrb[0].mxu0
      %3923 = vmatprep.mubr.f32.mxu0 %v3268
      %3924 = vmatmul.mubr.f32.gmra.mrb[0].mxu0 %v3398
      %v3925 = vpop.f32.mrb[0].mxu0
      %v3926 = vadd.f32 %v3701, %v3925
      %v3927 = vpop.f32.mrb[0].mxu0
      %3928 = vmatprep.mubr.f32.mxu0 %v3269
      %3929 = vmatmul.mubr.f32.gmra.mrb[0].mxu0 %v3399
      %v3930 = vpop.f32.mrb[0].mxu0
      %v3931 = vadd.f32 %v3706, %v3930
      %v3932 = vpop.f32.mrb[0].mxu0
      %3933 = vmatprep.mubr.f32.mxu0 %v3270
      %3934 = vmatmul.mubr.f32.gmra.mrb[0].mxu0 %v3400
      %v3935 = vpop.f32.mrb[0].mxu0
      %v3936 = vadd.f32 %v3711, %v3935
      %v3937 = vpop.f32.mrb[0].mxu0
      %3938 = vmatprep.mubr.f32.mxu0 %v3271
      %3939 = vmatmul.mubr.f32.gmra.mrb[0].mxu0 %v3401
      %v3940 = vpop.f32.mrb[0].mxu0
      %v3941 = vadd.f32 %v3716, %v3940
      %v3942 = vpop.f32.mrb[0].mxu0
      %3943 = vmatprep.mubr.f32.mxu0 %v3272
      %3944 = vmatmul.mubr.f32.gmra.mrb[0].mxu0 %v3402
      %v3945 = vpop.f32.mrb[0].mxu0
      %v3946 = vadd.f32 %v3721, %v3945
      %v3947 = vpop.f32.mrb[0].mxu0
      %3948 = vmatprep.mubr.f32.mxu0 %v3273
      %3949 = vmatmul.mubr.f32.gmra.mrb[0].mxu0 %v3403
      %v3950 = vpop.f32.mrb[0].mxu0
      %v3951 = vadd.f32 %v3726, %v3950
      %v3952 = vpop.f32.mrb[0].mxu0
      %3953 = vmatprep.mubr.f32.mxu0 %v3274
      %3954 = vmatmul.mubr.f32.gmra.mrb[0].mxu0 %v3404
      %v3955 = vpop.f32.mrb[0].mxu0
      %v3956 = vadd.f32 %v3731, %v3955
      %v3957 = vpop.f32.mrb[0].mxu0
      %3958 = vmatprep.mubr.f32.mxu0 %v3275
      %3959 = vmatmul.mubr.f32.gmra.mrb[0].mxu0 %v3405
      %v3960 = vpop.f32.mrb[0].mxu0
      %v3961 = vadd.f32 %v3736, %v3960
      %v3962 = vpop.f32.mrb[0].mxu0
      %3963 = vmatprep.mubr.f32.mxu0 %v3276
      %3964 = vmatmul.mubr.f32.gmra.mrb[0].mxu0 %v3406
      %v3965 = vpop.f32.mrb[0].mxu0
      %v3966 = vadd.f32 %v3741, %v3965
      %v3967 = vpop.f32.mrb[0].mxu0
      %3968 = vmatprep.mubr.f32.mxu0 %v3277
      %3969 = vmatmul.mubr.f32.gmra.mrb[0].mxu0 %v3407
      %v3970 = vpop.f32.mrb[0].mxu0
      %v3971 = vadd.f32 %v3746, %v3970
      %v3972 = vpop.f32.mrb[0].mxu0
      %3973 = vmatprep.mubr.f32.mxu0 %v3278
      %3974 = vmatmul.mubr.f32.gmra.mrb[0].mxu0 %v3408
      %v3975 = vpop.f32.mrb[0].mxu0
      %v3976 = vadd.f32 %v3751, %v3975
      %v3977 = vpop.f32.mrb[0].mxu0
      %3978 = vmatprep.mubr.f32.mxu0 %v3279
      %3979 = vmatmul.mubr.f32.gmra.mrb[0].mxu0 %v3409
      %v3980 = vpop.f32.mrb[0].mxu0
      %v3981 = vadd.f32 %v3756, %v3980
      %v3982 = vpop.f32.mrb[0].mxu0
      %3983 = vmatprep.mubr.f32.mxu0 %v3280
      %3984 = vmatmul.mubr.f32.gmra.mrb[0].mxu0 %v3410
      %v3985 = vpop.f32.mrb[0].mxu0
      %v3986 = vadd.f32 %v3761, %v3985
      %v3987 = vpop.f32.mrb[0].mxu0
      %3988 = vmatprep.mubr.f32.mxu0 %v3281
      %3989 = vmatmul.mubr.f32.gmra.mrb[0].mxu0 %v3411
      %v3990 = vpop.f32.mrb[0].mxu0
      %v3991 = vadd.f32 %v3766, %v3990
      %v3992 = vpop.f32.mrb[0].mxu0
      %3993 = vmatprep.mubr.f32.mxu0 %v3282
      %3994 = vmatmul.mubr.f32.gmra.mrb[0].mxu0 %v3412
      %v3995 = vpop.f32.mrb[0].mxu0
      %v3996 = vadd.f32 %v3771, %v3995
      %v3997 = vpop.f32.mrb[0].mxu0
      %3998 = vmatprep.mubr.f32.mxu0 %v3283
      %3999 = vmatmul.mubr.f32.gmra.mrb[0].mxu0 %v3413
      %v4000 = vpop.f32.mrb[0].mxu0
      %v4001 = vadd.f32 %v3776, %v4000
      %v4002 = vpop.f32.mrb[0].mxu0
      %4003 = vmatprep.mubr.f32.mxu0 %v3284
      %4004 = vmatmul.mubr.f32.gmra.mrb[0].mxu0 %v3414
      %v4005 = vpop.f32.mrb[0].mxu0
      %v4006 = vadd.f32 %v3781, %v4005
      %v4007 = vpop.f32.mrb[0].mxu0
      %4008 = vmatprep.mubr.f32.mxu0 %v3285
      %4009 = vmatmul.mubr.f32.gmra.mrb[0].mxu0 %v3415
      %v4010 = vpop.f32.mrb[0].mxu0
      %v4011 = vadd.f32 %v3786, %v4010
      %v4012 = vpop.f32.mrb[0].mxu0
      %4013 = vmatprep.mubr.f32.mxu0 %v3286
      %4014 = vmatmul.mubr.f32.gmra.mrb[0].mxu0 %v3416
      %v4015 = vpop.f32.mrb[0].mxu0
      %v4016 = vadd.f32 %v3791, %v4015
      %v4017 = vpop.f32.mrb[0].mxu0
      %4018 = vdwg.mxu0
      %4019 = vmatprep.subr.mxu0 0.0
      %4020 = vmatpush1.msra.mxu0 %v3483
      %4021 = vmatprep.subr.mxu0 0.0
      %4022 = vmatpush1.msra.mxu0 %v3484
      %4023 = vmatprep.subr.mxu0 0.0
      %4024 = vmatpush1.msra.mxu0 %v3485
      %4025 = vmatprep.subr.mxu0 0.0
      %4026 = vmatpush1.msra.mxu0 %v3486
      %4027 = vmatprep.subr.mxu0 0.0
      %4028 = vmatpush1.msra.mxu0 %v3487
      %4029 = vmatprep.subr.mxu0 0.0
      %4030 = vmatpush1.msra.mxu0 %v3488
      %4031 = vmatprep.subr.mxu0 0.0
      %4032 = vmatpush1.msra.mxu0 %v3489
      %4033 = vmatprep.subr.mxu0 0.0
      %4034 = vmatpush1.msra.mxu0 %v3490
      %4035 = vmatprep.subr.mxu0 0.0
      %4036 = vmatpush1.msra.mxu0 %v3491
      %4037 = vmatprep.subr.mxu0 0.0
      %4038 = vmatpush1.msra.mxu0 %v3492
      %4039 = vmatprep.subr.mxu0 0.0
      %4040 = vmatpush1.msra.mxu0 %v3493
      %4041 = vmatprep.subr.mxu0 0.0
      %4042 = vmatpush1.msra.mxu0 %v3494
      %4043 = vmatprep.subr.mxu0 0.0
      %4044 = vmatpush1.msra.mxu0 %v3495
      %4045 = vmatprep.subr.mxu0 0.0
      %4046 = vmatpush1.msra.mxu0 %v3496
      %4047 = vmatprep.subr.mxu0 0.0
      %4048 = vmatpush1.msra.mxu0 %v3497
      %4049 = vmatprep.subr.mxu0 0.0
      %4050 = vmatpush1.msra.mxu0 %v3498
      %4051 = vmatprep.subr.mxu0 0.0
      %4052 = vmatpush1.msra.mxu0 %v3499
      %4053 = vmatprep.subr.mxu0 0.0
      %4054 = vmatpush1.msra.mxu0 %v3500
      %4055 = vmatprep.subr.mxu0 0.0
      %4056 = vmatpush1.msra.mxu0 %v3501
      %4057 = vmatprep.subr.mxu0 0.0
      %4058 = vmatpush1.msra.mxu0 %v3502
      %4059 = vmatprep.subr.mxu0 0.0
      %4060 = vmatpush1.msra.mxu0 %v3503
      %4061 = vmatprep.subr.mxu0 0.0
      %4062 = vmatpush1.msra.mxu0 %v3504
      %4063 = vmatprep.subr.mxu0 0.0
      %4064 = vmatpush1.msra.mxu0 %v3505
      %4065 = vmatprep.subr.mxu0 0.0
      %4066 = vmatpush1.msra.mxu0 %v3506
      %4067 = vmatprep.subr.mxu0 0.0
      %4068 = vmatpush1.msra.mxu0 %v3507
      %4069 = vmatprep.subr.mxu0 0.0
      %4070 = vmatpush1.msra.mxu0 %v3508
      %4071 = vmatprep.subr.mxu0 0.0
      %4072 = vmatpush1.msra.mxu0 %v3509
      %4073 = vmatprep.subr.mxu0 0.0
      %4074 = vmatpush1.msra.mxu0 %v3510
      %4075 = vmatprep.subr.mxu0 0.0
      %4076 = vmatpush1.msra.mxu0 %v3511
      %4077 = vmatprep.subr.mxu0 0.0
      %4078 = vmatpush1.msra.mxu0 %v3512
      %4079 = vmatprep.subr.mxu0 0.0
      %4080 = vmatpush1.msra.mxu0 %v3513
      %4081 = vmatprep.subr.mxu0 0.0
      %4082 = vmatpush1.msra.mxu0 %v3514
      %4083 = vmatprep.mubr.f32.mxu0 %v3387
      %4084 = vmatmul.mubr.f32.gmra.mrb[0].mxu0 %v3092
      %v4085 = vpop.f32.mrb[0].mxu0
      %v4086 = vadd.f32 %v3861, %v4085
      %v4087 = vpop.f32.mrb[0].mxu0
      %4088 = vmatprep.mubr.f32.mxu0 %v3388
      %4089 = vmatmul.mubr.f32.gmra.mrb[0].mxu0 %v3093
      %v4090 = vpop.f32.mrb[0].mxu0
      %v4091 = vadd.f32 %v3866, %v4090
      %v4092 = vpop.f32.mrb[0].mxu0
      %4093 = vmatprep.mubr.f32.mxu0 %v3389
      %4094 = vmatmul.mubr.f32.gmra.mrb[0].mxu0 %v3094
      %v4095 = vpop.f32.mrb[0].mxu0
      %v4096 = vadd.f32 %v3871, %v4095
      %v4097 = vpop.f32.mrb[0].mxu0
      %4098 = vmatprep.mubr.f32.mxu0 %v3390
      %4099 = vmatmul.mubr.f32.gmra.mrb[0].mxu0 %v3095
      %v4100 = vpop.f32.mrb[0].mxu0
      %v4101 = vadd.f32 %v3876, %v4100
      %v4102 = vpop.f32.mrb[0].mxu0
      %4103 = vmatprep.mubr.f32.mxu0 %v3391
      %4104 = vmatmul.mubr.f32.gmra.mrb[0].mxu0 %v3096
      %v4105 = vpop.f32.mrb[0].mxu0
      %v4106 = vadd.f32 %v3881, %v4105
      %v4107 = vpop.f32.mrb[0].mxu0
      %4108 = vmatprep.mubr.f32.mxu0 %v3392
      %4109 = vmatmul.mubr.f32.gmra.mrb[0].mxu0 %v3097
      %v4110 = vpop.f32.mrb[0].mxu0
      %v4111 = vadd.f32 %v3886, %v4110
      %v4112 = vpop.f32.mrb[0].mxu0
      %4113 = vmatprep.mubr.f32.mxu0 %v3393
      %4114 = vmatmul.mubr.f32.gmra.mrb[0].mxu0 %v3098
      %v4115 = vpop.f32.mrb[0].mxu0
      %v4116 = vadd.f32 %v3891, %v4115
      %v4117 = vpop.f32.mrb[0].mxu0
      %4118 = vmatprep.mubr.f32.mxu0 %v3394
      %4119 = vmatmul.mubr.f32.gmra.mrb[0].mxu0 %v3099
      %v4120 = vpop.f32.mrb[0].mxu0
      %v4121 = vadd.f32 %v3896, %v4120
      %v4122 = vpop.f32.mrb[0].mxu0
      %4123 = vmatprep.mubr.f32.mxu0 %v3395
      %4124 = vmatmul.mubr.f32.gmra.mrb[0].mxu0 %v3100
      %v4125 = vpop.f32.mrb[0].mxu0
      %v4126 = vadd.f32 %v3901, %v4125
      %v4127 = vpop.f32.mrb[0].mxu0
      %4128 = vmatprep.mubr.f32.mxu0 %v3396
      %4129 = vmatmul.mubr.f32.gmra.mrb[0].mxu0 %v3101
      %v4130 = vpop.f32.mrb[0].mxu0
      %v4131 = vadd.f32 %v3906, %v4130
      %v4132 = vpop.f32.mrb[0].mxu0
      %4133 = vmatprep.mubr.f32.mxu0 %v3397
      %4134 = vmatmul.mubr.f32.gmra.mrb[0].mxu0 %v3102
      %v4135 = vpop.f32.mrb[0].mxu0
      %v4136 = vadd.f32 %v3911, %v4135
      %v4137 = vpop.f32.mrb[0].mxu0
      %4138 = vmatprep.mubr.f32.mxu0 %v3398
      %4139 = vmatmul.mubr.f32.gmra.mrb[0].mxu0 %v3103
      %v4140 = vpop.f32.mrb[0].mxu0
      %v4141 = vadd.f32 %v3916, %v4140
      %v4142 = vpop.f32.mrb[0].mxu0
      %4143 = vmatprep.mubr.f32.mxu0 %v3399
      %4144 = vmatmul.mubr.f32.gmra.mrb[0].mxu0 %v3104
      %v4145 = vpop.f32.mrb[0].mxu0
      %v4146 = vadd.f32 %v3921, %v4145
      %v4147 = vpop.f32.mrb[0].mxu0
      %4148 = vmatprep.mubr.f32.mxu0 %v3400
      %4149 = vmatmul.mubr.f32.gmra.mrb[0].mxu0 %v3105
      %v4150 = vpop.f32.mrb[0].mxu0
      %v4151 = vadd.f32 %v3926, %v4150
      %v4152 = vpop.f32.mrb[0].mxu0
      %4153 = vmatprep.mubr.f32.mxu0 %v3401
      %4154 = vmatmul.mubr.f32.gmra.mrb[0].mxu0 %v3106
      %v4155 = vpop.f32.mrb[0].mxu0
      %v4156 = vadd.f32 %v3931, %v4155
      %v4157 = vpop.f32.mrb[0].mxu0
      %4158 = vmatprep.mubr.f32.mxu0 %v3402
      %4159 = vmatmul.mubr.f32.gmra.mrb[0].mxu0 %v3107
      %v4160 = vpop.f32.mrb[0].mxu0
      %v4161 = vadd.f32 %v3936, %v4160
      %v4162 = vpop.f32.mrb[0].mxu0
      %4163 = vmatprep.mubr.f32.mxu0 %v3403
      %4164 = vmatmul.mubr.f32.gmra.mrb[0].mxu0 %v3108
      %v4165 = vpop.f32.mrb[0].mxu0
      %v4166 = vadd.f32 %v3941, %v4165
      %v4167 = vpop.f32.mrb[0].mxu0
      %4168 = vmatprep.mubr.f32.mxu0 %v3404
      %4169 = vmatmul.mubr.f32.gmra.mrb[0].mxu0 %v3109
      %v4170 = vpop.f32.mrb[0].mxu0
      %v4171 = vadd.f32 %v3946, %v4170
      %v4172 = vpop.f32.mrb[0].mxu0
      %4173 = vmatprep.mubr.f32.mxu0 %v3405
      %4174 = vmatmul.mubr.f32.gmra.mrb[0].mxu0 %v3110
      %v4175 = vpop.f32.mrb[0].mxu0
      %v4176 = vadd.f32 %v3951, %v4175
      %v4177 = vpop.f32.mrb[0].mxu0
      %4178 = vmatprep.mubr.f32.mxu0 %v3406
      %4179 = vmatmul.mubr.f32.gmra.mrb[0].mxu0 %v3111
      %v4180 = vpop.f32.mrb[0].mxu0
      %v4181 = vadd.f32 %v3956, %v4180
      %v4182 = vpop.f32.mrb[0].mxu0
      %4183 = vmatprep.mubr.f32.mxu0 %v3407
      %4184 = vmatmul.mubr.f32.gmra.mrb[0].mxu0 %v3112
      %v4185 = vpop.f32.mrb[0].mxu0
      %v4186 = vadd.f32 %v3961, %v4185
      %v4187 = vpop.f32.mrb[0].mxu0
      %4188 = vmatprep.mubr.f32.mxu0 %v3408
      %4189 = vmatmul.mubr.f32.gmra.mrb[0].mxu0 %v3113
      %v4190 = vpop.f32.mrb[0].mxu0
      %v4191 = vadd.f32 %v3966, %v4190
      %v4192 = vpop.f32.mrb[0].mxu0
      %4193 = vmatprep.mubr.f32.mxu0 %v3409
      %4194 = vmatmul.mubr.f32.gmra.mrb[0].mxu0 %v3114
      %v4195 = vpop.f32.mrb[0].mxu0
      %v4196 = vadd.f32 %v3971, %v4195
      %v4197 = vpop.f32.mrb[0].mxu0
      %4198 = vmatprep.mubr.f32.mxu0 %v3410
      %4199 = vmatmul.mubr.f32.gmra.mrb[0].mxu0 %v3115
      %v4200 = vpop.f32.mrb[0].mxu0
      %v4201 = vadd.f32 %v3976, %v4200
      %v4202 = vpop.f32.mrb[0].mxu0
      %4203 = vmatprep.mubr.f32.mxu0 %v3411
      %4204 = vmatmul.mubr.f32.gmra.mrb[0].mxu0 %v3116
      %v4205 = vpop.f32.mrb[0].mxu0
      %v4206 = vadd.f32 %v3981, %v4205
      %v4207 = vpop.f32.mrb[0].mxu0
      %4208 = vmatprep.mubr.f32.mxu0 %v3412
      %4209 = vmatmul.mubr.f32.gmra.mrb[0].mxu0 %v3117
      %v4210 = vpop.f32.mrb[0].mxu0
      %v4211 = vadd.f32 %v3986, %v4210
      %v4212 = vpop.f32.mrb[0].mxu0
      %4213 = vmatprep.mubr.f32.mxu0 %v3413
      %4214 = vmatmul.mubr.f32.gmra.mrb[0].mxu0 %v3118
      %v4215 = vpop.f32.mrb[0].mxu0
      %v4216 = vadd.f32 %v3991, %v4215
      %v4217 = vpop.f32.mrb[0].mxu0
      %4218 = vmatprep.mubr.f32.mxu0 %v3414
      %4219 = vmatmul.mubr.f32.gmra.mrb[0].mxu0 %v3119
      %v4220 = vpop.f32.mrb[0].mxu0
      %v4221 = vadd.f32 %v3996, %v4220
      %v4222 = vpop.f32.mrb[0].mxu0
      %4223 = vmatprep.mubr.f32.mxu0 %v3415
      %4224 = vmatmul.mubr.f32.gmra.mrb[0].mxu0 %v3120
      %v4225 = vpop.f32.mrb[0].mxu0
      %v4226 = vadd.f32 %v4001, %v4225
      %v4227 = vpop.f32.mrb[0].mxu0
      %4228 = vmatprep.mubr.f32.mxu0 %v3416
      %4229 = vmatmul.mubr.f32.gmra.mrb[0].mxu0 %v3121
      %v4230 = vpop.f32.mrb[0].mxu0
      %v4231 = vadd.f32 %v4006, %v4230
      %v4232 = vpop.f32.mrb[0].mxu0
      %4233 = vmatprep.mubr.f32.mxu0 %v3417
      %4234 = vmatmul.mubr.f32.gmra.mrb[0].mxu0 %v3122
      %v4235 = vpop.f32.mrb[0].mxu0
      %v4236 = vadd.f32 %v4011, %v4235
      %v4237 = vpop.f32.mrb[0].mxu0
      %4238 = vmatprep.mubr.f32.mxu0 %v3418
      %4239 = vmatmul.mubr.f32.gmra.mrb[0].mxu0 %v3123
      %v4240 = vpop.f32.mrb[0].mxu0
      %v4241 = vadd.f32 %v4016, %v4240
      %v4242 = vpop.f32.mrb[0].mxu0
      %4243 = vdwg.mxu0
      %4244 = vmatprep.subr.mxu0 0.0
      %4245 = vmatpush1.msra.mxu0 %v3515
      %4246 = vmatprep.subr.mxu0 0.0
      %4247 = vmatpush1.msra.mxu0 %v3516
      %4248 = vmatprep.subr.mxu0 0.0
      %4249 = vmatpush1.msra.mxu0 %v3517
      %4250 = vmatprep.subr.mxu0 0.0
      %4251 = vmatpush1.msra.mxu0 %v3518
      %4252 = vmatprep.subr.mxu0 0.0
      %4253 = vmatpush1.msra.mxu0 %v3519
      %4254 = vmatprep.subr.mxu0 0.0
      %4255 = vmatpush1.msra.mxu0 %v3520
      %4256 = vmatprep.subr.mxu0 0.0
      %4257 = vmatpush1.msra.mxu0 %v3521
      %4258 = vmatprep.subr.mxu0 0.0
      %4259 = vmatpush1.msra.mxu0 %v3522
      %4260 = vmatprep.subr.mxu0 0.0
      %4261 = vmatpush1.msra.mxu0 %v3523
      %4262 = vmatprep.subr.mxu0 0.0
      %4263 = vmatpush1.msra.mxu0 %v3524
      %4264 = vmatprep.subr.mxu0 0.0
      %4265 = vmatpush1.msra.mxu0 %v3525
      %4266 = vmatprep.subr.mxu0 0.0
      %4267 = vmatpush1.msra.mxu0 %v3526
      %4268 = vmatprep.subr.mxu0 0.0
      %4269 = vmatpush1.msra.mxu0 %v3527
      %4270 = vmatprep.subr.mxu0 0.0
      %4271 = vmatpush1.msra.mxu0 %v3528
      %4272 = vmatprep.subr.mxu0 0.0
      %4273 = vmatpush1.msra.mxu0 %v3529
      %4274 = vmatprep.subr.mxu0 0.0
      %4275 = vmatpush1.msra.mxu0 %v3530
      %4276 = vmatprep.subr.mxu0 0.0
      %4277 = vmatpush1.msra.mxu0 %v3531
      %4278 = vmatprep.subr.mxu0 0.0
      %4279 = vmatpush1.msra.mxu0 %v3532
      %4280 = vmatprep.subr.mxu0 0.0
      %4281 = vmatpush1.msra.mxu0 %v3533
      %4282 = vmatprep.subr.mxu0 0.0
      %4283 = vmatpush1.msra.mxu0 %v3534
      %4284 = vmatprep.subr.mxu0 0.0
      %4285 = vmatpush1.msra.mxu0 %v3535
      %4286 = vmatprep.subr.mxu0 0.0
      %4287 = vmatpush1.msra.mxu0 %v3536
      %4288 = vmatprep.subr.mxu0 0.0
      %4289 = vmatpush1.msra.mxu0 %v3537
      %4290 = vmatprep.subr.mxu0 0.0
      %4291 = vmatpush1.msra.mxu0 %v3538
      %4292 = vmatprep.subr.mxu0 0.0
      %4293 = vmatpush1.msra.mxu0 %v3539
      %4294 = vmatprep.subr.mxu0 0.0
      %4295 = vmatpush1.msra.mxu0 %v3540
      %4296 = vmatprep.subr.mxu0 0.0
      %4297 = vmatpush1.msra.mxu0 %v3541
      %4298 = vmatprep.subr.mxu0 0.0
      %4299 = vmatpush1.msra.mxu0 %v3542
      %4300 = vmatprep.subr.mxu0 0.0
      %4301 = vmatpush1.msra.mxu0 %v3543
      %4302 = vmatprep.subr.mxu0 0.0
      %4303 = vmatpush1.msra.mxu0 %v3544
      %4304 = vmatprep.subr.mxu0 0.0
      %4305 = vmatpush1.msra.mxu0 %v3545
      %4306 = vmatprep.subr.mxu0 0.0
      %4307 = vmatpush1.msra.mxu0 %v3546
      %4308 = vmatprep.mubr.f32.mxu0 %v3094
      %4309 = vmatmul.mubr.f32.gmra.mrb[0].mxu0 %v3257
      %v4310 = vpop.f32.mrb[0].mxu0
      %v4311 = vadd.f32 %v4086, %v4310
      %v4312 = vpop.f32.mrb[0].mxu0
      %4313 = vmatprep.mubr.f32.mxu0 %v3095
      %4314 = vmatmul.mubr.f32.gmra.mrb[0].mxu0 %v3258
      %v4315 = vpop.f32.mrb[0].mxu0
      %v4316 = vadd.f32 %v4091, %v4315
      %v4317 = vpop.f32.mrb[0].mxu0
      %4318 = vmatprep.mubr.f32.mxu0 %v3096
      %4319 = vmatmul.mubr.f32.gmra.mrb[0].mxu0 %v3259
      %v4320 = vpop.f32.mrb[0].mxu0
      %v4321 = vadd.f32 %v4096, %v4320
      %v4322 = vpop.f32.mrb[0].mxu0
      %4323 = vmatprep.mubr.f32.mxu0 %v3097
      %4324 = vmatmul.mubr.f32.gmra.mrb[0].mxu0 %v3260
      %v4325 = vpop.f32.mrb[0].mxu0
      %v4326 = vadd.f32 %v4101, %v4325
      %v4327 = vpop.f32.mrb[0].mxu0
      %4328 = vmatprep.mubr.f32.mxu0 %v3098
      %4329 = vmatmul.mubr.f32.gmra.mrb[0].mxu0 %v3261
      %v4330 = vpop.f32.mrb[0].mxu0
      %v4331 = vadd.f32 %v4106, %v4330
      %v4332 = vpop.f32.mrb[0].mxu0
      %4333 = vmatprep.mubr.f32.mxu0 %v3099
      %4334 = vmatmul.mubr.f32.gmra.mrb[0].mxu0 %v3262
      %v4335 = vpop.f32.mrb[0].mxu0
      %v4336 = vadd.f32 %v4111, %v4335
      %v4337 = vpop.f32.mrb[0].mxu0
      %4338 = vmatprep.mubr.f32.mxu0 %v3100
      %4339 = vmatmul.mubr.f32.gmra.mrb[0].mxu0 %v3263
      %v4340 = vpop.f32.mrb[0].mxu0
      %v4341 = vadd.f32 %v4116, %v4340
      %v4342 = vpop.f32.mrb[0].mxu0
      %4343 = vmatprep.mubr.f32.mxu0 %v3101
      %4344 = vmatmul.mubr.f32.gmra.mrb[0].mxu0 %v3264
      %v4345 = vpop.f32.mrb[0].mxu0
      %v4346 = vadd.f32 %v4121, %v4345
      %v4347 = vpop.f32.mrb[0].mxu0
      %4348 = vmatprep.mubr.f32.mxu0 %v3102
      %4349 = vmatmul.mubr.f32.gmra.mrb[0].mxu0 %v3265
      %v4350 = vpop.f32.mrb[0].mxu0
      %v4351 = vadd.f32 %v4126, %v4350
      %v4352 = vpop.f32.mrb[0].mxu0
      %4353 = vmatprep.mubr.f32.mxu0 %v3103
      %4354 = vmatmul.mubr.f32.gmra.mrb[0].mxu0 %v3266
      %v4355 = vpop.f32.mrb[0].mxu0
      %v4356 = vadd.f32 %v4131, %v4355
      %v4357 = vpop.f32.mrb[0].mxu0
      %4358 = vmatprep.mubr.f32.mxu0 %v3104
      %4359 = vmatmul.mubr.f32.gmra.mrb[0].mxu0 %v3267
      %v4360 = vpop.f32.mrb[0].mxu0
      %v4361 = vadd.f32 %v4136, %v4360
      %v4362 = vpop.f32.mrb[0].mxu0
      %4363 = vmatprep.mubr.f32.mxu0 %v3105
      %4364 = vmatmul.mubr.f32.gmra.mrb[0].mxu0 %v3268
      %v4365 = vpop.f32.mrb[0].mxu0
      %v4366 = vadd.f32 %v4141, %v4365
      %v4367 = vpop.f32.mrb[0].mxu0
      %4368 = vmatprep.mubr.f32.mxu0 %v3106
      %4369 = vmatmul.mubr.f32.gmra.mrb[0].mxu0 %v3269
      %v4370 = vpop.f32.mrb[0].mxu0
      %v4371 = vadd.f32 %v4146, %v4370
      %v4372 = vpop.f32.mrb[0].mxu0
      %4373 = vmatprep.mubr.f32.mxu0 %v3107
      %4374 = vmatmul.mubr.f32.gmra.mrb[0].mxu0 %v3270
      %v4375 = vpop.f32.mrb[0].mxu0
      %v4376 = vadd.f32 %v4151, %v4375
      %v4377 = vpop.f32.mrb[0].mxu0
      %4378 = vmatprep.mubr.f32.mxu0 %v3108
      %4379 = vmatmul.mubr.f32.gmra.mrb[0].mxu0 %v3271
      %v4380 = vpop.f32.mrb[0].mxu0
      %v4381 = vadd.f32 %v4156, %v4380
      %v4382 = vpop.f32.mrb[0].mxu0
      %4383 = vmatprep.mubr.f32.mxu0 %v3109
      %4384 = vmatmul.mubr.f32.gmra.mrb[0].mxu0 %v3272
      %v4385 = vpop.f32.mrb[0].mxu0
      %v4386 = vadd.f32 %v4161, %v4385
      %v4387 = vpop.f32.mrb[0].mxu0
      %4388 = vmatprep.mubr.f32.mxu0 %v3110
      %4389 = vmatmul.mubr.f32.gmra.mrb[0].mxu0 %v3273
      %v4390 = vpop.f32.mrb[0].mxu0
      %v4391 = vadd.f32 %v4166, %v4390
      %v4392 = vpop.f32.mrb[0].mxu0
      %4393 = vmatprep.mubr.f32.mxu0 %v3111
      %4394 = vmatmul.mubr.f32.gmra.mrb[0].mxu0 %v3274
      %v4395 = vpop.f32.mrb[0].mxu0
      %v4396 = vadd.f32 %v4171, %v4395
      %v4397 = vpop.f32.mrb[0].mxu0
      %4398 = vmatprep.mubr.f32.mxu0 %v3112
      %4399 = vmatmul.mubr.f32.gmra.mrb[0].mxu0 %v3275
      %v4400 = vpop.f32.mrb[0].mxu0
      %v4401 = vadd.f32 %v4176, %v4400
      %v4402 = vpop.f32.mrb[0].mxu0
      %4403 = vmatprep.mubr.f32.mxu0 %v3113
      %4404 = vmatmul.mubr.f32.gmra.mrb[0].mxu0 %v3276
      %v4405 = vpop.f32.mrb[0].mxu0
      %v4406 = vadd.f32 %v4181, %v4405
      %v4407 = vpop.f32.mrb[0].mxu0
      %4408 = vmatprep.mubr.f32.mxu0 %v3114
      %4409 = vmatmul.mubr.f32.gmra.mrb[0].mxu0 %v3277
      %v4410 = vpop.f32.mrb[0].mxu0
      %v4411 = vadd.f32 %v4186, %v4410
      %v4412 = vpop.f32.mrb[0].mxu0
      %4413 = vmatprep.mubr.f32.mxu0 %v3115
      %4414 = vmatmul.mubr.f32.gmra.mrb[0].mxu0 %v3278
      %v4415 = vpop.f32.mrb[0].mxu0
      %v4416 = vadd.f32 %v4191, %v4415
      %v4417 = vpop.f32.mrb[0].mxu0
      %4418 = vmatprep.mubr.f32.mxu0 %v3116
      %4419 = vmatmul.mubr.f32.gmra.mrb[0].mxu0 %v3279
      %v4420 = vpop.f32.mrb[0].mxu0
      %v4421 = vadd.f32 %v4196, %v4420
      %v4422 = vpop.f32.mrb[0].mxu0
      %4423 = vmatprep.mubr.f32.mxu0 %v3117
      %4424 = vmatmul.mubr.f32.gmra.mrb[0].mxu0 %v3280
      %v4425 = vpop.f32.mrb[0].mxu0
      %v4426 = vadd.f32 %v4201, %v4425
      %v4427 = vpop.f32.mrb[0].mxu0
      %4428 = vmatprep.mubr.f32.mxu0 %v3118
      %4429 = vmatmul.mubr.f32.gmra.mrb[0].mxu0 %v3281
      %v4430 = vpop.f32.mrb[0].mxu0
      %v4431 = vadd.f32 %v4206, %v4430
      %v4432 = vpop.f32.mrb[0].mxu0
      %4433 = vmatprep.mubr.f32.mxu0 %v3119
      %4434 = vmatmul.mubr.f32.gmra.mrb[0].mxu0 %v3282
      %v4435 = vpop.f32.mrb[0].mxu0
      %v4436 = vadd.f32 %v4211, %v4435
      %v4437 = vpop.f32.mrb[0].mxu0
      %4438 = vmatprep.mubr.f32.mxu0 %v3120
      %4439 = vmatmul.mubr.f32.gmra.mrb[0].mxu0 %v3283
      %v4440 = vpop.f32.mrb[0].mxu0
      %v4441 = vadd.f32 %v4216, %v4440
      %v4442 = vpop.f32.mrb[0].mxu0
      %4443 = vmatprep.mubr.f32.mxu0 %v3121
      %4444 = vmatmul.mubr.f32.gmra.mrb[0].mxu0 %v3284
      %v4445 = vpop.f32.mrb[0].mxu0
      %v4446 = vadd.f32 %v4221, %v4445
      %v4447 = vpop.f32.mrb[0].mxu0
      %4448 = vmatprep.mubr.f32.mxu0 %v3122
      %4449 = vmatmul.mubr.f32.gmra.mrb[0].mxu0 %v3285
      %v4450 = vpop.f32.mrb[0].mxu0
      %v4451 = vadd.f32 %v4226, %v4450
      %v4452 = vpop.f32.mrb[0].mxu0
      %4453 = vmatprep.mubr.f32.mxu0 %v3123
      %4454 = vmatmul.mubr.f32.gmra.mrb[0].mxu0 %v3286
      %v4455 = vpop.f32.mrb[0].mxu0
      %v4456 = vadd.f32 %v4231, %v4455
      %v4457 = vpop.f32.mrb[0].mxu0
      %4458 = vmatprep.mubr.f32.mxu0 0.0
      %4459 = vmatmul.mubr.f32.gmra.mrb[0].mxu0 %v3287
      %v4460 = vpop.f32.mrb[0].mxu0
      %v4461 = vadd.f32 %v4236, %v4460
      %v4462 = vpop.f32.mrb[0].mxu0
      %4463 = vmatprep.mubr.f32.mxu0 0.0
      %4464 = vmatmul.mubr.f32.gmra.mrb[0].mxu0 %v1116
      %v4465 = vpop.f32.mrb[0].mxu0
      %v4466 = vadd.f32 %v4241, %v4465
      %v4467 = vpop.f32.mrb[0].mxu0
      %4468 = vdwg.mxu0
      %4469 = vmatprep.subr.mxu0 0.0
      %4470 = vmatpush1.msra.mxu0 %v3547
      %4471 = vmatprep.subr.mxu0 0.0
      %4472 = vmatpush1.msra.mxu0 %v3548
      %4473 = vmatprep.subr.mxu0 0.0
      %4474 = vmatpush1.msra.mxu0 %v3549
      %4475 = vmatprep.subr.mxu0 0.0
      %4476 = vmatpush1.msra.mxu0 %v3550
      %4477 = vmatprep.subr.mxu0 0.0
      %4478 = vmatpush1.msra.mxu0 %v3551
      %4479 = vmatprep.subr.mxu0 0.0
      %4480 = vmatpush1.msra.mxu0 %v3552
      %4481 = vmatprep.subr.mxu0 0.0
      %4482 = vmatpush1.msra.mxu0 %v3553
      %4483 = vmatprep.subr.mxu0 0.0
      %4484 = vmatpush1.msra.mxu0 %v3554
      %4485 = vmatprep.subr.mxu0 0.0
      %4486 = vmatpush1.msra.mxu0 %v3555
      %4487 = vmatprep.subr.mxu0 0.0
      %4488 = vmatpush1.msra.mxu0 %v3556
      %4489 = vmatprep.subr.mxu0 0.0
      %4490 = vmatpush1.msra.mxu0 %v3557
      %4491 = vmatprep.subr.mxu0 0.0
      %4492 = vmatpush1.msra.mxu0 %v3558
      %4493 = vmatprep.subr.mxu0 0.0
      %4494 = vmatpush1.msra.mxu0 %v3559
      %4495 = vmatprep.subr.mxu0 0.0
      %4496 = vmatpush1.msra.mxu0 %v3560
      %4497 = vmatprep.subr.mxu0 0.0
      %4498 = vmatpush1.msra.mxu0 %v3561
      %4499 = vmatprep.subr.mxu0 0.0
      %4500 = vmatpush1.msra.mxu0 %v3562
      %4501 = vmatprep.subr.mxu0 0.0
      %4502 = vmatpush1.msra.mxu0 0.0
      %4503 = vmatprep.subr.mxu0 0.0
      %4504 = vmatpush1.msra.mxu0 0.0
      %4505 = vmatprep.subr.mxu0 0.0
      %4506 = vmatpush1.msra.mxu0 0.0
      %4507 = vmatprep.subr.mxu0 0.0
      %4508 = vmatpush1.msra.mxu0 0.0
      %4509 = vmatprep.subr.mxu0 0.0
      %4510 = vmatpush1.msra.mxu0 0.0
      %4511 = vmatprep.subr.mxu0 0.0
      %4512 = vmatpush1.msra.mxu0 0.0
      %4513 = vmatprep.subr.mxu0 0.0
      %4514 = vmatpush1.msra.mxu0 0.0
      %4515 = vmatprep.subr.mxu0 0.0
      %4516 = vmatpush1.msra.mxu0 0.0
      %4517 = vmatprep.subr.mxu0 0.0
      %4518 = vmatpush1.msra.mxu0 0.0
      %4519 = vmatprep.subr.mxu0 0.0
      %4520 = vmatpush1.msra.mxu0 0.0
      %4521 = vmatprep.subr.mxu0 0.0
      %4522 = vmatpush1.msra.mxu0 0.0
      %4523 = vmatprep.subr.mxu0 0.0
      %4524 = vmatpush1.msra.mxu0 0.0
      %4525 = vmatprep.subr.mxu0 0.0
      %4526 = vmatpush1.msra.mxu0 0.0
      %4527 = vmatprep.subr.mxu0 0.0
      %4528 = vmatpush1.msra.mxu0 0.0
      %4529 = vmatprep.subr.mxu0 0.0
      %4530 = vmatpush1.msra.mxu0 0.0
      %4531 = vmatprep.subr.mxu0 0.0
      %4532 = vmatpush1.msra.mxu0 0.0
      %4533 = vmatprep.mubr.f32.mxu0 0.0
      %4534 = vmatmul.mubr.f32.gmra.mrb[0].mxu0 %v3389
      %v4535 = vpop.f32.mrb[0].mxu0
      %v4536 = vadd.f32 %v4311, %v4535
      %v4537 = vpop.f32.mrb[0].mxu0
      %4538 = vmatprep.mubr.f32.mxu0 0.0
      %4539 = vmatmul.mubr.f32.gmra.mrb[0].mxu0 %v3390
      %v4540 = vpop.f32.mrb[0].mxu0
      %v4541 = vadd.f32 %v4316, %v4540
      %v4542 = vpop.f32.mrb[0].mxu0
      %4543 = vmatprep.mubr.f32.mxu0 0.0
      %4544 = vmatmul.mubr.f32.gmra.mrb[0].mxu0 %v3391
      %v4545 = vpop.f32.mrb[0].mxu0
      %v4546 = vadd.f32 %v4321, %v4545
      %v4547 = vpop.f32.mrb[0].mxu0
      %4548 = vmatprep.mubr.f32.mxu0 0.0
      %4549 = vmatmul.mubr.f32.gmra.mrb[0].mxu0 %v3392
      %v4550 = vpop.f32.mrb[0].mxu0
      %v4551 = vadd.f32 %v4326, %v4550
      %v4552 = vpop.f32.mrb[0].mxu0
      %4553 = vmatprep.mubr.f32.mxu0 0.0
      %4554 = vmatmul.mubr.f32.gmra.mrb[0].mxu0 %v3393
      %v4555 = vpop.f32.mrb[0].mxu0
      %v4556 = vadd.f32 %v4331, %v4555
      %v4557 = vpop.f32.mrb[0].mxu0
      %4558 = vmatprep.mubr.f32.mxu0 0.0
      %4559 = vmatmul.mubr.f32.gmra.mrb[0].mxu0 %v3394
      %v4560 = vpop.f32.mrb[0].mxu0
      %v4561 = vadd.f32 %v4336, %v4560
      %v4562 = vpop.f32.mrb[0].mxu0
      %4563 = vmatprep.mubr.f32.mxu0 0.0
      %4564 = vmatmul.mubr.f32.gmra.mrb[0].mxu0 %v3395
      %v4565 = vpop.f32.mrb[0].mxu0
      %v4566 = vadd.f32 %v4341, %v4565
      %v4567 = vpop.f32.mrb[0].mxu0
      %4568 = vmatprep.mubr.f32.mxu0 0.0
      %4569 = vmatmul.mubr.f32.gmra.mrb[0].mxu0 %v3396
      %v4570 = vpop.f32.mrb[0].mxu0
      %v4571 = vadd.f32 %v4346, %v4570
      %v4572 = vpop.f32.mrb[0].mxu0
      %4573 = vmatprep.mubr.f32.mxu0 0.0
      %4574 = vmatmul.mubr.f32.gmra.mrb[0].mxu0 %v3397
      %v4575 = vpop.f32.mrb[0].mxu0
      %v4576 = vadd.f32 %v4351, %v4575
      %v4577 = vpop.f32.mrb[0].mxu0
      %4578 = vmatprep.mubr.f32.mxu0 0.0
      %4579 = vmatmul.mubr.f32.gmra.mrb[0].mxu0 %v3398
      %v4580 = vpop.f32.mrb[0].mxu0
      %v4581 = vadd.f32 %v4356, %v4580
      %v4582 = vpop.f32.mrb[0].mxu0
      %4583 = vmatprep.mubr.f32.mxu0 0.0
      %4584 = vmatmul.mubr.f32.gmra.mrb[0].mxu0 %v3399
      %v4585 = vpop.f32.mrb[0].mxu0
      %v4586 = vadd.f32 %v4361, %v4585
      %v4587 = vpop.f32.mrb[0].mxu0
      %4588 = vmatprep.mubr.f32.mxu0 0.0
      %4589 = vmatmul.mubr.f32.gmra.mrb[0].mxu0 %v3400
      %v4590 = vpop.f32.mrb[0].mxu0
      %v4591 = vadd.f32 %v4366, %v4590
      %v4592 = vpop.f32.mrb[0].mxu0
      %4593 = vmatprep.mubr.f32.mxu0 0.0
      %4594 = vmatmul.mubr.f32.gmra.mrb[0].mxu0 %v3401
      %v4595 = vpop.f32.mrb[0].mxu0
      %v4596 = vadd.f32 %v4371, %v4595
      %v4597 = vpop.f32.mrb[0].mxu0
      %4598 = vmatprep.mubr.f32.mxu0 0.0
      %4599 = vmatmul.mubr.f32.gmra.mrb[0].mxu0 %v3402
      %v4600 = vpop.f32.mrb[0].mxu0
      %v4601 = vadd.f32 %v4376, %v4600
      %v4602 = vpop.f32.mrb[0].mxu0
      %4603 = vmatprep.mubr.f32.mxu0 0.0
      %4604 = vmatmul.mubr.f32.gmra.mrb[0].mxu0 %v3403
      %v4605 = vpop.f32.mrb[0].mxu0
      %v4606 = vadd.f32 %v4381, %v4605
      %v4607 = vpop.f32.mrb[0].mxu0
      %4608 = vmatprep.mubr.f32.mxu0 0.0
      %4609 = vmatmul.mubr.f32.gmra.mrb[0].mxu0 %v3404
      %v4610 = vpop.f32.mrb[0].mxu0
      %v4611 = vadd.f32 %v4386, %v4610
      %v4612 = vpop.f32.mrb[0].mxu0
      %4613 = vmatprep.mubr.f32.mxu0 0.0
      %4614 = vmatmul.mubr.f32.gmra.mrb[0].mxu0 %v3405
      %v4615 = vpop.f32.mrb[0].mxu0
      %v4616 = vadd.f32 %v4391, %v4615
      %v4617 = vpop.f32.mrb[0].mxu0
      %4618 = vmatprep.mubr.f32.mxu0 0.0
      %4619 = vmatmul.mubr.f32.gmra.mrb[0].mxu0 %v3406
      %v4620 = vpop.f32.mrb[0].mxu0
      %v4621 = vadd.f32 %v4396, %v4620
      %v4622 = vpop.f32.mrb[0].mxu0
      %4623 = vmatprep.mubr.f32.mxu0 0.0
      %4624 = vmatmul.mubr.f32.gmra.mrb[0].mxu0 %v3407
      %v4625 = vpop.f32.mrb[0].mxu0
      %v4626 = vadd.f32 %v4401, %v4625
      %v4627 = vpop.f32.mrb[0].mxu0
      %4628 = vmatprep.mubr.f32.mxu0 0.0
      %4629 = vmatmul.mubr.f32.gmra.mrb[0].mxu0 %v3408
      %v4630 = vpop.f32.mrb[0].mxu0
      %v4631 = vadd.f32 %v4406, %v4630
      %v4632 = vpop.f32.mrb[0].mxu0
      %4633 = vmatprep.mubr.f32.mxu0 0.0
      %4634 = vmatmul.mubr.f32.gmra.mrb[0].mxu0 %v3409
      %v4635 = vpop.f32.mrb[0].mxu0
      %v4636 = vadd.f32 %v4411, %v4635
      %v4637 = vpop.f32.mrb[0].mxu0
      %4638 = vmatprep.mubr.f32.mxu0 0.0
      %4639 = vmatmul.mubr.f32.gmra.mrb[0].mxu0 %v3410
      %v4640 = vpop.f32.mrb[0].mxu0
      %v4641 = vadd.f32 %v4416, %v4640
      %v4642 = vpop.f32.mrb[0].mxu0
      %4643 = vmatprep.mubr.f32.mxu0 0.0
      %4644 = vmatmul.mubr.f32.gmra.mrb[0].mxu0 %v3411
      %v4645 = vpop.f32.mrb[0].mxu0
      %v4646 = vadd.f32 %v4421, %v4645
      %v4647 = vpop.f32.mrb[0].mxu0
      %4648 = vmatprep.mubr.f32.mxu0 0.0
      %4649 = vmatmul.mubr.f32.gmra.mrb[0].mxu0 %v3412
      %v4650 = vpop.f32.mrb[0].mxu0
      %v4651 = vadd.f32 %v4426, %v4650
      %v4652 = vpop.f32.mrb[0].mxu0
      %4653 = vmatprep.mubr.f32.mxu0 0.0
      %4654 = vmatmul.mubr.f32.gmra.mrb[0].mxu0 %v3413
      %v4655 = vpop.f32.mrb[0].mxu0
      %v4656 = vadd.f32 %v4431, %v4655
      %v4657 = vpop.f32.mrb[0].mxu0
      %4658 = vmatprep.mubr.f32.mxu0 0.0
      %4659 = vmatmul.mubr.f32.gmra.mrb[0].mxu0 %v3414
      %v4660 = vpop.f32.mrb[0].mxu0
      %v4661 = vadd.f32 %v4436, %v4660
      %v4662 = vpop.f32.mrb[0].mxu0
      %4663 = vmatprep.mubr.f32.mxu0 0.0
      %4664 = vmatmul.mubr.f32.gmra.mrb[0].mxu0 %v3415
      %v4665 = vpop.f32.mrb[0].mxu0
      %v4666 = vadd.f32 %v4441, %v4665
      %v4667 = vpop.f32.mrb[0].mxu0
      %4668 = vmatprep.mubr.f32.mxu0 0.0
      %4669 = vmatmul.mubr.f32.gmra.mrb[0].mxu0 %v3416
      %v4670 = vpop.f32.mrb[0].mxu0
      %v4671 = vadd.f32 %v4446, %v4670
      %v4672 = vpop.f32.mrb[0].mxu0
      %4673 = vmatprep.mubr.f32.mxu0 0.0
      %4674 = vmatmul.mubr.f32.gmra.mrb[0].mxu0 %v3417
      %v4675 = vpop.f32.mrb[0].mxu0
      %v4676 = vadd.f32 %v4451, %v4675
      %v4677 = vpop.f32.mrb[0].mxu0
      %4678 = vmatprep.mubr.f32.mxu0 0.0
      %4679 = vmatmul.mubr.f32.gmra.mrb[0].mxu0 %v3418
      %v4680 = vpop.f32.mrb[0].mxu0
      %v4681 = vadd.f32 %v4456, %v4680
      %v4682 = vpop.f32.mrb[0].mxu0
      %4683 = vmatprep.mubr.f32.mxu0 0.0
      %4684 = vmatmul.mubr.f32.gmra.mrb[0].mxu0 %v1254
      %v4685 = vpop.f32.mrb[0].mxu0
      %v4686 = vadd.f32 %v4461, %v4685
      %v4687 = vpop.f32.mrb[0].mxu0
      %4688 = vmatprep.mubr.f32.mxu0 0.0
      %4689 = vmatmul.mubr.f32.gmra.mrb[0].mxu0 %v1288
      %v4690 = vpop.f32.mrb[0].mxu0
      %v4691 = vadd.f32 %v4466, %v4690
      %v4692 = vpop.f32.mrb[0].mxu0
      %4693 = vdwg.mxu0
      %v4694 = vadd.f32 %v401, %v4536
      %v4695 = vadd.f32 %v402, %v4541
      %v4696 = vadd.f32 %v403, %v4546
      %v4697 = vadd.f32 %v404, %v4551
      %v4698 = vadd.f32 %v405, %v4556
      %v4699 = vadd.f32 %v406, %v4561
      %v4700 = vadd.f32 %v407, %v4566
      %v4701 = vadd.f32 %v408, %v4571
      %v4702 = vadd.f32 %v409, %v4576
      %v4703 = vadd.f32 %v410, %v4581
      %v4704 = vadd.f32 %v411, %v4586
      %v4705 = vadd.f32 %v412, %v4591
      %v4706 = vadd.f32 %v413, %v4596
      %v4707 = vadd.f32 %v414, %v4601
      %v4708 = vadd.f32 %v415, %v4606
      %v4709 = vadd.f32 %v416, %v4611
      %v4710 = vadd.f32 %v417, %v4616
      %v4711 = vadd.f32 %v418, %v4621
      %v4712 = vadd.f32 %v419, %v4626
      %v4713 = vadd.f32 %v420, %v4631
      %v4714 = vadd.f32 %v421, %v4636
      %v4715 = vadd.f32 %v422, %v4641
      %v4716 = vadd.f32 %v423, %v4646
      %v4717 = vadd.f32 %v424, %v4651
      %v4718 = vadd.f32 %v425, %v4656
      %v4719 = vadd.f32 %v426, %v4661
      %v4720 = vadd.f32 %v427, %v4666
      %v4721 = vadd.f32 %v428, %v4671
      %v4722 = vadd.f32 %v429, %v4676
      %v4723 = vadd.f32 %v430, %v4681
      %v4724 = vadd.f32 %v431, %v4686
      %v4725 = vadd.f32 %v432, %v4691
      %4726 = vst [vmem:[%s400] sm:$0xff] %v4694
      %4727 = vst [vmem:[%s400 + $0x8] sm:$0xff] %v4695
      %4728 = vst [vmem:[%s400 + $0x10] sm:$0xff] %v4696
      %4729 = vst [vmem:[%s400 + $0x18] sm:$0xff] %v4697
      %4730 = vst [vmem:[%s400 + $0x20] sm:$0xff] %v4698
      %4731 = vst [vmem:[%s400 + $0x28] sm:$0xff] %v4699
      %4732 = vst [vmem:[%s400 + $0x30] sm:$0xff] %v4700
      %4733 = vst [vmem:[%s400 + $0x38] sm:$0xff] %v4701
      %4734 = vst [vmem:[%s400 + $0x40] sm:$0xff] %v4702
      %4735 = vst [vmem:[%s400 + $0x48] sm:$0xff] %v4703
      %4736 = vst [vmem:[%s400 + $0x50] sm:$0xff] %v4704
      %4737 = vst [vmem:[%s400 + $0x58] sm:$0xff] %v4705
      %4738 = vst [vmem:[%s400 + $0x60] sm:$0xff] %v4706
      %4739 = vst [vmem:[%s400 + $0x68] sm:$0xff] %v4707
      %4740 = vst [vmem:[%s400 + $0x70] sm:$0xff] %v4708
      %4741 = vst [vmem:[%s400 + $0x78] sm:$0xff] %v4709
      %4742 = vst [vmem:[%s400 + $0x80] sm:$0xff] %v4710
      %4743 = vst [vmem:[%s400 + $0x88] sm:$0xff] %v4711
      %4744 = vst [vmem:[%s400 + $0x90] sm:$0xff] %v4712
      %4745 = vst [vmem:[%s400 + $0x98] sm:$0xff] %v4713
      %4746 = vst [vmem:[%s400 + $0xa0] sm:$0xff] %v4714
      %4747 = vst [vmem:[%s400 + $0xa8] sm:$0xff] %v4715
      %4748 = vst [vmem:[%s400 + $0xb0] sm:$0xff] %v4716
      %4749 = vst [vmem:[%s400 + $0xb8] sm:$0xff] %v4717
      %4750 = vst [vmem:[%s400 + $0xc0] sm:$0xff] %v4718
      %4751 = vst [vmem:[%s400 + $0xc8] sm:$0xff] %v4719
      %4752 = vst [vmem:[%s400 + $0xd0] sm:$0xff] %v4720
      %4753 = vst [vmem:[%s400 + $0xd8] sm:$0xff] %v4721
      %4754 = vst [vmem:[%s400 + $0xe0] sm:$0xff] %v4722
      %4755 = vst [vmem:[%s400 + $0xe8] sm:$0xff] %v4723
      %4756 = vst [vmem:[%s400 + $0xf0] sm:$0xff] %v4724
      %4757 = vst [vmem:[%s400 + $0xf8] sm:$0xff] %v4725
      %p4758 = scmp.lt.s32.totalorder %s22, 1
      %s4759 = scalar_select %p4758, %s22, 1
      %s4760 = smul.addr %s4759, 32
      %s4761 = smul.addr %s4760, 8
      %s4762 = scalar_lea.vmem %s11, %s4761
      // Predicated region
      $region65: #{mid_block_2d_pallas.2} parent=63 // pred_check
        %p4763 = pneg %p281
      $region66: #{mid_block_2d_pallas.2} parent=63 // pred_check_branch
        %4765 = sbr.rel (%p4763) target = $region68
      $region67: #{mid_block_2d_pallas.2} parent=63 // pred_region
        _
      $region68: #{mid_block_2d_pallas.2} parent=63 // pred_fallthru
        _
    $region64: #{mid_block_2d_pallas.2} parent=5 // pred_fallthru
      _
    %p4766 = scmp.le.s32.totalorder 2, %s17
    // Predicated region
    $region69: #{mid_block_2d_pallas.2} parent=5 // pred_check
      %p4767 = pneg %p4766
    $region70: #{mid_block_2d_pallas.2} parent=5 // pred_check_branch
      %4769 = sbr.rel (%p4767) target = $region72
    $region71: #{mid_block_2d_pallas.2} parent=5 // pred_region
      %s4770 = ssub.s32 %s17, 2
      // Predicated region
      $region73: #{mid_block_2d_pallas.2} parent=71 // pred_check
        %p4771 = pneg %p287
      $region74: #{mid_block_2d_pallas.2} parent=71 // pred_check_branch
        %4773 = sbr.rel (%p4771) target = $region76
      $region75: #{mid_block_2d_pallas.2} parent=71 // pred_region
        %p4774 = scmp.lt.s32.totalorder %s23, 1
        %s4775 = scalar_select %p4774, %s23, 1
        %s4776 = smul.addr %s4775, 32
        %s4777 = smul.addr %s4776, 8
        %s4778 = scalar_lea.vmem %s11, %s4777
      $region76: #{mid_block_2d_pallas.2} parent=71 // pred_fallthru
        _
    $region72: #{mid_block_2d_pallas.2} parent=5 // pred_fallthru
      _
  $region6: #{mid_block_2d_pallas.2} parent=0 // loop_footer
    %s21 = sadd.s32 1, %s17
  $region7: #{mid_block_2d_pallas.2} parent=0 // loop_footer_branch
    %16 = sbr.rel target = $region3
  $region8: #{mid_block_2d_pallas.2} parent=0 // loop_exit
    _

</llo_original>
